<compile_context>
chip_gen: v7x
topology: tpu7x:2x2x1
jax: 0.10.0
libtpu: 0.0.40
codegen_flags: <defaults>
</compile_context>

<pallas_src>
import functools

import jax
import jax.numpy as jnp
from jax.experimental import pallas as pl
from jax.experimental.pallas import tpu as pltpu


# --------------------------------------------------------------------------- #
# Fused kernel
# --------------------------------------------------------------------------- #
def _seq2seq_kernel(x_ref, ewih_ref, ewhh_ref, eb_ref,
                    wq_ref, wk_ref, ab_ref,
                    dwih_ref, dwhh_ref, db_ref, wfc_ref, bfc_ref,
                    dwp_ref, dbp_ref,
                    out_ref,
                    gx_sc, hall_sc,
                    *, S, R, B, H, NT, TO, TL):
    f32 = jnp.float32
    RB = R * B            # neighbor refs folded into the batch (M) dimension
    NB = NT * B           # targets folded into the batch (M) dimension

    def lstm_step(gates, c_prev):
        # fused (., 4H) gate pre-activations -> i | f | g | o via static lane slices
        gi = jax.nn.sigmoid(gates[:, 0 * H:1 * H])
        gf = jax.nn.sigmoid(gates[:, 1 * H:2 * H])
        gg = jnp.tanh(gates[:, 2 * H:3 * H])
        go = jax.nn.sigmoid(gates[:, 3 * H:4 * H])
        c = gf * c_prev + gi * gg
        h = go * jnp.tanh(c)
        return h, c

    # ---------------- encoder: one LSTM over all R neighbor refs at once ---------------- #
    xmat = x_ref[...]                                   # (S*RB, F), row = t*RB + r*B + b
    ewhh = ewhh_ref[...]                                # (H, 4H)

    # hoisted, fused input projection for all timesteps (off the recurrent chain)
    gx_sc[...] = jnp.dot(xmat, ewih_ref[...], preferred_element_type=f32) + eb_ref[...]

    h = jnp.zeros((RB, H), f32)                         # encoder.init_hidden() == zeros
    c = jnp.zeros((RB, H), f32)
    for t in range(S):                                  # static unroll (S is small)
        gates = gx_sc[t * RB:(t + 1) * RB, :] + jnp.dot(
            h, ewhh, preferred_element_type=f32)        # one lane-dense MXU call per step
        h, c = lstm_step(gates, c)

    # ---------------- attention mix of neighbor final states, per target ---------------- #
    h3 = h.reshape(R, B, H)                             # tile-preserving (B == 8 sublanes)
    c3 = c.reshape(R, B, H)
    wq = wq_ref[...]                                    # (1, H)  attn weight, query half
    wk = wk_ref[...]                                    # (1, H)  attn weight, key half
    ab = ab_ref[...]                                    # (1, 1)  attn bias (splat)

    sk = jnp.sum(h3 * wk, axis=-1, keepdims=True)                     # (R, B, 1)
    sq = jnp.sum(h3[TO:TO + NT] * wq, axis=-1, keepdims=True) + ab    # (NT, B, 1)

    h_att = []
    c_att = []
    for j in range(NT):                                 # NT is tiny; each iter is full-tensor
        s = sk + sq[j]                                  # (R, B, 1) scores over neighbor refs
        m = jnp.max(s, axis=0, keepdims=True)           # (1, B, 1)
        e = jnp.exp(s - m)
        den = jnp.sum(e, axis=0, keepdims=True)
        wgt = e * pl.reciprocal(den, approx=True)       # EUP, co-issues with VPU work
        h_att.append(jnp.sum(wgt * h3, axis=0))         # (B, H)
        c_att.append(jnp.sum(wgt * c3, axis=0))
    h_attn = jnp.concatenate(h_att, axis=0)             # (NB, H), row = j*B + b
    c_attn = jnp.concatenate(c_att, axis=0)             # (NB, H)

    # ---------------- decoder rollout (all NT targets folded into the batch) ------------ #
    dwp = dwp_ref[...]                                  # (H, 4H)  = Wfc @ Wih (fused feedback)
    dbp = dbp_ref[...]                                  # (1, 4H)  = bfc @ Wih

    # The reference passes `new_hidden` (not the updated `hidden`) to the decoder at every
    # step, so h_attn / c_attn re-enter the cell unchanged each step; their gate contribution
    # is constant over the rollout and computed once here (one fused matmul).
    ghc = jnp.dot(h_attn, dwhh_ref[...], preferred_element_type=f32) + db_ref[...]

    # first decoder input: last encoder timestep of the NT (consecutive) target refs
    base = (S - 1) * RB + TO * B
    x0 = xmat[base:base + NB, :]                        # (NB, F)

    h_prev = None
    for t in range(TL):                                 # static unroll (TL is small)
        if t == 0:
            gates = jnp.dot(x0, dwih_ref[...], preferred_element_type=f32) + ghc
        else:
            # x_t = h_{t-1} @ Wfc + bfc folded into W' = Wfc@Wih, b' = bfc@Wih
            gates = jnp.dot(h_prev, dwp, preferred_element_type=f32) + dbp + ghc
        ht, _ = lstm_step(gates, c_attn)
        hall_sc[t * NB:(t + 1) * NB, :] = ht            # keeps vreg pressure low
        h_prev = ht

    # single Linear head over the whole rollout, lane-dense (padded) output store
    out_ref[...] = jnp.dot(hall_sc[...], wfc_ref[...],
                           preferred_element_type=f32) + bfc_ref[...]


# --------------------------------------------------------------------------- #
# Wrapper
# --------------------------------------------------------------------------- #
def _seq2seq_forward(x, y, params, target_ordinal, num_target):
    """x: [B, S, R, F], y: [B, TL, NT, F]  ->  outputs: [B, TL, NT, F]."""
    B, S, R, F = x.shape
    _, TL, NT, _ = y.shape
    assert NT == num_target
    H = params["enc_whh_t"].shape[0]
    f32 = jnp.float32
    NB = NT * B
    FP = ((F + 127) // 128) * 128                       # lane-dense head / output width

    # [B,S,R,F] -> [S,R,B,F] -> (S*R*B, F); rows ordered t*R*B + r*B + b
    xf = jnp.transpose(x, (1, 2, 0, 3)).reshape(S * R * B, F).astype(f32)

    # fused decoder feedback weights (tiny, fused under jit)
    dwp = jnp.dot(params["dec_wfc_t"], params["dec_wih_t"])      # (H, 4H)
    dbp = jnp.dot(params["dec_bfc"], params["dec_wih_t"])        # (1, 4H)

    # lane-dense Linear head: pad F -> FP so the final store is an unmasked vst
    wfc_p = jnp.zeros((H, FP), f32).at[:, :F].set(params["dec_wfc_t"].astype(f32))
    bfc_p = jnp.zeros((1, FP), f32).at[:, :F].set(params["dec_bfc"].astype(f32))

    kernel = functools.partial(
        _seq2seq_kernel, S=S, R=R, B=B, H=H, NT=NT, TO=target_ordinal, TL=TL)

    out = pl.pallas_call(
        kernel,
        out_shape=jax.ShapeDtypeStruct((TL * NB, FP), f32),
        scratch_shapes=[
            pltpu.VMEM((S * R * B, 4 * H), f32),        # fused, hoisted per-gate x-projection
            pltpu.VMEM((TL * NB, H), f32),              # all decoder hidden states
        ],
        compiler_params=pltpu.CompilerParams(vmem_limit_bytes=32 * 1024 * 1024),
    )(xf,
      params["enc_wih_t"], params["enc_whh_t"], params["enc_b"],
      params["attn_wq"], params["attn_wk"], params["attn_b"],
      params["dec_wih_t"], params["dec_whh_t"], params["dec_b"],
      wfc_p, bfc_p,
      dwp, dbp)

    # rows are ordered (t, j, b): drop lane padding, reshape, permute back to [B, TL, NT, F]
    out = out[:, :F]
    return jnp.transpose(out.reshape(TL, NT, B, F), (2, 0, 1, 3))


seq2seq_forward = jax.jit(_seq2seq_forward, static_argnames=("target_ordinal", "num_target"))


def init_params(key, F, H):
    """Deterministic parameter init (uniform, LSTM-style scale, PyTorch gate order i|f|g|o)."""
    ks = jax.random.split(key, 12)
    s = 1.0 / jnp.sqrt(H)
    u = lambda k, shape: jax.random.uniform(k, shape, jnp.float32, -s, s)
    enc_wih = u(ks[0], (4 * H, F))
    enc_whh = u(ks[1], (4 * H, H))
    enc_b = u(ks[2], (1, 4 * H)) + u(ks[3], (1, 4 * H))            # b_ih + b_hh
    dec_wih = u(ks[4], (4 * H, F))
    dec_whh = u(ks[5], (4 * H, H))
    dec_b = u(ks[6], (1, 4 * H)) + u(ks[7], (1, 4 * H))
    dec_wfc = u(ks[8], (F, H))
    dec_bfc = u(ks[9], (1, F))
    attn_w = u(ks[10], (1, 2 * H))                                 # Linear(2H, 1) weight
    attn_b = u(ks[11], (1, 1))                                     # Linear(2H, 1) bias
    return {
        "enc_wih_t": enc_wih.T, "enc_whh_t": enc_whh.T, "enc_b": enc_b,
        "dec_wih_t": dec_wih.T, "dec_whh_t": dec_whh.T, "dec_b": dec_b,
        "dec_wfc_t": dec_wfc.T, "dec_bfc": dec_bfc,
        "attn_wq": attn_w[:, :H], "attn_wk": attn_w[:, H:], "attn_b": attn_b,
    }


if __name__ == "__main__":
    B, S, R, F = 8, 8, 6, 2        # batch, seq len, #neighbor refs, feature size
    H = 32                         # hidden size (n_layers = 1); 4H = 128 lanes (fused gates)
    NT, TL = 3, 8                  # num_target, target seq len
    TO = 1                         # target_ordinal

    key = jax.random.PRNGKey(0)
    kx, ky, kp = jax.random.split(key, 3)
    x = jax.random.normal(kx, (B, S, R, F), jnp.float32)
    y = jax.random.normal(ky, (B, TL, NT, F), jnp.float32)
    params = init_params(kp, F, H)

    out = seq2seq_forward(x, y, params, target_ordinal=TO, num_target=NT)
    out = jax.block_until_ready(out)
    assert out.shape == (B, TL, NT, F)
    print("KERNEL_OK")
</pallas_src>

<mosaic_0001>
module attributes {stable_mosaic.version = 11 : i64} {
  func.func @_seq2seq_kernel(%arg0: memref<384x2xf32, #tpu.memory_space<vmem>>, %arg1: memref<2x128xf32, #tpu.memory_space<vmem>>, %arg2: memref<32x128xf32, #tpu.memory_space<vmem>>, %arg3: memref<1x128xf32, #tpu.memory_space<vmem>>, %arg4: memref<1x32xf32, #tpu.memory_space<vmem>>, %arg5: memref<1x32xf32, #tpu.memory_space<vmem>>, %arg6: memref<1x1xf32, #tpu.memory_space<vmem>>, %arg7: memref<2x128xf32, #tpu.memory_space<vmem>>, %arg8: memref<32x128xf32, #tpu.memory_space<vmem>>, %arg9: memref<1x128xf32, #tpu.memory_space<vmem>>, %arg10: memref<32x128xf32, #tpu.memory_space<vmem>>, %arg11: memref<1x128xf32, #tpu.memory_space<vmem>>, %arg12: memref<32x128xf32, #tpu.memory_space<vmem>>, %arg13: memref<1x128xf32, #tpu.memory_space<vmem>>, %arg14: memref<192x128xf32, #tpu.memory_space<vmem>>, %arg15: memref<384x128xf32, #tpu.memory_space<vmem>>, %arg16: memref<192x32xf32, #tpu.memory_space<vmem>>) attributes {dimension_semantics = [], scalar_prefetch = 0 : i64, scratch_operands = 2 : i64, tpu.core_type = #tpu.core_type<tc>} {
    %c0 = arith.constant 0 : index
    %c0_0 = arith.constant 0 : index
    %0 = vector.load %arg0[%c0, %c0_0] : memref<384x2xf32, #tpu.memory_space<vmem>>, vector<384x2xf32>
    %c0_1 = arith.constant 0 : index
    %c0_2 = arith.constant 0 : index
    %1 = vector.load %arg2[%c0_1, %c0_2] : memref<32x128xf32, #tpu.memory_space<vmem>>, vector<32x128xf32>
    %c0_3 = arith.constant 0 : index
    %c0_4 = arith.constant 0 : index
    %2 = vector.load %arg1[%c0_3, %c0_4] : memref<2x128xf32, #tpu.memory_space<vmem>>, vector<2x128xf32>
    %cst = arith.constant dense<0.000000e+00> : vector<384x128xf32>
    %3 = tpu.matmul %0, %2, %cst {dimension_numbers = #tpu.dot_dimension_numbers<[1], [0], [0], [1], [0, 0, 1, 1], [], []>} : vector<384x2xf32>, vector<2x128xf32>, vector<384x128xf32> -> vector<384x128xf32>
    %c0_5 = arith.constant 0 : index
    %c0_6 = arith.constant 0 : index
    %4 = vector.load %arg3[%c0_5, %c0_6] : memref<1x128xf32, #tpu.memory_space<vmem>>, vector<1x128xf32>
    %5 = vector.broadcast %4 : vector<1x128xf32> to vector<384x128xf32>
    %6 = arith.addf %3, %5 : vector<384x128xf32>
    %c0_7 = arith.constant 0 : index
    %c0_8 = arith.constant 0 : index
    %7 = vector.load %arg15[%c0_7, %c0_8] : memref<384x128xf32, #tpu.memory_space<vmem>>, vector<384x128xf32>
    tpu.vector_store %arg15[%c0_7, %c0_8], %6 {strides = array<i32>} : memref<384x128xf32, #tpu.memory_space<vmem>>, vector<384x128xf32>,
    %cst_9 = arith.constant 0.000000e+00 : f32
    %8 = vector.broadcast %cst_9 : f32 to vector<48x32xf32>
    %cst_10 = arith.constant 0.000000e+00 : f32
    %9 = vector.broadcast %cst_10 : f32 to vector<48x32xf32>
    %c0_11 = arith.constant 0 : index
    %c0_12 = arith.constant 0 : index
    %10 = vector.load %arg15[%c0_11, %c0_12] : memref<384x128xf32, #tpu.memory_space<vmem>>, vector<48x128xf32>
    %cst_13 = arith.constant dense<0.000000e+00> : vector<48x128xf32>
    %11 = tpu.matmul %8, %1, %cst_13 {dimension_numbers = #tpu.dot_dimension_numbers<[1], [0], [0], [1], [0, 0, 1, 1], [], []>} : vector<48x32xf32>, vector<32x128xf32>, vector<48x128xf32> -> vector<48x128xf32>
    %12 = arith.addf %10, %11 : vector<48x128xf32>
    %13 = vector.extract_strided_slice %12 {offsets = [0, 0], sizes = [48, 32], strides = [1, 1]} : vector<48x128xf32> to vector<48x32xf32>
    %14 = arith.negf %13 : vector<48x32xf32>
    %15 = math.exp %14 : vector<48x32xf32>
    %cst_14 = arith.constant 1.000000e+00 : f32
    %16 = vector.broadcast %cst_14 : f32 to vector<48x32xf32>
    %17 = arith.addf %16, %15 : vector<48x32xf32>
    %18 = arith.divf %16, %17 : vector<48x32xf32>
    %19 = vector.extract_strided_slice %12 {offsets = [0, 32], sizes = [48, 32], strides = [1, 1]} : vector<48x128xf32> to vector<48x32xf32>
    %20 = arith.negf %19 : vector<48x32xf32>
    %21 = math.exp %20 : vector<48x32xf32>
    %cst_15 = arith.constant 1.000000e+00 : f32
    %22 = vector.broadcast %cst_15 : f32 to vector<48x32xf32>
    %23 = arith.addf %22, %21 : vector<48x32xf32>
    %24 = arith.divf %22, %23 : vector<48x32xf32>
    %25 = vector.extract_strided_slice %12 {offsets = [0, 64], sizes = [48, 32], strides = [1, 1]} : vector<48x128xf32> to vector<48x32xf32>
    %26 = math.tanh %25 : vector<48x32xf32>
    %27 = vector.extract_strided_slice %12 {offsets = [0, 96], sizes = [48, 32], strides = [1, 1]} : vector<48x128xf32> to vector<48x32xf32>
    %28 = arith.negf %27 : vector<48x32xf32>
    %29 = math.exp %28 : vector<48x32xf32>
    %cst_16 = arith.constant 1.000000e+00 : f32
    %30 = vector.broadcast %cst_16 : f32 to vector<48x32xf32>
    %31 = arith.addf %30, %29 : vector<48x32xf32>
    %32 = arith.divf %30, %31 : vector<48x32xf32>
    %33 = arith.mulf %24, %9 : vector<48x32xf32>
    %34 = arith.mulf %18, %26 : vector<48x32xf32>
    %35 = arith.addf %33, %34 : vector<48x32xf32>
    %36 = math.tanh %35 : vector<48x32xf32>
    %37 = arith.mulf %32, %36 : vector<48x32xf32>
    %c48 = arith.constant 48 : index
    %c0_17 = arith.constant 0 : index
    %38 = vector.load %arg15[%c48, %c0_17] : memref<384x128xf32, #tpu.memory_space<vmem>>, vector<48x128xf32>
    %cst_18 = arith.constant dense<0.000000e+00> : vector<48x128xf32>
    %39 = tpu.matmul %37, %1, %cst_18 {dimension_numbers = #tpu.dot_dimension_numbers<[1], [0], [0], [1], [0, 0, 1, 1], [], []>} : vector<48x32xf32>, vector<32x128xf32>, vector<48x128xf32> -> vector<48x128xf32>
    %40 = arith.addf %38, %39 : vector<48x128xf32>
    %41 = vector.extract_strided_slice %40 {offsets = [0, 0], sizes = [48, 32], strides = [1, 1]} : vector<48x128xf32> to vector<48x32xf32>
    %42 = arith.negf %41 : vector<48x32xf32>
    %43 = math.exp %42 : vector<48x32xf32>
    %cst_19 = arith.constant 1.000000e+00 : f32
    %44 = vector.broadcast %cst_19 : f32 to vector<48x32xf32>
    %45 = arith.addf %44, %43 : vector<48x32xf32>
    %46 = arith.divf %44, %45 : vector<48x32xf32>
    %47 = vector.extract_strided_slice %40 {offsets = [0, 32], sizes = [48, 32], strides = [1, 1]} : vector<48x128xf32> to vector<48x32xf32>
    %48 = arith.negf %47 : vector<48x32xf32>
    %49 = math.exp %48 : vector<48x32xf32>
    %cst_20 = arith.constant 1.000000e+00 : f32
    %50 = vector.broadcast %cst_20 : f32 to vector<48x32xf32>
    %51 = arith.addf %50, %49 : vector<48x32xf32>
    %52 = arith.divf %50, %51 : vector<48x32xf32>
    %53 = vector.extract_strided_slice %40 {offsets = [0, 64], sizes = [48, 32], strides = [1, 1]} : vector<48x128xf32> to vector<48x32xf32>
    %54 = math.tanh %53 : vector<48x32xf32>
    %55 = vector.extract_strided_slice %40 {offsets = [0, 96], sizes = [48, 32], strides = [1, 1]} : vector<48x128xf32> to vector<48x32xf32>
    %56 = arith.negf %55 : vector<48x32xf32>
    %57 = math.exp %56 : vector<48x32xf32>
    %cst_21 = arith.constant 1.000000e+00 : f32
    %58 = vector.broadcast %cst_21 : f32 to vector<48x32xf32>
    %59 = arith.addf %58, %57 : vector<48x32xf32>
    %60 = arith.divf %58, %59 : vector<48x32xf32>
    %61 = arith.mulf %52, %35 : vector<48x32xf32>
    %62 = arith.mulf %46, %54 : vector<48x32xf32>
    %63 = arith.addf %61, %62 : vector<48x32xf32>
    %64 = math.tanh %63 : vector<48x32xf32>
    %65 = arith.mulf %60, %64 : vector<48x32xf32>
    %c96 = arith.constant 96 : index
    %c0_22 = arith.constant 0 : index
    %66 = vector.load %arg15[%c96, %c0_22] : memref<384x128xf32, #tpu.memory_space<vmem>>, vector<48x128xf32>
    %cst_23 = arith.constant dense<0.000000e+00> : vector<48x128xf32>
    %67 = tpu.matmul %65, %1, %cst_23 {dimension_numbers = #tpu.dot_dimension_numbers<[1], [0], [0], [1], [0, 0, 1, 1], [], []>} : vector<48x32xf32>, vector<32x128xf32>, vector<48x128xf32> -> vector<48x128xf32>
    %68 = arith.addf %66, %67 : vector<48x128xf32>
    %69 = vector.extract_strided_slice %68 {offsets = [0, 0], sizes = [48, 32], strides = [1, 1]} : vector<48x128xf32> to vector<48x32xf32>
    %70 = arith.negf %69 : vector<48x32xf32>
    %71 = math.exp %70 : vector<48x32xf32>
    %cst_24 = arith.constant 1.000000e+00 : f32
    %72 = vector.broadcast %cst_24 : f32 to vector<48x32xf32>
    %73 = arith.addf %72, %71 : vector<48x32xf32>
    %74 = arith.divf %72, %73 : vector<48x32xf32>
    %75 = vector.extract_strided_slice %68 {offsets = [0, 32], sizes = [48, 32], strides = [1, 1]} : vector<48x128xf32> to vector<48x32xf32>
    %76 = arith.negf %75 : vector<48x32xf32>
    %77 = math.exp %76 : vector<48x32xf32>
    %cst_25 = arith.constant 1.000000e+00 : f32
    %78 = vector.broadcast %cst_25 : f32 to vector<48x32xf32>
    %79 = arith.addf %78, %77 : vector<48x32xf32>
    %80 = arith.divf %78, %79 : vector<48x32xf32>
    %81 = vector.extract_strided_slice %68 {offsets = [0, 64], sizes = [48, 32], strides = [1, 1]} : vector<48x128xf32> to vector<48x32xf32>
    %82 = math.tanh %81 : vector<48x32xf32>
    %83 = vector.extract_strided_slice %68 {offsets = [0, 96], sizes = [48, 32], strides = [1, 1]} : vector<48x128xf32> to vector<48x32xf32>
    %84 = arith.negf %83 : vector<48x32xf32>
    %85 = math.exp %84 : vector<48x32xf32>
    %cst_26 = arith.constant 1.000000e+00 : f32
    %86 = vector.broadcast %cst_26 : f32 to vector<48x32xf32>
    %87 = arith.addf %86, %85 : vector<48x32xf32>
    %88 = arith.divf %86, %87 : vector<48x32xf32>
    %89 = arith.mulf %80, %63 : vector<48x32xf32>
    %90 = arith.mulf %74, %82 : vector<48x32xf32>
    %91 = arith.addf %89, %90 : vector<48x32xf32>
    %92 = math.tanh %91 : vector<48x32xf32>
    %93 = arith.mulf %88, %92 : vector<48x32xf32>
    %c144 = arith.constant 144 : index
    %c0_27 = arith.constant 0 : index
    %94 = vector.load %arg15[%c144, %c0_27] : memref<384x128xf32, #tpu.memory_space<vmem>>, vector<48x128xf32>
    %cst_28 = arith.constant dense<0.000000e+00> : vector<48x128xf32>
    %95 = tpu.matmul %93, %1, %cst_28 {dimension_numbers = #tpu.dot_dimension_numbers<[1], [0], [0], [1], [0, 0, 1, 1], [], []>} : vector<48x32xf32>, vector<32x128xf32>, vector<48x128xf32> -> vector<48x128xf32>
    %96 = arith.addf %94, %95 : vector<48x128xf32>
    %97 = vector.extract_strided_slice %96 {offsets = [0, 0], sizes = [48, 32], strides = [1, 1]} : vector<48x128xf32> to vector<48x32xf32>
    %98 = arith.negf %97 : vector<48x32xf32>
    %99 = math.exp %98 : vector<48x32xf32>
    %cst_29 = arith.constant 1.000000e+00 : f32
    %100 = vector.broadcast %cst_29 : f32 to vector<48x32xf32>
    %101 = arith.addf %100, %99 : vector<48x32xf32>
    %102 = arith.divf %100, %101 : vector<48x32xf32>
    %103 = vector.extract_strided_slice %96 {offsets = [0, 32], sizes = [48, 32], strides = [1, 1]} : vector<48x128xf32> to vector<48x32xf32>
    %104 = arith.negf %103 : vector<48x32xf32>
    %105 = math.exp %104 : vector<48x32xf32>
    %cst_30 = arith.constant 1.000000e+00 : f32
    %106 = vector.broadcast %cst_30 : f32 to vector<48x32xf32>
    %107 = arith.addf %106, %105 : vector<48x32xf32>
    %108 = arith.divf %106, %107 : vector<48x32xf32>
    %109 = vector.extract_strided_slice %96 {offsets = [0, 64], sizes = [48, 32], strides = [1, 1]} : vector<48x128xf32> to vector<48x32xf32>
    %110 = math.tanh %109 : vector<48x32xf32>
    %111 = vector.extract_strided_slice %96 {offsets = [0, 96], sizes = [48, 32], strides = [1, 1]} : vector<48x128xf32> to vector<48x32xf32>
    %112 = arith.negf %111 : vector<48x32xf32>
    %113 = math.exp %112 : vector<48x32xf32>
    %cst_31 = arith.constant 1.000000e+00 : f32
    %114 = vector.broadcast %cst_31 : f32 to vector<48x32xf32>
    %115 = arith.addf %114, %113 : vector<48x32xf32>
    %116 = arith.divf %114, %115 : vector<48x32xf32>
    %117 = arith.mulf %108, %91 : vector<48x32xf32>
    %118 = arith.mulf %102, %110 : vector<48x32xf32>
    %119 = arith.addf %117, %118 : vector<48x32xf32>
    %120 = math.tanh %119 : vector<48x32xf32>
    %121 = arith.mulf %116, %120 : vector<48x32xf32>
    %c192 = arith.constant 192 : index
    %c0_32 = arith.constant 0 : index
    %122 = vector.load %arg15[%c192, %c0_32] : memref<384x128xf32, #tpu.memory_space<vmem>>, vector<48x128xf32>
    %cst_33 = arith.constant dense<0.000000e+00> : vector<48x128xf32>
    %123 = tpu.matmul %121, %1, %cst_33 {dimension_numbers = #tpu.dot_dimension_numbers<[1], [0], [0], [1], [0, 0, 1, 1], [], []>} : vector<48x32xf32>, vector<32x128xf32>, vector<48x128xf32> -> vector<48x128xf32>
    %124 = arith.addf %122, %123 : vector<48x128xf32>
    %125 = vector.extract_strided_slice %124 {offsets = [0, 0], sizes = [48, 32], strides = [1, 1]} : vector<48x128xf32> to vector<48x32xf32>
    %126 = arith.negf %125 : vector<48x32xf32>
    %127 = math.exp %126 : vector<48x32xf32>
    %cst_34 = arith.constant 1.000000e+00 : f32
    %128 = vector.broadcast %cst_34 : f32 to vector<48x32xf32>
    %129 = arith.addf %128, %127 : vector<48x32xf32>
    %130 = arith.divf %128, %129 : vector<48x32xf32>
    %131 = vector.extract_strided_slice %124 {offsets = [0, 32], sizes = [48, 32], strides = [1, 1]} : vector<48x128xf32> to vector<48x32xf32>
    %132 = arith.negf %131 : vector<48x32xf32>
    %133 = math.exp %132 : vector<48x32xf32>
    %cst_35 = arith.constant 1.000000e+00 : f32
    %134 = vector.broadcast %cst_35 : f32 to vector<48x32xf32>
    %135 = arith.addf %134, %133 : vector<48x32xf32>
    %136 = arith.divf %134, %135 : vector<48x32xf32>
    %137 = vector.extract_strided_slice %124 {offsets = [0, 64], sizes = [48, 32], strides = [1, 1]} : vector<48x128xf32> to vector<48x32xf32>
    %138 = math.tanh %137 : vector<48x32xf32>
    %139 = vector.extract_strided_slice %124 {offsets = [0, 96], sizes = [48, 32], strides = [1, 1]} : vector<48x128xf32> to vector<48x32xf32>
    %140 = arith.negf %139 : vector<48x32xf32>
    %141 = math.exp %140 : vector<48x32xf32>
    %cst_36 = arith.constant 1.000000e+00 : f32
    %142 = vector.broadcast %cst_36 : f32 to vector<48x32xf32>
    %143 = arith.addf %142, %141 : vector<48x32xf32>
    %144 = arith.divf %142, %143 : vector<48x32xf32>
    %145 = arith.mulf %136, %119 : vector<48x32xf32>
    %146 = arith.mulf %130, %138 : vector<48x32xf32>
    %147 = arith.addf %145, %146 : vector<48x32xf32>
    %148 = math.tanh %147 : vector<48x32xf32>
    %149 = arith.mulf %144, %148 : vector<48x32xf32>
    %c240 = arith.constant 240 : index
    %c0_37 = arith.constant 0 : index
    %150 = vector.load %arg15[%c240, %c0_37] : memref<384x128xf32, #tpu.memory_space<vmem>>, vector<48x128xf32>
    %cst_38 = arith.constant dense<0.000000e+00> : vector<48x128xf32>
    %151 = tpu.matmul %149, %1, %cst_38 {dimension_numbers = #tpu.dot_dimension_numbers<[1], [0], [0], [1], [0, 0, 1, 1], [], []>} : vector<48x32xf32>, vector<32x128xf32>, vector<48x128xf32> -> vector<48x128xf32>
    %152 = arith.addf %150, %151 : vector<48x128xf32>
    %153 = vector.extract_strided_slice %152 {offsets = [0, 0], sizes = [48, 32], strides = [1, 1]} : vector<48x128xf32> to vector<48x32xf32>
    %154 = arith.negf %153 : vector<48x32xf32>
    %155 = math.exp %154 : vector<48x32xf32>
    %cst_39 = arith.constant 1.000000e+00 : f32
    %156 = vector.broadcast %cst_39 : f32 to vector<48x32xf32>
    %157 = arith.addf %156, %155 : vector<48x32xf32>
    %158 = arith.divf %156, %157 : vector<48x32xf32>
    %159 = vector.extract_strided_slice %152 {offsets = [0, 32], sizes = [48, 32], strides = [1, 1]} : vector<48x128xf32> to vector<48x32xf32>
    %160 = arith.negf %159 : vector<48x32xf32>
    %161 = math.exp %160 : vector<48x32xf32>
    %cst_40 = arith.constant 1.000000e+00 : f32
    %162 = vector.broadcast %cst_40 : f32 to vector<48x32xf32>
    %163 = arith.addf %162, %161 : vector<48x32xf32>
    %164 = arith.divf %162, %163 : vector<48x32xf32>
    %165 = vector.extract_strided_slice %152 {offsets = [0, 64], sizes = [48, 32], strides = [1, 1]} : vector<48x128xf32> to vector<48x32xf32>
    %166 = math.tanh %165 : vector<48x32xf32>
    %167 = vector.extract_strided_slice %152 {offsets = [0, 96], sizes = [48, 32], strides = [1, 1]} : vector<48x128xf32> to vector<48x32xf32>
    %168 = arith.negf %167 : vector<48x32xf32>
    %169 = math.exp %168 : vector<48x32xf32>
    %cst_41 = arith.constant 1.000000e+00 : f32
    %170 = vector.broadcast %cst_41 : f32 to vector<48x32xf32>
    %171 = arith.addf %170, %169 : vector<48x32xf32>
    %172 = arith.divf %170, %171 : vector<48x32xf32>
    %173 = arith.mulf %164, %147 : vector<48x32xf32>
    %174 = arith.mulf %158, %166 : vector<48x32xf32>
    %175 = arith.addf %173, %174 : vector<48x32xf32>
    %176 = math.tanh %175 : vector<48x32xf32>
    %177 = arith.mulf %172, %176 : vector<48x32xf32>
    %c288 = arith.constant 288 : index
    %c0_42 = arith.constant 0 : index
    %178 = vector.load %arg15[%c288, %c0_42] : memref<384x128xf32, #tpu.memory_space<vmem>>, vector<48x128xf32>
    %cst_43 = arith.constant dense<0.000000e+00> : vector<48x128xf32>
    %179 = tpu.matmul %177, %1, %cst_43 {dimension_numbers = #tpu.dot_dimension_numbers<[1], [0], [0], [1], [0, 0, 1, 1], [], []>} : vector<48x32xf32>, vector<32x128xf32>, vector<48x128xf32> -> vector<48x128xf32>
    %180 = arith.addf %178, %179 : vector<48x128xf32>
    %181 = vector.extract_strided_slice %180 {offsets = [0, 0], sizes = [48, 32], strides = [1, 1]} : vector<48x128xf32> to vector<48x32xf32>
    %182 = arith.negf %181 : vector<48x32xf32>
    %183 = math.exp %182 : vector<48x32xf32>
    %cst_44 = arith.constant 1.000000e+00 : f32
    %184 = vector.broadcast %cst_44 : f32 to vector<48x32xf32>
    %185 = arith.addf %184, %183 : vector<48x32xf32>
    %186 = arith.divf %184, %185 : vector<48x32xf32>
    %187 = vector.extract_strided_slice %180 {offsets = [0, 32], sizes = [48, 32], strides = [1, 1]} : vector<48x128xf32> to vector<48x32xf32>
    %188 = arith.negf %187 : vector<48x32xf32>
    %189 = math.exp %188 : vector<48x32xf32>
    %cst_45 = arith.constant 1.000000e+00 : f32
    %190 = vector.broadcast %cst_45 : f32 to vector<48x32xf32>
    %191 = arith.addf %190, %189 : vector<48x32xf32>
    %192 = arith.divf %190, %191 : vector<48x32xf32>
    %193 = vector.extract_strided_slice %180 {offsets = [0, 64], sizes = [48, 32], strides = [1, 1]} : vector<48x128xf32> to vector<48x32xf32>
    %194 = math.tanh %193 : vector<48x32xf32>
    %195 = vector.extract_strided_slice %180 {offsets = [0, 96], sizes = [48, 32], strides = [1, 1]} : vector<48x128xf32> to vector<48x32xf32>
    %196 = arith.negf %195 : vector<48x32xf32>
    %197 = math.exp %196 : vector<48x32xf32>
    %cst_46 = arith.constant 1.000000e+00 : f32
    %198 = vector.broadcast %cst_46 : f32 to vector<48x32xf32>
    %199 = arith.addf %198, %197 : vector<48x32xf32>
    %200 = arith.divf %198, %199 : vector<48x32xf32>
    %201 = arith.mulf %192, %175 : vector<48x32xf32>
    %202 = arith.mulf %186, %194 : vector<48x32xf32>
    %203 = arith.addf %201, %202 : vector<48x32xf32>
    %204 = math.tanh %203 : vector<48x32xf32>
    %205 = arith.mulf %200, %204 : vector<48x32xf32>
    %c336 = arith.constant 336 : index
    %c0_47 = arith.constant 0 : index
    %206 = vector.load %arg15[%c336, %c0_47] : memref<384x128xf32, #tpu.memory_space<vmem>>, vector<48x128xf32>
    %cst_48 = arith.constant dense<0.000000e+00> : vector<48x128xf32>
    %207 = tpu.matmul %205, %1, %cst_48 {dimension_numbers = #tpu.dot_dimension_numbers<[1], [0], [0], [1], [0, 0, 1, 1], [], []>} : vector<48x32xf32>, vector<32x128xf32>, vector<48x128xf32> -> vector<48x128xf32>
    %208 = arith.addf %206, %207 : vector<48x128xf32>
    %209 = vector.extract_strided_slice %208 {offsets = [0, 0], sizes = [48, 32], strides = [1, 1]} : vector<48x128xf32> to vector<48x32xf32>
    %210 = arith.negf %209 : vector<48x32xf32>
    %211 = math.exp %210 : vector<48x32xf32>
    %cst_49 = arith.constant 1.000000e+00 : f32
    %212 = vector.broadcast %cst_49 : f32 to vector<48x32xf32>
    %213 = arith.addf %212, %211 : vector<48x32xf32>
    %214 = arith.divf %212, %213 : vector<48x32xf32>
    %215 = vector.extract_strided_slice %208 {offsets = [0, 32], sizes = [48, 32], strides = [1, 1]} : vector<48x128xf32> to vector<48x32xf32>
    %216 = arith.negf %215 : vector<48x32xf32>
    %217 = math.exp %216 : vector<48x32xf32>
    %cst_50 = arith.constant 1.000000e+00 : f32
    %218 = vector.broadcast %cst_50 : f32 to vector<48x32xf32>
    %219 = arith.addf %218, %217 : vector<48x32xf32>
    %220 = arith.divf %218, %219 : vector<48x32xf32>
    %221 = vector.extract_strided_slice %208 {offsets = [0, 64], sizes = [48, 32], strides = [1, 1]} : vector<48x128xf32> to vector<48x32xf32>
    %222 = math.tanh %221 : vector<48x32xf32>
    %223 = vector.extract_strided_slice %208 {offsets = [0, 96], sizes = [48, 32], strides = [1, 1]} : vector<48x128xf32> to vector<48x32xf32>
    %224 = arith.negf %223 : vector<48x32xf32>
    %225 = math.exp %224 : vector<48x32xf32>
    %cst_51 = arith.constant 1.000000e+00 : f32
    %226 = vector.broadcast %cst_51 : f32 to vector<48x32xf32>
    %227 = arith.addf %226, %225 : vector<48x32xf32>
    %228 = arith.divf %226, %227 : vector<48x32xf32>
    %229 = arith.mulf %220, %203 : vector<48x32xf32>
    %230 = arith.mulf %214, %222 : vector<48x32xf32>
    %231 = arith.addf %229, %230 : vector<48x32xf32>
    %232 = math.tanh %231 : vector<48x32xf32>
    %233 = arith.mulf %228, %232 : vector<48x32xf32>
    %234 = vector.shape_cast %233 : vector<48x32xf32> to vector<6x8x32xf32>
    %235 = vector.shape_cast %231 : vector<48x32xf32> to vector<6x8x32xf32>
    %c0_52 = arith.constant 0 : index
    %c0_53 = arith.constant 0 : index
    %236 = vector.load %arg4[%c0_52, %c0_53] : memref<1x32xf32, #tpu.memory_space<vmem>>, vector<1x32xf32>
    %c0_54 = arith.constant 0 : index
    %c0_55 = arith.constant 0 : index
    %237 = vector.load %arg5[%c0_54, %c0_55] : memref<1x32xf32, #tpu.memory_space<vmem>>, vector<1x32xf32>
    %c0_56 = arith.constant 0 : index
    %c0_57 = arith.constant 0 : index
    %238 = vector.load %arg6[%c0_56, %c0_57] : memref<1x1xf32, #tpu.memory_space<vmem>>, vector<1x1xf32>
    %239 = vector.shape_cast %237 : vector<1x32xf32> to vector<1x1x32xf32>
    %240 = vector.broadcast %239 : vector<1x1x32xf32> to vector<6x8x32xf32>
    %241 = arith.mulf %234, %240 : vector<6x8x32xf32>
    %cst_58 = arith.constant dense<0.000000e+00> : vector<6x8xf32>
    %242 = vector.multi_reduction <add>, %241, %cst_58 [2] : vector<6x8x32xf32> to vector<6x8xf32>
    %243 = vector.shape_cast %242 : vector<6x8xf32> to vector<6x8x1xf32>
    %244 = vector.extract_strided_slice %234 {offsets = [1, 0, 0], sizes = [3, 8, 32], strides = [1, 1, 1]} : vector<6x8x32xf32> to vector<3x8x32xf32>
    %245 = vector.shape_cast %236 : vector<1x32xf32> to vector<1x1x32xf32>
    %246 = vector.broadcast %245 : vector<1x1x32xf32> to vector<3x8x32xf32>
    %247 = arith.mulf %244, %246 : vector<3x8x32xf32>
    %cst_59 = arith.constant dense<0.000000e+00> : vector<3x8xf32>
    %248 = vector.multi_reduction <add>, %247, %cst_59 [2] : vector<3x8x32xf32> to vector<3x8xf32>
    %249 = vector.shape_cast %248 : vector<3x8xf32> to vector<3x8x1xf32>
    %250 = vector.shape_cast %238 : vector<1x1xf32> to vector<1x1x1xf32>
    %251 = vector.broadcast %250 : vector<1x1x1xf32> to vector<3x8x1xf32>
    %252 = arith.addf %249, %251 : vector<3x8x1xf32>
    %253 = vector.extract_strided_slice %252 {offsets = [0, 0, 0], sizes = [1, 8, 1], strides = [1, 1, 1]} : vector<3x8x1xf32> to vector<1x8x1xf32>
    %254 = vector.shape_cast %253 : vector<1x8x1xf32> to vector<8x1xf32>
    %255 = vector.shape_cast %254 : vector<8x1xf32> to vector<1x8x1xf32>
    %256 = vector.broadcast %255 : vector<1x8x1xf32> to vector<6x8x1xf32>
    %257 = arith.addf %243, %256 : vector<6x8x1xf32>
    %cst_60 = arith.constant dense<0xFF800000> : vector<8x1xf32>
    %258 = vector.multi_reduction <maximumf>, %257, %cst_60 [0] : vector<6x8x1xf32> to vector<8x1xf32>
    %259 = vector.shape_cast %258 : vector<8x1xf32> to vector<1x8x1xf32>
    %260 = vector.broadcast %259 : vector<1x8x1xf32> to vector<6x8x1xf32>
    %261 = arith.subf %257, %260 : vector<6x8x1xf32>
    %262 = math.exp %261 : vector<6x8x1xf32>
    %cst_61 = arith.constant dense<0.000000e+00> : vector<8x1xf32>
    %263 = vector.multi_reduction <add>, %262, %cst_61 [0] : vector<6x8x1xf32> to vector<8x1xf32>
    %264 = vector.shape_cast %263 : vector<8x1xf32> to vector<1x8x1xf32>
    %265 = tpu.reciprocal %264 {approx = true} : vector<1x8x1xf32> -> vector<1x8x1xf32>
    %266 = vector.broadcast %265 : vector<1x8x1xf32> to vector<6x8x1xf32>
    %267 = arith.mulf %262, %266 : vector<6x8x1xf32>
    %268 = vector.broadcast %267 : vector<6x8x1xf32> to vector<6x8x32xf32>
    %269 = arith.mulf %268, %234 : vector<6x8x32xf32>
    %cst_62 = arith.constant dense<0.000000e+00> : vector<8x32xf32>
    %270 = vector.multi_reduction <add>, %269, %cst_62 [0] : vector<6x8x32xf32> to vector<8x32xf32>
    %271 = vector.broadcast %267 : vector<6x8x1xf32> to vector<6x8x32xf32>
    %272 = arith.mulf %271, %235 : vector<6x8x32xf32>
    %cst_63 = arith.constant dense<0.000000e+00> : vector<8x32xf32>
    %273 = vector.multi_reduction <add>, %272, %cst_63 [0] : vector<6x8x32xf32> to vector<8x32xf32>
    %274 = vector.extract_strided_slice %252 {offsets = [1, 0, 0], sizes = [1, 8, 1], strides = [1, 1, 1]} : vector<3x8x1xf32> to vector<1x8x1xf32>
    %275 = vector.shape_cast %274 : vector<1x8x1xf32> to vector<8x1xf32>
    %276 = vector.shape_cast %275 : vector<8x1xf32> to vector<1x8x1xf32>
    %277 = vector.broadcast %276 : vector<1x8x1xf32> to vector<6x8x1xf32>
    %278 = arith.addf %243, %277 : vector<6x8x1xf32>
    %cst_64 = arith.constant dense<0xFF800000> : vector<8x1xf32>
    %279 = vector.multi_reduction <maximumf>, %278, %cst_64 [0] : vector<6x8x1xf32> to vector<8x1xf32>
    %280 = vector.shape_cast %279 : vector<8x1xf32> to vector<1x8x1xf32>
    %281 = vector.broadcast %280 : vector<1x8x1xf32> to vector<6x8x1xf32>
    %282 = arith.subf %278, %281 : vector<6x8x1xf32>
    %283 = math.exp %282 : vector<6x8x1xf32>
    %cst_65 = arith.constant dense<0.000000e+00> : vector<8x1xf32>
    %284 = vector.multi_reduction <add>, %283, %cst_65 [0] : vector<6x8x1xf32> to vector<8x1xf32>
    %285 = vector.shape_cast %284 : vector<8x1xf32> to vector<1x8x1xf32>
    %286 = tpu.reciprocal %285 {approx = true} : vector<1x8x1xf32> -> vector<1x8x1xf32>
    %287 = vector.broadcast %286 : vector<1x8x1xf32> to vector<6x8x1xf32>
    %288 = arith.mulf %283, %287 : vector<6x8x1xf32>
    %289 = vector.broadcast %288 : vector<6x8x1xf32> to vector<6x8x32xf32>
    %290 = arith.mulf %289, %234 : vector<6x8x32xf32>
    %cst_66 = arith.constant dense<0.000000e+00> : vector<8x32xf32>
    %291 = vector.multi_reduction <add>, %290, %cst_66 [0] : vector<6x8x32xf32> to vector<8x32xf32>
    %292 = vector.broadcast %288 : vector<6x8x1xf32> to vector<6x8x32xf32>
    %293 = arith.mulf %292, %235 : vector<6x8x32xf32>
    %cst_67 = arith.constant dense<0.000000e+00> : vector<8x32xf32>
    %294 = vector.multi_reduction <add>, %293, %cst_67 [0] : vector<6x8x32xf32> to vector<8x32xf32>
    %295 = vector.extract_strided_slice %252 {offsets = [2, 0, 0], sizes = [1, 8, 1], strides = [1, 1, 1]} : vector<3x8x1xf32> to vector<1x8x1xf32>
    %296 = vector.shape_cast %295 : vector<1x8x1xf32> to vector<8x1xf32>
    %297 = vector.shape_cast %296 : vector<8x1xf32> to vector<1x8x1xf32>
    %298 = vector.broadcast %297 : vector<1x8x1xf32> to vector<6x8x1xf32>
    %299 = arith.addf %243, %298 : vector<6x8x1xf32>
    %cst_68 = arith.constant dense<0xFF800000> : vector<8x1xf32>
    %300 = vector.multi_reduction <maximumf>, %299, %cst_68 [0] : vector<6x8x1xf32> to vector<8x1xf32>
    %301 = vector.shape_cast %300 : vector<8x1xf32> to vector<1x8x1xf32>
    %302 = vector.broadcast %301 : vector<1x8x1xf32> to vector<6x8x1xf32>
    %303 = arith.subf %299, %302 : vector<6x8x1xf32>
    %304 = math.exp %303 : vector<6x8x1xf32>
    %cst_69 = arith.constant dense<0.000000e+00> : vector<8x1xf32>
    %305 = vector.multi_reduction <add>, %304, %cst_69 [0] : vector<6x8x1xf32> to vector<8x1xf32>
    %306 = vector.shape_cast %305 : vector<8x1xf32> to vector<1x8x1xf32>
    %307 = tpu.reciprocal %306 {approx = true} : vector<1x8x1xf32> -> vector<1x8x1xf32>
    %308 = vector.broadcast %307 : vector<1x8x1xf32> to vector<6x8x1xf32>
    %309 = arith.mulf %304, %308 : vector<6x8x1xf32>
    %310 = vector.broadcast %309 : vector<6x8x1xf32> to vector<6x8x32xf32>
    %311 = arith.mulf %310, %234 : vector<6x8x32xf32>
    %cst_70 = arith.constant dense<0.000000e+00> : vector<8x32xf32>
    %312 = vector.multi_reduction <add>, %311, %cst_70 [0] : vector<6x8x32xf32> to vector<8x32xf32>
    %313 = vector.broadcast %309 : vector<6x8x1xf32> to vector<6x8x32xf32>
    %314 = arith.mulf %313, %235 : vector<6x8x32xf32>
    %cst_71 = arith.constant dense<0.000000e+00> : vector<8x32xf32>
    %315 = vector.multi_reduction <add>, %314, %cst_71 [0] : vector<6x8x32xf32> to vector<8x32xf32>
    %316 = tpu.concatenate %270, %291, %312 in 0 : vector<8x32xf32>, vector<8x32xf32>, vector<8x32xf32> -> vector<24x32xf32>
    %317 = tpu.concatenate %273, %294, %315 in 0 : vector<8x32xf32>, vector<8x32xf32>, vector<8x32xf32> -> vector<24x32xf32>
    %c0_72 = arith.constant 0 : index
    %c0_73 = arith.constant 0 : index
    %318 = vector.load %arg12[%c0_72, %c0_73] : memref<32x128xf32, #tpu.memory_space<vmem>>, vector<32x128xf32>
    %c0_74 = arith.constant 0 : index
    %c0_75 = arith.constant 0 : index
    %319 = vector.load %arg13[%c0_74, %c0_75] : memref<1x128xf32, #tpu.memory_space<vmem>>, vector<1x128xf32>
    %c0_76 = arith.constant 0 : index
    %c0_77 = arith.constant 0 : index
    %320 = vector.load %arg8[%c0_76, %c0_77] : memref<32x128xf32, #tpu.memory_space<vmem>>, vector<32x128xf32>
    %cst_78 = arith.constant dense<0.000000e+00> : vector<24x128xf32>
    %321 = tpu.matmul %316, %320, %cst_78 {dimension_numbers = #tpu.dot_dimension_numbers<[1], [0], [0], [1], [0, 0, 1, 1], [], []>} : vector<24x32xf32>, vector<32x128xf32>, vector<24x128xf32> -> vector<24x128xf32>
    %c0_79 = arith.constant 0 : index
    %c0_80 = arith.constant 0 : index
    %322 = vector.load %arg9[%c0_79, %c0_80] : memref<1x128xf32, #tpu.memory_space<vmem>>, vector<1x128xf32>
    %323 = vector.broadcast %322 : vector<1x128xf32> to vector<24x128xf32>
    %324 = arith.addf %321, %323 : vector<24x128xf32>
    %325 = vector.extract_strided_slice %0 {offsets = [344, 0], sizes = [24, 2], strides = [1, 1]} : vector<384x2xf32> to vector<24x2xf32>
    %c0_81 = arith.constant 0 : index
    %c0_82 = arith.constant 0 : index
    %326 = vector.load %arg7[%c0_81, %c0_82] : memref<2x128xf32, #tpu.memory_space<vmem>>, vector<2x128xf32>
    %cst_83 = arith.constant dense<0.000000e+00> : vector<24x128xf32>
    %327 = tpu.matmul %325, %326, %cst_83 {dimension_numbers = #tpu.dot_dimension_numbers<[1], [0], [0], [1], [0, 0, 1, 1], [], []>} : vector<24x2xf32>, vector<2x128xf32>, vector<24x128xf32> -> vector<24x128xf32>
    %328 = arith.addf %327, %324 : vector<24x128xf32>
    %329 = vector.extract_strided_slice %328 {offsets = [0, 0], sizes = [24, 32], strides = [1, 1]} : vector<24x128xf32> to vector<24x32xf32>
    %330 = arith.negf %329 : vector<24x32xf32>
    %331 = math.exp %330 : vector<24x32xf32>
    %cst_84 = arith.constant 1.000000e+00 : f32
    %332 = vector.broadcast %cst_84 : f32 to vector<24x32xf32>
    %333 = arith.addf %332, %331 : vector<24x32xf32>
    %334 = arith.divf %332, %333 : vector<24x32xf32>
    %335 = vector.extract_strided_slice %328 {offsets = [0, 32], sizes = [24, 32], strides = [1, 1]} : vector<24x128xf32> to vector<24x32xf32>
    %336 = arith.negf %335 : vector<24x32xf32>
    %337 = math.exp %336 : vector<24x32xf32>
    %cst_85 = arith.constant 1.000000e+00 : f32
    %338 = vector.broadcast %cst_85 : f32 to vector<24x32xf32>
    %339 = arith.addf %338, %337 : vector<24x32xf32>
    %340 = arith.divf %338, %339 : vector<24x32xf32>
    %341 = vector.extract_strided_slice %328 {offsets = [0, 64], sizes = [24, 32], strides = [1, 1]} : vector<24x128xf32> to vector<24x32xf32>
    %342 = math.tanh %341 : vector<24x32xf32>
    %343 = vector.extract_strided_slice %328 {offsets = [0, 96], sizes = [24, 32], strides = [1, 1]} : vector<24x128xf32> to vector<24x32xf32>
    %344 = arith.negf %343 : vector<24x32xf32>
    %345 = math.exp %344 : vector<24x32xf32>
    %cst_86 = arith.constant 1.000000e+00 : f32
    %346 = vector.broadcast %cst_86 : f32 to vector<24x32xf32>
    %347 = arith.addf %346, %345 : vector<24x32xf32>
    %348 = arith.divf %346, %347 : vector<24x32xf32>
    %349 = arith.mulf %340, %317 : vector<24x32xf32>
    %350 = arith.mulf %334, %342 : vector<24x32xf32>
    %351 = arith.addf %349, %350 : vector<24x32xf32>
    %352 = math.tanh %351 : vector<24x32xf32>
    %353 = arith.mulf %348, %352 : vector<24x32xf32>
    %c0_87 = arith.constant 0 : index
    %c0_88 = arith.constant 0 : index
    %354 = vector.load %arg16[%c0_87, %c0_88] : memref<192x32xf32, #tpu.memory_space<vmem>>, vector<24x32xf32>
    tpu.vector_store %arg16[%c0_87, %c0_88], %353 {strides = array<i32>} : memref<192x32xf32, #tpu.memory_space<vmem>>, vector<24x32xf32>,
    %cst_89 = arith.constant dense<0.000000e+00> : vector<24x128xf32>
    %355 = tpu.matmul %353, %318, %cst_89 {dimension_numbers = #tpu.dot_dimension_numbers<[1], [0], [0], [1], [0, 0, 1, 1], [], []>} : vector<24x32xf32>, vector<32x128xf32>, vector<24x128xf32> -> vector<24x128xf32>
    %356 = vector.broadcast %319 : vector<1x128xf32> to vector<24x128xf32>
    %357 = arith.addf %355, %356 : vector<24x128xf32>
    %358 = arith.addf %357, %324 : vector<24x128xf32>
    %359 = vector.extract_strided_slice %358 {offsets = [0, 0], sizes = [24, 32], strides = [1, 1]} : vector<24x128xf32> to vector<24x32xf32>
    %360 = arith.negf %359 : vector<24x32xf32>
    %361 = math.exp %360 : vector<24x32xf32>
    %cst_90 = arith.constant 1.000000e+00 : f32
    %362 = vector.broadcast %cst_90 : f32 to vector<24x32xf32>
    %363 = arith.addf %362, %361 : vector<24x32xf32>
    %364 = arith.divf %362, %363 : vector<24x32xf32>
    %365 = vector.extract_strided_slice %358 {offsets = [0, 32], sizes = [24, 32], strides = [1, 1]} : vector<24x128xf32> to vector<24x32xf32>
    %366 = arith.negf %365 : vector<24x32xf32>
    %367 = math.exp %366 : vector<24x32xf32>
    %cst_91 = arith.constant 1.000000e+00 : f32
    %368 = vector.broadcast %cst_91 : f32 to vector<24x32xf32>
    %369 = arith.addf %368, %367 : vector<24x32xf32>
    %370 = arith.divf %368, %369 : vector<24x32xf32>
    %371 = vector.extract_strided_slice %358 {offsets = [0, 64], sizes = [24, 32], strides = [1, 1]} : vector<24x128xf32> to vector<24x32xf32>
    %372 = math.tanh %371 : vector<24x32xf32>
    %373 = vector.extract_strided_slice %358 {offsets = [0, 96], sizes = [24, 32], strides = [1, 1]} : vector<24x128xf32> to vector<24x32xf32>
    %374 = arith.negf %373 : vector<24x32xf32>
    %375 = math.exp %374 : vector<24x32xf32>
    %cst_92 = arith.constant 1.000000e+00 : f32
    %376 = vector.broadcast %cst_92 : f32 to vector<24x32xf32>
    %377 = arith.addf %376, %375 : vector<24x32xf32>
    %378 = arith.divf %376, %377 : vector<24x32xf32>
    %379 = arith.mulf %370, %317 : vector<24x32xf32>
    %380 = arith.mulf %364, %372 : vector<24x32xf32>
    %381 = arith.addf %379, %380 : vector<24x32xf32>
    %382 = math.tanh %381 : vector<24x32xf32>
    %383 = arith.mulf %378, %382 : vector<24x32xf32>
    %c24 = arith.constant 24 : index
    %c0_93 = arith.constant 0 : index
    %384 = vector.load %arg16[%c24, %c0_93] : memref<192x32xf32, #tpu.memory_space<vmem>>, vector<24x32xf32>
    tpu.vector_store %arg16[%c24, %c0_93], %383 {strides = array<i32>} : memref<192x32xf32, #tpu.memory_space<vmem>>, vector<24x32xf32>,
    %cst_94 = arith.constant dense<0.000000e+00> : vector<24x128xf32>
    %385 = tpu.matmul %383, %318, %cst_94 {dimension_numbers = #tpu.dot_dimension_numbers<[1], [0], [0], [1], [0, 0, 1, 1], [], []>} : vector<24x32xf32>, vector<32x128xf32>, vector<24x128xf32> -> vector<24x128xf32>
    %386 = vector.broadcast %319 : vector<1x128xf32> to vector<24x128xf32>
    %387 = arith.addf %385, %386 : vector<24x128xf32>
    %388 = arith.addf %387, %324 : vector<24x128xf32>
    %389 = vector.extract_strided_slice %388 {offsets = [0, 0], sizes = [24, 32], strides = [1, 1]} : vector<24x128xf32> to vector<24x32xf32>
    %390 = arith.negf %389 : vector<24x32xf32>
    %391 = math.exp %390 : vector<24x32xf32>
    %cst_95 = arith.constant 1.000000e+00 : f32
    %392 = vector.broadcast %cst_95 : f32 to vector<24x32xf32>
    %393 = arith.addf %392, %391 : vector<24x32xf32>
    %394 = arith.divf %392, %393 : vector<24x32xf32>
    %395 = vector.extract_strided_slice %388 {offsets = [0, 32], sizes = [24, 32], strides = [1, 1]} : vector<24x128xf32> to vector<24x32xf32>
    %396 = arith.negf %395 : vector<24x32xf32>
    %397 = math.exp %396 : vector<24x32xf32>
    %cst_96 = arith.constant 1.000000e+00 : f32
    %398 = vector.broadcast %cst_96 : f32 to vector<24x32xf32>
    %399 = arith.addf %398, %397 : vector<24x32xf32>
    %400 = arith.divf %398, %399 : vector<24x32xf32>
    %401 = vector.extract_strided_slice %388 {offsets = [0, 64], sizes = [24, 32], strides = [1, 1]} : vector<24x128xf32> to vector<24x32xf32>
    %402 = math.tanh %401 : vector<24x32xf32>
    %403 = vector.extract_strided_slice %388 {offsets = [0, 96], sizes = [24, 32], strides = [1, 1]} : vector<24x128xf32> to vector<24x32xf32>
    %404 = arith.negf %403 : vector<24x32xf32>
    %405 = math.exp %404 : vector<24x32xf32>
    %cst_97 = arith.constant 1.000000e+00 : f32
    %406 = vector.broadcast %cst_97 : f32 to vector<24x32xf32>
    %407 = arith.addf %406, %405 : vector<24x32xf32>
    %408 = arith.divf %406, %407 : vector<24x32xf32>
    %409 = arith.mulf %400, %317 : vector<24x32xf32>
    %410 = arith.mulf %394, %402 : vector<24x32xf32>
    %411 = arith.addf %409, %410 : vector<24x32xf32>
    %412 = math.tanh %411 : vector<24x32xf32>
    %413 = arith.mulf %408, %412 : vector<24x32xf32>
    %c48_98 = arith.constant 48 : index
    %c0_99 = arith.constant 0 : index
    %414 = vector.load %arg16[%c48_98, %c0_99] : memref<192x32xf32, #tpu.memory_space<vmem>>, vector<24x32xf32>
    tpu.vector_store %arg16[%c48_98, %c0_99], %413 {strides = array<i32>} : memref<192x32xf32, #tpu.memory_space<vmem>>, vector<24x32xf32>,
    %cst_100 = arith.constant dense<0.000000e+00> : vector<24x128xf32>
    %415 = tpu.matmul %413, %318, %cst_100 {dimension_numbers = #tpu.dot_dimension_numbers<[1], [0], [0], [1], [0, 0, 1, 1], [], []>} : vector<24x32xf32>, vector<32x128xf32>, vector<24x128xf32> -> vector<24x128xf32>
    %416 = vector.broadcast %319 : vector<1x128xf32> to vector<24x128xf32>
    %417 = arith.addf %415, %416 : vector<24x128xf32>
    %418 = arith.addf %417, %324 : vector<24x128xf32>
    %419 = vector.extract_strided_slice %418 {offsets = [0, 0], sizes = [24, 32], strides = [1, 1]} : vector<24x128xf32> to vector<24x32xf32>
    %420 = arith.negf %419 : vector<24x32xf32>
    %421 = math.exp %420 : vector<24x32xf32>
    %cst_101 = arith.constant 1.000000e+00 : f32
    %422 = vector.broadcast %cst_101 : f32 to vector<24x32xf32>
    %423 = arith.addf %422, %421 : vector<24x32xf32>
    %424 = arith.divf %422, %423 : vector<24x32xf32>
    %425 = vector.extract_strided_slice %418 {offsets = [0, 32], sizes = [24, 32], strides = [1, 1]} : vector<24x128xf32> to vector<24x32xf32>
    %426 = arith.negf %425 : vector<24x32xf32>
    %427 = math.exp %426 : vector<24x32xf32>
    %cst_102 = arith.constant 1.000000e+00 : f32
    %428 = vector.broadcast %cst_102 : f32 to vector<24x32xf32>
    %429 = arith.addf %428, %427 : vector<24x32xf32>
    %430 = arith.divf %428, %429 : vector<24x32xf32>
    %431 = vector.extract_strided_slice %418 {offsets = [0, 64], sizes = [24, 32], strides = [1, 1]} : vector<24x128xf32> to vector<24x32xf32>
    %432 = math.tanh %431 : vector<24x32xf32>
    %433 = vector.extract_strided_slice %418 {offsets = [0, 96], sizes = [24, 32], strides = [1, 1]} : vector<24x128xf32> to vector<24x32xf32>
    %434 = arith.negf %433 : vector<24x32xf32>
    %435 = math.exp %434 : vector<24x32xf32>
    %cst_103 = arith.constant 1.000000e+00 : f32
    %436 = vector.broadcast %cst_103 : f32 to vector<24x32xf32>
    %437 = arith.addf %436, %435 : vector<24x32xf32>
    %438 = arith.divf %436, %437 : vector<24x32xf32>
    %439 = arith.mulf %430, %317 : vector<24x32xf32>
    %440 = arith.mulf %424, %432 : vector<24x32xf32>
    %441 = arith.addf %439, %440 : vector<24x32xf32>
    %442 = math.tanh %441 : vector<24x32xf32>
    %443 = arith.mulf %438, %442 : vector<24x32xf32>
    %c72 = arith.constant 72 : index
    %c0_104 = arith.constant 0 : index
    %444 = vector.load %arg16[%c72, %c0_104] : memref<192x32xf32, #tpu.memory_space<vmem>>, vector<24x32xf32>
    tpu.vector_store %arg16[%c72, %c0_104], %443 {strides = array<i32>} : memref<192x32xf32, #tpu.memory_space<vmem>>, vector<24x32xf32>,
    %cst_105 = arith.constant dense<0.000000e+00> : vector<24x128xf32>
    %445 = tpu.matmul %443, %318, %cst_105 {dimension_numbers = #tpu.dot_dimension_numbers<[1], [0], [0], [1], [0, 0, 1, 1], [], []>} : vector<24x32xf32>, vector<32x128xf32>, vector<24x128xf32> -> vector<24x128xf32>
    %446 = vector.broadcast %319 : vector<1x128xf32> to vector<24x128xf32>
    %447 = arith.addf %445, %446 : vector<24x128xf32>
    %448 = arith.addf %447, %324 : vector<24x128xf32>
    %449 = vector.extract_strided_slice %448 {offsets = [0, 0], sizes = [24, 32], strides = [1, 1]} : vector<24x128xf32> to vector<24x32xf32>
    %450 = arith.negf %449 : vector<24x32xf32>
    %451 = math.exp %450 : vector<24x32xf32>
    %cst_106 = arith.constant 1.000000e+00 : f32
    %452 = vector.broadcast %cst_106 : f32 to vector<24x32xf32>
    %453 = arith.addf %452, %451 : vector<24x32xf32>
    %454 = arith.divf %452, %453 : vector<24x32xf32>
    %455 = vector.extract_strided_slice %448 {offsets = [0, 32], sizes = [24, 32], strides = [1, 1]} : vector<24x128xf32> to vector<24x32xf32>
    %456 = arith.negf %455 : vector<24x32xf32>
    %457 = math.exp %456 : vector<24x32xf32>
    %cst_107 = arith.constant 1.000000e+00 : f32
    %458 = vector.broadcast %cst_107 : f32 to vector<24x32xf32>
    %459 = arith.addf %458, %457 : vector<24x32xf32>
    %460 = arith.divf %458, %459 : vector<24x32xf32>
    %461 = vector.extract_strided_slice %448 {offsets = [0, 64], sizes = [24, 32], strides = [1, 1]} : vector<24x128xf32> to vector<24x32xf32>
    %462 = math.tanh %461 : vector<24x32xf32>
    %463 = vector.extract_strided_slice %448 {offsets = [0, 96], sizes = [24, 32], strides = [1, 1]} : vector<24x128xf32> to vector<24x32xf32>
    %464 = arith.negf %463 : vector<24x32xf32>
    %465 = math.exp %464 : vector<24x32xf32>
    %cst_108 = arith.constant 1.000000e+00 : f32
    %466 = vector.broadcast %cst_108 : f32 to vector<24x32xf32>
    %467 = arith.addf %466, %465 : vector<24x32xf32>
    %468 = arith.divf %466, %467 : vector<24x32xf32>
    %469 = arith.mulf %460, %317 : vector<24x32xf32>
    %470 = arith.mulf %454, %462 : vector<24x32xf32>
    %471 = arith.addf %469, %470 : vector<24x32xf32>
    %472 = math.tanh %471 : vector<24x32xf32>
    %473 = arith.mulf %468, %472 : vector<24x32xf32>
    %c96_109 = arith.constant 96 : index
    %c0_110 = arith.constant 0 : index
    %474 = vector.load %arg16[%c96_109, %c0_110] : memref<192x32xf32, #tpu.memory_space<vmem>>, vector<24x32xf32>
    tpu.vector_store %arg16[%c96_109, %c0_110], %473 {strides = array<i32>} : memref<192x32xf32, #tpu.memory_space<vmem>>, vector<24x32xf32>,
    %cst_111 = arith.constant dense<0.000000e+00> : vector<24x128xf32>
    %475 = tpu.matmul %473, %318, %cst_111 {dimension_numbers = #tpu.dot_dimension_numbers<[1], [0], [0], [1], [0, 0, 1, 1], [], []>} : vector<24x32xf32>, vector<32x128xf32>, vector<24x128xf32> -> vector<24x128xf32>
    %476 = vector.broadcast %319 : vector<1x128xf32> to vector<24x128xf32>
    %477 = arith.addf %475, %476 : vector<24x128xf32>
    %478 = arith.addf %477, %324 : vector<24x128xf32>
    %479 = vector.extract_strided_slice %478 {offsets = [0, 0], sizes = [24, 32], strides = [1, 1]} : vector<24x128xf32> to vector<24x32xf32>
    %480 = arith.negf %479 : vector<24x32xf32>
    %481 = math.exp %480 : vector<24x32xf32>
    %cst_112 = arith.constant 1.000000e+00 : f32
    %482 = vector.broadcast %cst_112 : f32 to vector<24x32xf32>
    %483 = arith.addf %482, %481 : vector<24x32xf32>
    %484 = arith.divf %482, %483 : vector<24x32xf32>
    %485 = vector.extract_strided_slice %478 {offsets = [0, 32], sizes = [24, 32], strides = [1, 1]} : vector<24x128xf32> to vector<24x32xf32>
    %486 = arith.negf %485 : vector<24x32xf32>
    %487 = math.exp %486 : vector<24x32xf32>
    %cst_113 = arith.constant 1.000000e+00 : f32
    %488 = vector.broadcast %cst_113 : f32 to vector<24x32xf32>
    %489 = arith.addf %488, %487 : vector<24x32xf32>
    %490 = arith.divf %488, %489 : vector<24x32xf32>
    %491 = vector.extract_strided_slice %478 {offsets = [0, 64], sizes = [24, 32], strides = [1, 1]} : vector<24x128xf32> to vector<24x32xf32>
    %492 = math.tanh %491 : vector<24x32xf32>
    %493 = vector.extract_strided_slice %478 {offsets = [0, 96], sizes = [24, 32], strides = [1, 1]} : vector<24x128xf32> to vector<24x32xf32>
    %494 = arith.negf %493 : vector<24x32xf32>
    %495 = math.exp %494 : vector<24x32xf32>
    %cst_114 = arith.constant 1.000000e+00 : f32
    %496 = vector.broadcast %cst_114 : f32 to vector<24x32xf32>
    %497 = arith.addf %496, %495 : vector<24x32xf32>
    %498 = arith.divf %496, %497 : vector<24x32xf32>
    %499 = arith.mulf %490, %317 : vector<24x32xf32>
    %500 = arith.mulf %484, %492 : vector<24x32xf32>
    %501 = arith.addf %499, %500 : vector<24x32xf32>
    %502 = math.tanh %501 : vector<24x32xf32>
    %503 = arith.mulf %498, %502 : vector<24x32xf32>
    %c120 = arith.constant 120 : index
    %c0_115 = arith.constant 0 : index
    %504 = vector.load %arg16[%c120, %c0_115] : memref<192x32xf32, #tpu.memory_space<vmem>>, vector<24x32xf32>
    tpu.vector_store %arg16[%c120, %c0_115], %503 {strides = array<i32>} : memref<192x32xf32, #tpu.memory_space<vmem>>, vector<24x32xf32>,
    %cst_116 = arith.constant dense<0.000000e+00> : vector<24x128xf32>
    %505 = tpu.matmul %503, %318, %cst_116 {dimension_numbers = #tpu.dot_dimension_numbers<[1], [0], [0], [1], [0, 0, 1, 1], [], []>} : vector<24x32xf32>, vector<32x128xf32>, vector<24x128xf32> -> vector<24x128xf32>
    %506 = vector.broadcast %319 : vector<1x128xf32> to vector<24x128xf32>
    %507 = arith.addf %505, %506 : vector<24x128xf32>
    %508 = arith.addf %507, %324 : vector<24x128xf32>
    %509 = vector.extract_strided_slice %508 {offsets = [0, 0], sizes = [24, 32], strides = [1, 1]} : vector<24x128xf32> to vector<24x32xf32>
    %510 = arith.negf %509 : vector<24x32xf32>
    %511 = math.exp %510 : vector<24x32xf32>
    %cst_117 = arith.constant 1.000000e+00 : f32
    %512 = vector.broadcast %cst_117 : f32 to vector<24x32xf32>
    %513 = arith.addf %512, %511 : vector<24x32xf32>
    %514 = arith.divf %512, %513 : vector<24x32xf32>
    %515 = vector.extract_strided_slice %508 {offsets = [0, 32], sizes = [24, 32], strides = [1, 1]} : vector<24x128xf32> to vector<24x32xf32>
    %516 = arith.negf %515 : vector<24x32xf32>
    %517 = math.exp %516 : vector<24x32xf32>
    %cst_118 = arith.constant 1.000000e+00 : f32
    %518 = vector.broadcast %cst_118 : f32 to vector<24x32xf32>
    %519 = arith.addf %518, %517 : vector<24x32xf32>
    %520 = arith.divf %518, %519 : vector<24x32xf32>
    %521 = vector.extract_strided_slice %508 {offsets = [0, 64], sizes = [24, 32], strides = [1, 1]} : vector<24x128xf32> to vector<24x32xf32>
    %522 = math.tanh %521 : vector<24x32xf32>
    %523 = vector.extract_strided_slice %508 {offsets = [0, 96], sizes = [24, 32], strides = [1, 1]} : vector<24x128xf32> to vector<24x32xf32>
    %524 = arith.negf %523 : vector<24x32xf32>
    %525 = math.exp %524 : vector<24x32xf32>
    %cst_119 = arith.constant 1.000000e+00 : f32
    %526 = vector.broadcast %cst_119 : f32 to vector<24x32xf32>
    %527 = arith.addf %526, %525 : vector<24x32xf32>
    %528 = arith.divf %526, %527 : vector<24x32xf32>
    %529 = arith.mulf %520, %317 : vector<24x32xf32>
    %530 = arith.mulf %514, %522 : vector<24x32xf32>
    %531 = arith.addf %529, %530 : vector<24x32xf32>
    %532 = math.tanh %531 : vector<24x32xf32>
    %533 = arith.mulf %528, %532 : vector<24x32xf32>
    %c144_120 = arith.constant 144 : index
    %c0_121 = arith.constant 0 : index
    %534 = vector.load %arg16[%c144_120, %c0_121] : memref<192x32xf32, #tpu.memory_space<vmem>>, vector<24x32xf32>
    tpu.vector_store %arg16[%c144_120, %c0_121], %533 {strides = array<i32>} : memref<192x32xf32, #tpu.memory_space<vmem>>, vector<24x32xf32>,
    %cst_122 = arith.constant dense<0.000000e+00> : vector<24x128xf32>
    %535 = tpu.matmul %533, %318, %cst_122 {dimension_numbers = #tpu.dot_dimension_numbers<[1], [0], [0], [1], [0, 0, 1, 1], [], []>} : vector<24x32xf32>, vector<32x128xf32>, vector<24x128xf32> -> vector<24x128xf32>
    %536 = vector.broadcast %319 : vector<1x128xf32> to vector<24x128xf32>
    %537 = arith.addf %535, %536 : vector<24x128xf32>
    %538 = arith.addf %537, %324 : vector<24x128xf32>
    %539 = vector.extract_strided_slice %538 {offsets = [0, 0], sizes = [24, 32], strides = [1, 1]} : vector<24x128xf32> to vector<24x32xf32>
    %540 = arith.negf %539 : vector<24x32xf32>
    %541 = math.exp %540 : vector<24x32xf32>
    %cst_123 = arith.constant 1.000000e+00 : f32
    %542 = vector.broadcast %cst_123 : f32 to vector<24x32xf32>
    %543 = arith.addf %542, %541 : vector<24x32xf32>
    %544 = arith.divf %542, %543 : vector<24x32xf32>
    %545 = vector.extract_strided_slice %538 {offsets = [0, 32], sizes = [24, 32], strides = [1, 1]} : vector<24x128xf32> to vector<24x32xf32>
    %546 = arith.negf %545 : vector<24x32xf32>
    %547 = math.exp %546 : vector<24x32xf32>
    %cst_124 = arith.constant 1.000000e+00 : f32
    %548 = vector.broadcast %cst_124 : f32 to vector<24x32xf32>
    %549 = arith.addf %548, %547 : vector<24x32xf32>
    %550 = arith.divf %548, %549 : vector<24x32xf32>
    %551 = vector.extract_strided_slice %538 {offsets = [0, 64], sizes = [24, 32], strides = [1, 1]} : vector<24x128xf32> to vector<24x32xf32>
    %552 = math.tanh %551 : vector<24x32xf32>
    %553 = vector.extract_strided_slice %538 {offsets = [0, 96], sizes = [24, 32], strides = [1, 1]} : vector<24x128xf32> to vector<24x32xf32>
    %554 = arith.negf %553 : vector<24x32xf32>
    %555 = math.exp %554 : vector<24x32xf32>
    %cst_125 = arith.constant 1.000000e+00 : f32
    %556 = vector.broadcast %cst_125 : f32 to vector<24x32xf32>
    %557 = arith.addf %556, %555 : vector<24x32xf32>
    %558 = arith.divf %556, %557 : vector<24x32xf32>
    %559 = arith.mulf %550, %317 : vector<24x32xf32>
    %560 = arith.mulf %544, %552 : vector<24x32xf32>
    %561 = arith.addf %559, %560 : vector<24x32xf32>
    %562 = math.tanh %561 : vector<24x32xf32>
    %563 = arith.mulf %558, %562 : vector<24x32xf32>
    %c168 = arith.constant 168 : index
    %c0_126 = arith.constant 0 : index
    %564 = vector.load %arg16[%c168, %c0_126] : memref<192x32xf32, #tpu.memory_space<vmem>>, vector<24x32xf32>
    tpu.vector_store %arg16[%c168, %c0_126], %563 {strides = array<i32>} : memref<192x32xf32, #tpu.memory_space<vmem>>, vector<24x32xf32>,
    %c0_127 = arith.constant 0 : index
    %c0_128 = arith.constant 0 : index
    %565 = vector.load %arg16[%c0_127, %c0_128] : memref<192x32xf32, #tpu.memory_space<vmem>>, vector<192x32xf32>
    %c0_129 = arith.constant 0 : index
    %c0_130 = arith.constant 0 : index
    %566 = vector.load %arg10[%c0_129, %c0_130] : memref<32x128xf32, #tpu.memory_space<vmem>>, vector<32x128xf32>
    %cst_131 = arith.constant dense<0.000000e+00> : vector<192x128xf32>
    %567 = tpu.matmul %565, %566, %cst_131 {dimension_numbers = #tpu.dot_dimension_numbers<[1], [0], [0], [1], [0, 0, 1, 1], [], []>} : vector<192x32xf32>, vector<32x128xf32>, vector<192x128xf32> -> vector<192x128xf32>
    %c0_132 = arith.constant 0 : index
    %c0_133 = arith.constant 0 : index
    %568 = vector.load %arg11[%c0_132, %c0_133] : memref<1x128xf32, #tpu.memory_space<vmem>>, vector<1x128xf32>
    %569 = vector.broadcast %568 : vector<1x128xf32> to vector<192x128xf32>
    %570 = arith.addf %567, %569 : vector<192x128xf32>
    %c0_134 = arith.constant 0 : index
    %c0_135 = arith.constant 0 : index
    %571 = vector.load %arg14[%c0_134, %c0_135] : memref<192x128xf32, #tpu.memory_space<vmem>>, vector<192x128xf32>
    tpu.vector_store %arg14[%c0_134, %c0_135], %570 {strides = array<i32>} : memref<192x128xf32, #tpu.memory_space<vmem>>, vector<192x128xf32>,
    return
  }
}

</mosaic_0001>

<llo_original>
// kernel: _seq2seq_forward.1
$region0: #{_seq2seq_forward.1}
  #allocation0 [shape = 'u32[]', space=smem, size = 0x4, offset = 0x4, fixed_abs, tag = 'smem constant byte address 0x4 - core index']
  #allocation1 [shape = 'u32[144,128]{1,0:T(1,128)}', space=vmem, size = 0x12000, scoped, tag = 'internal scratch']
  #allocation2 [shape = 'f32[384,128]{1,0:T(8,128)}', space=vmem, size = 0x30000, scoped, tag = 'scratch operand']
  #allocation3 [shape = 'f32[192,32]{1,0:T(8,128)}', space=vmem, size = 0x18000, scoped, tag = 'scratch operand']
  #allocation4 [shape = 'f32[1,1]{1,0:T(1,128)S(1)}', space=vmem, size = 0x200, scoped, tag = 'scoped memory for _seq2seq_forward.1']
  %s0 = inlined_call_operand.vmem [shape: f32[384,2], index: 0, kind: input, shape index: {}]
  %s1 = inlined_call_operand.vmem [shape: f32[2,128], index: 1, kind: input, shape index: {}]
  %s2 = inlined_call_operand.vmem [shape: f32[32,128], index: 2, kind: input, shape index: {}]
  %s3 = inlined_call_operand.vmem [shape: f32[1,128], index: 3, kind: input, shape index: {}]
  %s4 = inlined_call_operand.vmem [shape: f32[1,32], index: 4, kind: input, shape index: {}]
  %s5 = inlined_call_operand.vmem [shape: f32[1,32], index: 5, kind: input, shape index: {}]
  %s6 = inlined_call_operand.<no memory space> [shape: f32[1,1], index: 6, kind: input, shape index: {}]
  %s7 = inlined_call_operand.vmem [shape: f32[2,128], index: 7, kind: input, shape index: {}]
  %s8 = inlined_call_operand.vmem [shape: f32[32,128], index: 8, kind: input, shape index: {}]
  %s9 = inlined_call_operand.vmem [shape: f32[1,128], index: 9, kind: input, shape index: {}]
  %s10 = inlined_call_operand.vmem [shape: f32[32,128], index: 10, kind: input, shape index: {}]
  %s11 = inlined_call_operand.vmem [shape: f32[1,128], index: 11, kind: input, shape index: {}]
  %s12 = inlined_call_operand.vmem [shape: f32[32,128], index: 12, kind: input, shape index: {}]
  %s13 = inlined_call_operand.vmem [shape: f32[1,128], index: 13, kind: input, shape index: {}]
  %s14 = inlined_call_operand.vmem [shape: f32[192,128], index: 14, kind: output, shape index: {}]
  %s15 = sld [smem:[#allocation0]]
  $region66: #{_seq2seq_forward.1} parent=0
    _
  %s17 = ssub.s32 1, %s15
  %s18 = scalar_select 0, %s17, %s15
  %v19 = vstv %s6
  %20 = vst [vmem:[#allocation4] sm:$0x1] %v19
  // Predicated region
  $region2: #{_seq2seq_forward.1} parent=0 // pred_check
    _
  $region3: #{_seq2seq_forward.1} parent=0 // pred_check_branch
    %22 = sbr.rel (0) target = $region5
  $region4: #{_seq2seq_forward.1} parent=0 // pred_region
    _
  $region5: #{_seq2seq_forward.1} parent=0 // pred_fallthru
    _
  // Predicated region
  $region6: #{_seq2seq_forward.1} parent=0 // pred_check
    _
  $region7: #{_seq2seq_forward.1} parent=0 // pred_check_branch
    %24 = sbr.rel (0) target = $region9
  $region8: #{_seq2seq_forward.1} parent=0 // pred_region
    _
  $region9: #{_seq2seq_forward.1} parent=0 // pred_fallthru
    _
  // Predicated region
  $region10: #{_seq2seq_forward.1} parent=0 // pred_check
    _
  $region11: #{_seq2seq_forward.1} parent=0 // pred_check_branch
    %26 = sbr.rel (0) target = $region13
  $region12: #{_seq2seq_forward.1} parent=0 // pred_region
    _
  $region13: #{_seq2seq_forward.1} parent=0 // pred_fallthru
    _
  // Predicated region
  $region14: #{_seq2seq_forward.1} parent=0 // pred_check
    _
  $region15: #{_seq2seq_forward.1} parent=0 // pred_check_branch
    %28 = sbr.rel (0) target = $region17
  $region16: #{_seq2seq_forward.1} parent=0 // pred_region
    _
  $region17: #{_seq2seq_forward.1} parent=0 // pred_fallthru
    _
  // Predicated region
  $region18: #{_seq2seq_forward.1} parent=0 // pred_check
    _
  $region19: #{_seq2seq_forward.1} parent=0 // pred_check_branch
    %30 = sbr.rel (0) target = $region21
  $region20: #{_seq2seq_forward.1} parent=0 // pred_region
    _
  $region21: #{_seq2seq_forward.1} parent=0 // pred_fallthru
    _
  // Predicated region
  $region22: #{_seq2seq_forward.1} parent=0 // pred_check
    _
  $region23: #{_seq2seq_forward.1} parent=0 // pred_check_branch
    %32 = sbr.rel (0) target = $region25
  $region24: #{_seq2seq_forward.1} parent=0 // pred_region
    _
  $region25: #{_seq2seq_forward.1} parent=0 // pred_fallthru
    _
  // Predicated region
  $region26: #{_seq2seq_forward.1} parent=0 // pred_check
    _
  $region27: #{_seq2seq_forward.1} parent=0 // pred_check_branch
    %34 = sbr.rel (0) target = $region29
  $region28: #{_seq2seq_forward.1} parent=0 // pred_region
    _
  $region29: #{_seq2seq_forward.1} parent=0 // pred_fallthru
    _
  // Predicated region
  $region30: #{_seq2seq_forward.1} parent=0 // pred_check
    _
  $region31: #{_seq2seq_forward.1} parent=0 // pred_check_branch
    %36 = sbr.rel (0) target = $region33
  $region32: #{_seq2seq_forward.1} parent=0 // pred_region
    _
  $region33: #{_seq2seq_forward.1} parent=0 // pred_fallthru
    _
  // Predicated region
  $region34: #{_seq2seq_forward.1} parent=0 // pred_check
    _
  $region35: #{_seq2seq_forward.1} parent=0 // pred_check_branch
    %38 = sbr.rel (0) target = $region37
  $region36: #{_seq2seq_forward.1} parent=0 // pred_region
    _
  $region37: #{_seq2seq_forward.1} parent=0 // pred_fallthru
    _
  // Predicated region
  $region38: #{_seq2seq_forward.1} parent=0 // pred_check
    _
  $region39: #{_seq2seq_forward.1} parent=0 // pred_check_branch
    %40 = sbr.rel (0) target = $region41
  $region40: #{_seq2seq_forward.1} parent=0 // pred_region
    _
  $region41: #{_seq2seq_forward.1} parent=0 // pred_fallthru
    _
  // Predicated region
  $region42: #{_seq2seq_forward.1} parent=0 // pred_check
    _
  $region43: #{_seq2seq_forward.1} parent=0 // pred_check_branch
    %42 = sbr.rel (0) target = $region45
  $region44: #{_seq2seq_forward.1} parent=0 // pred_region
    _
  $region45: #{_seq2seq_forward.1} parent=0 // pred_fallthru
    _
  // Predicated region
  $region46: #{_seq2seq_forward.1} parent=0 // pred_check
    _
  $region47: #{_seq2seq_forward.1} parent=0 // pred_check_branch
    %44 = sbr.rel (0) target = $region49
  $region48: #{_seq2seq_forward.1} parent=0 // pred_region
    _
  $region49: #{_seq2seq_forward.1} parent=0 // pred_fallthru
    _
  // Predicated region
  $region50: #{_seq2seq_forward.1} parent=0 // pred_check
    _
  $region51: #{_seq2seq_forward.1} parent=0 // pred_check_branch
    %46 = sbr.rel (0) target = $region53
  $region52: #{_seq2seq_forward.1} parent=0 // pred_region
    _
  $region53: #{_seq2seq_forward.1} parent=0 // pred_fallthru
    _
  // Predicated region
  $region54: #{_seq2seq_forward.1} parent=0 // pred_check
    _
  $region55: #{_seq2seq_forward.1} parent=0 // pred_check_branch
    %48 = sbr.rel (0) target = $region57
  $region56: #{_seq2seq_forward.1} parent=0 // pred_region
    _
  $region57: #{_seq2seq_forward.1} parent=0 // pred_fallthru
    _
  %v49 = vld [vmem:[%s0] sm:$0xff]
  %v50 = vld [vmem:[%s0 + $0x8] sm:$0xff]
  %v51 = vld [vmem:[%s0 + $0x10] sm:$0xff]
  %v52 = vld [vmem:[%s0 + $0x18] sm:$0xff]
  %v53 = vld [vmem:[%s0 + $0x20] sm:$0xff]
  %v54 = vld [vmem:[%s0 + $0x28] sm:$0xff]
  %v55 = vld [vmem:[%s0 + $0x30] sm:$0xff]
  %v56 = vld [vmem:[%s0 + $0x38] sm:$0xff]
  %v57 = vld [vmem:[%s0 + $0x40] sm:$0xff]
  %v58 = vld [vmem:[%s0 + $0x48] sm:$0xff]
  %v59 = vld [vmem:[%s0 + $0x50] sm:$0xff]
  %v60 = vld [vmem:[%s0 + $0x58] sm:$0xff]
  %v61 = vld [vmem:[%s0 + $0x60] sm:$0xff]
  %v62 = vld [vmem:[%s0 + $0x68] sm:$0xff]
  %v63 = vld [vmem:[%s0 + $0x70] sm:$0xff]
  %v64 = vld [vmem:[%s0 + $0x78] sm:$0xff]
  %v65 = vld [vmem:[%s0 + $0x80] sm:$0xff]
  %v66 = vld [vmem:[%s0 + $0x88] sm:$0xff]
  %v67 = vld [vmem:[%s0 + $0x90] sm:$0xff]
  %v68 = vld [vmem:[%s0 + $0x98] sm:$0xff]
  %v69 = vld [vmem:[%s0 + $0xa0] sm:$0xff]
  %v70 = vld [vmem:[%s0 + $0xa8] sm:$0xff]
  %v71 = vld [vmem:[%s0 + $0xb0] sm:$0xff]
  %v72 = vld [vmem:[%s0 + $0xb8] sm:$0xff]
  %v73 = vld [vmem:[%s0 + $0xc0] sm:$0xff]
  %v74 = vld [vmem:[%s0 + $0xc8] sm:$0xff]
  %v75 = vld [vmem:[%s0 + $0xd0] sm:$0xff]
  %v76 = vld [vmem:[%s0 + $0xd8] sm:$0xff]
  %v77 = vld [vmem:[%s0 + $0xe0] sm:$0xff]
  %v78 = vld [vmem:[%s0 + $0xe8] sm:$0xff]
  %v79 = vld [vmem:[%s0 + $0xf0] sm:$0xff]
  %v80 = vld [vmem:[%s0 + $0xf8] sm:$0xff]
  %v81 = vld [vmem:[%s0 + $0x100] sm:$0xff]
  %v82 = vld [vmem:[%s0 + $0x108] sm:$0xff]
  %v83 = vld [vmem:[%s0 + $0x110] sm:$0xff]
  %v84 = vld [vmem:[%s0 + $0x118] sm:$0xff]
  %v85 = vld [vmem:[%s0 + $0x120] sm:$0xff]
  %v86 = vld [vmem:[%s0 + $0x128] sm:$0xff]
  %v87 = vld [vmem:[%s0 + $0x130] sm:$0xff]
  %v88 = vld [vmem:[%s0 + $0x138] sm:$0xff]
  %v89 = vld [vmem:[%s0 + $0x140] sm:$0xff]
  %v90 = vld [vmem:[%s0 + $0x148] sm:$0xff]
  %v91 = vld [vmem:[%s0 + $0x150] sm:$0xff]
  %v92 = vld [vmem:[%s0 + $0x158] sm:$0xff]
  %v93 = vld [vmem:[%s0 + $0x160] sm:$0xff]
  %v94 = vld [vmem:[%s0 + $0x168] sm:$0xff]
  %v95 = vld [vmem:[%s0 + $0x170] sm:$0xff]
  %v96 = vld [vmem:[%s0 + $0x178] sm:$0xff]
  %v97 = vld [vmem:[%s2] sm:$0xff]
  %v98 = vld [vmem:[%s2 + $0x8] sm:$0xff]
  %v99 = vld [vmem:[%s2 + $0x10] sm:$0xff]
  %v100 = vld [vmem:[%s2 + $0x18] sm:$0xff]
  %v101 = vld [vmem:[%s1] sm:$0x3]
  %v102 = vld [vmem:[%s3] sm:$0x1]
  %v104 = vlaneseq
  %v105 = vshrl.u32 %v104, 7
  %v106 = vsub.s32 0, %v105
  %v107 = vrot.slane %v102, %v106
  %vm109 = vcmask 15360
  %v111 = vsel %vm109, %v49, 0
  %v114 = vsel %vm109, %v50, 0
  %v117 = vsel %vm109, %v51, 0
  %v120 = vsel %vm109, %v52, 0
  %v123 = vsel %vm109, %v53, 0
  %v126 = vsel %vm109, %v54, 0
  %v129 = vsel %vm109, %v55, 0
  %v132 = vsel %vm109, %v56, 0
  %v135 = vsel %vm109, %v57, 0
  %v138 = vsel %vm109, %v58, 0
  %v141 = vsel %vm109, %v59, 0
  %v144 = vsel %vm109, %v60, 0
  %v147 = vsel %vm109, %v61, 0
  %v150 = vsel %vm109, %v62, 0
  %v153 = vsel %vm109, %v63, 0
  %v156 = vsel %vm109, %v64, 0
  %v159 = vsel %vm109, %v65, 0
  %v162 = vsel %vm109, %v66, 0
  %v165 = vsel %vm109, %v67, 0
  %v168 = vsel %vm109, %v68, 0
  %v171 = vsel %vm109, %v69, 0
  %v174 = vsel %vm109, %v70, 0
  %v177 = vsel %vm109, %v71, 0
  %v180 = vsel %vm109, %v72, 0
  %v183 = vsel %vm109, %v73, 0
  %v186 = vsel %vm109, %v74, 0
  %v189 = vsel %vm109, %v75, 0
  %v192 = vsel %vm109, %v76, 0
  %v195 = vsel %vm109, %v77, 0
  %v198 = vsel %vm109, %v78, 0
  %v201 = vsel %vm109, %v79, 0
  %v204 = vsel %vm109, %v80, 0
  %v207 = vsel %vm109, %v81, 0
  %v210 = vsel %vm109, %v82, 0
  %v213 = vsel %vm109, %v83, 0
  %v216 = vsel %vm109, %v84, 0
  %v219 = vsel %vm109, %v85, 0
  %v222 = vsel %vm109, %v86, 0
  %v225 = vsel %vm109, %v87, 0
  %v228 = vsel %vm109, %v88, 0
  %v231 = vsel %vm109, %v89, 0
  %v234 = vsel %vm109, %v90, 0
  %v237 = vsel %vm109, %v91, 0
  %v240 = vsel %vm109, %v92, 0
  %v243 = vsel %vm109, %v93, 0
  %v246 = vsel %vm109, %v94, 0
  %v249 = vsel %vm109, %v95, 0
  %v252 = vsel %vm109, %v96, 0
  %vm254 = vcmask 1041408
  %v256 = vsel %vm254, %v101, 0
  %258 = vmatprep.subr.mxu0 0.0
  %259 = vmatpush1.msra.mxu0 %v256
  %260 = vmatprep.subr.mxu0 0.0
  %261 = vmatpush1.msra.mxu0 0.0
  %262 = vmatprep.subr.mxu0 0.0
  %263 = vmatpush1.msra.mxu0 0.0
  %264 = vmatprep.subr.mxu0 0.0
  %265 = vmatpush1.msra.mxu0 0.0
  %266 = vmatprep.subr.mxu0 0.0
  %267 = vmatpush1.msra.mxu0 0.0
  %268 = vmatprep.subr.mxu0 0.0
  %269 = vmatpush1.msra.mxu0 0.0
  %270 = vmatprep.subr.mxu0 0.0
  %271 = vmatpush1.msra.mxu0 0.0
  %272 = vmatprep.subr.mxu0 0.0
  %273 = vmatpush1.msra.mxu0 0.0
  %274 = vmatprep.subr.mxu0 0.0
  %275 = vmatpush1.msra.mxu0 0.0
  %276 = vmatprep.subr.mxu0 0.0
  %277 = vmatpush1.msra.mxu0 0.0
  %278 = vmatprep.subr.mxu0 0.0
  %279 = vmatpush1.msra.mxu0 0.0
  %280 = vmatprep.subr.mxu0 0.0
  %281 = vmatpush1.msra.mxu0 0.0
  %282 = vmatprep.subr.mxu0 0.0
  %283 = vmatpush1.msra.mxu0 0.0
  %284 = vmatprep.subr.mxu0 0.0
  %285 = vmatpush1.msra.mxu0 0.0
  %286 = vmatprep.subr.mxu0 0.0
  %287 = vmatpush1.msra.mxu0 0.0
  %288 = vmatprep.subr.mxu0 0.0
  %289 = vmatpush1.msra.mxu0 0.0
  %290 = vmatprep.subr.mxu0 0.0
  %291 = vmatpush1.msra.mxu0 0.0
  %292 = vmatprep.subr.mxu0 0.0
  %293 = vmatpush1.msra.mxu0 0.0
  %294 = vmatprep.subr.mxu0 0.0
  %295 = vmatpush1.msra.mxu0 0.0
  %296 = vmatprep.subr.mxu0 0.0
  %297 = vmatpush1.msra.mxu0 0.0
  %298 = vmatprep.subr.mxu0 0.0
  %299 = vmatpush1.msra.mxu0 0.0
  %300 = vmatprep.subr.mxu0 0.0
  %301 = vmatpush1.msra.mxu0 0.0
  %302 = vmatprep.subr.mxu0 0.0
  %303 = vmatpush1.msra.mxu0 0.0
  %304 = vmatprep.subr.mxu0 0.0
  %305 = vmatpush1.msra.mxu0 0.0
  %306 = vmatprep.subr.mxu0 0.0
  %307 = vmatpush1.msra.mxu0 0.0
  %308 = vmatprep.subr.mxu0 0.0
  %309 = vmatpush1.msra.mxu0 0.0
  %310 = vmatprep.subr.mxu0 0.0
  %311 = vmatpush1.msra.mxu0 0.0
  %312 = vmatprep.subr.mxu0 0.0
  %313 = vmatpush1.msra.mxu0 0.0
  %314 = vmatprep.subr.mxu0 0.0
  %315 = vmatpush1.msra.mxu0 0.0
  %316 = vmatprep.subr.mxu0 0.0
  %317 = vmatpush1.msra.mxu0 0.0
  %318 = vmatprep.subr.mxu0 0.0
  %319 = vmatpush1.msra.mxu0 0.0
  %320 = vmatprep.subr.mxu0 0.0
  %321 = vmatpush1.msra.mxu0 0.0
  %322 = vmatprep.mubr.f32.mxu0 0.0
  %323 = vmatmul.mubr.f32.gmra.mrb[0].mxu0 %v111
  %v324 = vpop.f32.mrb[0].mxu0
  %v325 = vadd.f32 %v107, %v324
  %v326 = vpop.f32.mrb[0].mxu0
  %327 = vmatprep.mubr.f32.mxu0 0.0
  %328 = vmatmul.mubr.f32.gmra.mrb[0].mxu0 %v114
  %v329 = vpop.f32.mrb[0].mxu0
  %v330 = vadd.f32 %v107, %v329
  %v331 = vpop.f32.mrb[0].mxu0
  %332 = vmatprep.mubr.f32.mxu0 0.0
  %333 = vmatmul.mubr.f32.gmra.mrb[0].mxu0 %v117
  %v334 = vpop.f32.mrb[0].mxu0
  %v335 = vadd.f32 %v107, %v334
  %v336 = vpop.f32.mrb[0].mxu0
  %337 = vmatprep.mubr.f32.mxu0 0.0
  %338 = vmatmul.mubr.f32.gmra.mrb[0].mxu0 %v120
  %v339 = vpop.f32.mrb[0].mxu0
  %v340 = vadd.f32 %v107, %v339
  %v341 = vpop.f32.mrb[0].mxu0
  %342 = vmatprep.mubr.f32.mxu0 0.0
  %343 = vmatmul.mubr.f32.gmra.mrb[0].mxu0 %v123
  %v344 = vpop.f32.mrb[0].mxu0
  %v345 = vadd.f32 %v107, %v344
  %v346 = vpop.f32.mrb[0].mxu0
  %347 = vmatprep.mubr.f32.mxu0 0.0
  %348 = vmatmul.mubr.f32.gmra.mrb[0].mxu0 %v126
  %v349 = vpop.f32.mrb[0].mxu0
  %v350 = vadd.f32 %v107, %v349
  %v351 = vpop.f32.mrb[0].mxu0
  %352 = vmatprep.mubr.f32.mxu0 0.0
  %353 = vmatmul.mubr.f32.gmra.mrb[0].mxu0 %v129
  %v354 = vpop.f32.mrb[0].mxu0
  %v355 = vadd.f32 %v107, %v354
  %v356 = vpop.f32.mrb[0].mxu0
  %357 = vmatprep.mubr.f32.mxu0 0.0
  %358 = vmatmul.mubr.f32.gmra.mrb[0].mxu0 %v132
  %v359 = vpop.f32.mrb[0].mxu0
  %v360 = vadd.f32 %v107, %v359
  %v361 = vpop.f32.mrb[0].mxu0
  %362 = vmatprep.mubr.f32.mxu0 0.0
  %363 = vmatmul.mubr.f32.gmra.mrb[0].mxu0 %v135
  %v364 = vpop.f32.mrb[0].mxu0
  %v365 = vadd.f32 %v107, %v364
  %v366 = vpop.f32.mrb[0].mxu0
  %367 = vmatprep.mubr.f32.mxu0 0.0
  %368 = vmatmul.mubr.f32.gmra.mrb[0].mxu0 %v138
  %v369 = vpop.f32.mrb[0].mxu0
  %v370 = vadd.f32 %v107, %v369
  %v371 = vpop.f32.mrb[0].mxu0
  %372 = vmatprep.mubr.f32.mxu0 0.0
  %373 = vmatmul.mubr.f32.gmra.mrb[0].mxu0 %v141
  %v374 = vpop.f32.mrb[0].mxu0
  %v375 = vadd.f32 %v107, %v374
  %v376 = vpop.f32.mrb[0].mxu0
  %377 = vmatprep.mubr.f32.mxu0 0.0
  %378 = vmatmul.mubr.f32.gmra.mrb[0].mxu0 %v144
  %v379 = vpop.f32.mrb[0].mxu0
  %v380 = vadd.f32 %v107, %v379
  %v381 = vpop.f32.mrb[0].mxu0
  %382 = vmatprep.mubr.f32.mxu0 0.0
  %383 = vmatmul.mubr.f32.gmra.mrb[0].mxu0 %v147
  %v384 = vpop.f32.mrb[0].mxu0
  %v385 = vadd.f32 %v107, %v384
  %v386 = vpop.f32.mrb[0].mxu0
  %387 = vmatprep.mubr.f32.mxu0 0.0
  %388 = vmatmul.mubr.f32.gmra.mrb[0].mxu0 %v150
  %v389 = vpop.f32.mrb[0].mxu0
  %v390 = vadd.f32 %v107, %v389
  %v391 = vpop.f32.mrb[0].mxu0
  %392 = vmatprep.mubr.f32.mxu0 0.0
  %393 = vmatmul.mubr.f32.gmra.mrb[0].mxu0 %v153
  %v394 = vpop.f32.mrb[0].mxu0
  %v395 = vadd.f32 %v107, %v394
  %v396 = vpop.f32.mrb[0].mxu0
  %397 = vmatprep.mubr.f32.mxu0 0.0
  %398 = vmatmul.mubr.f32.gmra.mrb[0].mxu0 %v156
  %v399 = vpop.f32.mrb[0].mxu0
  %v400 = vadd.f32 %v107, %v399
  %v401 = vpop.f32.mrb[0].mxu0
  %402 = vmatprep.mubr.f32.mxu0 0.0
  %403 = vmatmul.mubr.f32.gmra.mrb[0].mxu0 %v159
  %v404 = vpop.f32.mrb[0].mxu0
  %v405 = vadd.f32 %v107, %v404
  %v406 = vpop.f32.mrb[0].mxu0
  %407 = vmatprep.mubr.f32.mxu0 0.0
  %408 = vmatmul.mubr.f32.gmra.mrb[0].mxu0 %v162
  %v409 = vpop.f32.mrb[0].mxu0
  %v410 = vadd.f32 %v107, %v409
  %v411 = vpop.f32.mrb[0].mxu0
  %412 = vmatprep.mubr.f32.mxu0 0.0
  %413 = vmatmul.mubr.f32.gmra.mrb[0].mxu0 %v165
  %v414 = vpop.f32.mrb[0].mxu0
  %v415 = vadd.f32 %v107, %v414
  %v416 = vpop.f32.mrb[0].mxu0
  %417 = vmatprep.mubr.f32.mxu0 0.0
  %418 = vmatmul.mubr.f32.gmra.mrb[0].mxu0 %v168
  %v419 = vpop.f32.mrb[0].mxu0
  %v420 = vadd.f32 %v107, %v419
  %v421 = vpop.f32.mrb[0].mxu0
  %422 = vmatprep.mubr.f32.mxu0 0.0
  %423 = vmatmul.mubr.f32.gmra.mrb[0].mxu0 %v171
  %v424 = vpop.f32.mrb[0].mxu0
  %v425 = vadd.f32 %v107, %v424
  %v426 = vpop.f32.mrb[0].mxu0
  %427 = vmatprep.mubr.f32.mxu0 0.0
  %428 = vmatmul.mubr.f32.gmra.mrb[0].mxu0 %v174
  %v429 = vpop.f32.mrb[0].mxu0
  %v430 = vadd.f32 %v107, %v429
  %v431 = vpop.f32.mrb[0].mxu0
  %432 = vmatprep.mubr.f32.mxu0 0.0
  %433 = vmatmul.mubr.f32.gmra.mrb[0].mxu0 %v177
  %v434 = vpop.f32.mrb[0].mxu0
  %v435 = vadd.f32 %v107, %v434
  %v436 = vpop.f32.mrb[0].mxu0
  %437 = vmatprep.mubr.f32.mxu0 0.0
  %438 = vmatmul.mubr.f32.gmra.mrb[0].mxu0 %v180
  %v439 = vpop.f32.mrb[0].mxu0
  %v440 = vadd.f32 %v107, %v439
  %v441 = vpop.f32.mrb[0].mxu0
  %442 = vmatprep.mubr.f32.mxu0 0.0
  %443 = vmatmul.mubr.f32.gmra.mrb[0].mxu0 %v183
  %v444 = vpop.f32.mrb[0].mxu0
  %v445 = vadd.f32 %v107, %v444
  %v446 = vpop.f32.mrb[0].mxu0
  %447 = vmatprep.mubr.f32.mxu0 0.0
  %448 = vmatmul.mubr.f32.gmra.mrb[0].mxu0 %v186
  %v449 = vpop.f32.mrb[0].mxu0
  %v450 = vadd.f32 %v107, %v449
  %v451 = vpop.f32.mrb[0].mxu0
  %452 = vmatprep.mubr.f32.mxu0 0.0
  %453 = vmatmul.mubr.f32.gmra.mrb[0].mxu0 %v189
  %v454 = vpop.f32.mrb[0].mxu0
  %v455 = vadd.f32 %v107, %v454
  %v456 = vpop.f32.mrb[0].mxu0
  %457 = vmatprep.mubr.f32.mxu0 0.0
  %458 = vmatmul.mubr.f32.gmra.mrb[0].mxu0 %v192
  %v459 = vpop.f32.mrb[0].mxu0
  %v460 = vadd.f32 %v107, %v459
  %v461 = vpop.f32.mrb[0].mxu0
  %462 = vmatprep.mubr.f32.mxu0 0.0
  %463 = vmatmul.mubr.f32.gmra.mrb[0].mxu0 %v195
  %v464 = vpop.f32.mrb[0].mxu0
  %v465 = vadd.f32 %v107, %v464
  %v466 = vpop.f32.mrb[0].mxu0
  %467 = vmatprep.mubr.f32.mxu0 0.0
  %468 = vmatmul.mubr.f32.gmra.mrb[0].mxu0 %v198
  %v469 = vpop.f32.mrb[0].mxu0
  %v470 = vadd.f32 %v107, %v469
  %v471 = vpop.f32.mrb[0].mxu0
  %472 = vmatprep.mubr.f32.mxu0 0.0
  %473 = vmatmul.mubr.f32.gmra.mrb[0].mxu0 %v201
  %v474 = vpop.f32.mrb[0].mxu0
  %v475 = vadd.f32 %v107, %v474
  %v476 = vpop.f32.mrb[0].mxu0
  %477 = vmatprep.mubr.f32.mxu0 0.0
  %478 = vmatmul.mubr.f32.gmra.mrb[0].mxu0 %v204
  %v479 = vpop.f32.mrb[0].mxu0
  %v480 = vadd.f32 %v107, %v479
  %v481 = vpop.f32.mrb[0].mxu0
  %482 = vmatprep.mubr.f32.mxu0 0.0
  %483 = vmatmul.mubr.f32.gmra.mrb[0].mxu0 %v207
  %v484 = vpop.f32.mrb[0].mxu0
  %v485 = vadd.f32 %v107, %v484
  %v486 = vpop.f32.mrb[0].mxu0
  %487 = vmatprep.mubr.f32.mxu0 0.0
  %488 = vmatmul.mubr.f32.gmra.mrb[0].mxu0 %v210
  %v489 = vpop.f32.mrb[0].mxu0
  %v490 = vadd.f32 %v107, %v489
  %v491 = vpop.f32.mrb[0].mxu0
  %492 = vmatprep.mubr.f32.mxu0 0.0
  %493 = vmatmul.mubr.f32.gmra.mrb[0].mxu0 %v213
  %v494 = vpop.f32.mrb[0].mxu0
  %v495 = vadd.f32 %v107, %v494
  %v496 = vpop.f32.mrb[0].mxu0
  %497 = vmatprep.mubr.f32.mxu0 0.0
  %498 = vmatmul.mubr.f32.gmra.mrb[0].mxu0 %v216
  %v499 = vpop.f32.mrb[0].mxu0
  %v500 = vadd.f32 %v107, %v499
  %v501 = vpop.f32.mrb[0].mxu0
  %502 = vmatprep.mubr.f32.mxu0 0.0
  %503 = vmatmul.mubr.f32.gmra.mrb[0].mxu0 %v219
  %v504 = vpop.f32.mrb[0].mxu0
  %v505 = vadd.f32 %v107, %v504
  %v506 = vpop.f32.mrb[0].mxu0
  %507 = vmatprep.mubr.f32.mxu0 0.0
  %508 = vmatmul.mubr.f32.gmra.mrb[0].mxu0 %v222
  %v509 = vpop.f32.mrb[0].mxu0
  %v510 = vadd.f32 %v107, %v509
  %v511 = vpop.f32.mrb[0].mxu0
  %512 = vmatprep.mubr.f32.mxu0 0.0
  %513 = vmatmul.mubr.f32.gmra.mrb[0].mxu0 %v225
  %v514 = vpop.f32.mrb[0].mxu0
  %v515 = vadd.f32 %v107, %v514
  %v516 = vpop.f32.mrb[0].mxu0
  %517 = vmatprep.mubr.f32.mxu0 0.0
  %518 = vmatmul.mubr.f32.gmra.mrb[0].mxu0 %v228
  %v519 = vpop.f32.mrb[0].mxu0
  %v520 = vadd.f32 %v107, %v519
  %v521 = vpop.f32.mrb[0].mxu0
  %522 = vmatprep.mubr.f32.mxu0 0.0
  %523 = vmatmul.mubr.f32.gmra.mrb[0].mxu0 %v231
  %v524 = vpop.f32.mrb[0].mxu0
  %v525 = vadd.f32 %v107, %v524
  %v526 = vpop.f32.mrb[0].mxu0
  %527 = vmatprep.mubr.f32.mxu0 0.0
  %528 = vmatmul.mubr.f32.gmra.mrb[0].mxu0 %v234
  %v529 = vpop.f32.mrb[0].mxu0
  %v530 = vadd.f32 %v107, %v529
  %v531 = vpop.f32.mrb[0].mxu0
  %532 = vmatprep.mubr.f32.mxu0 0.0
  %533 = vmatmul.mubr.f32.gmra.mrb[0].mxu0 %v237
  %v534 = vpop.f32.mrb[0].mxu0
  %v535 = vadd.f32 %v107, %v534
  %v536 = vpop.f32.mrb[0].mxu0
  %537 = vmatprep.mubr.f32.mxu0 0.0
  %538 = vmatmul.mubr.f32.gmra.mrb[0].mxu0 %v240
  %v539 = vpop.f32.mrb[0].mxu0
  %v540 = vadd.f32 %v107, %v539
  %v541 = vpop.f32.mrb[0].mxu0
  %542 = vmatprep.mubr.f32.mxu0 0.0
  %543 = vmatmul.mubr.f32.gmra.mrb[0].mxu0 %v243
  %v544 = vpop.f32.mrb[0].mxu0
  %v545 = vadd.f32 %v107, %v544
  %v546 = vpop.f32.mrb[0].mxu0
  %547 = vmatprep.mubr.f32.mxu0 0.0
  %548 = vmatmul.mubr.f32.gmra.mrb[0].mxu0 %v246
  %v549 = vpop.f32.mrb[0].mxu0
  %v550 = vadd.f32 %v107, %v549
  %v551 = vpop.f32.mrb[0].mxu0
  %552 = vmatprep.mubr.f32.mxu0 0.0
  %553 = vmatmul.mubr.f32.gmra.mrb[0].mxu0 %v249
  %v554 = vpop.f32.mrb[0].mxu0
  %v555 = vadd.f32 %v107, %v554
  %v556 = vpop.f32.mrb[0].mxu0
  %557 = vmatprep.mubr.f32.mxu0 0.0
  %558 = vmatmul.mubr.f32.gmra.mrb[0].mxu0 %v252
  %v559 = vpop.f32.mrb[0].mxu0
  %v560 = vadd.f32 %v107, %v559
  %v561 = vpop.f32.mrb[0].mxu0
  %562 = vdwg.mxu0
  %563 = vst [vmem:[#allocation2] sm:$0xff] %v325
  %564 = vst [vmem:[#allocation2 + $0x8] sm:$0xff] %v330
  %565 = vst [vmem:[#allocation2 + $0x10] sm:$0xff] %v335
  %566 = vst [vmem:[#allocation2 + $0x18] sm:$0xff] %v340
  %567 = vst [vmem:[#allocation2 + $0x20] sm:$0xff] %v345
  %568 = vst [vmem:[#allocation2 + $0x28] sm:$0xff] %v350
  %569 = vst [vmem:[#allocation2 + $0x30] sm:$0xff] %v355
  %570 = vst [vmem:[#allocation2 + $0x38] sm:$0xff] %v360
  %571 = vst [vmem:[#allocation2 + $0x40] sm:$0xff] %v365
  %572 = vst [vmem:[#allocation2 + $0x48] sm:$0xff] %v370
  %573 = vst [vmem:[#allocation2 + $0x50] sm:$0xff] %v375
  %574 = vst [vmem:[#allocation2 + $0x58] sm:$0xff] %v380
  %575 = vst [vmem:[#allocation2 + $0x60] sm:$0xff] %v385
  %576 = vst [vmem:[#allocation2 + $0x68] sm:$0xff] %v390
  %577 = vst [vmem:[#allocation2 + $0x70] sm:$0xff] %v395
  %578 = vst [vmem:[#allocation2 + $0x78] sm:$0xff] %v400
  %579 = vst [vmem:[#allocation2 + $0x80] sm:$0xff] %v405
  %580 = vst [vmem:[#allocation2 + $0x88] sm:$0xff] %v410
  %581 = vst [vmem:[#allocation2 + $0x90] sm:$0xff] %v415
  %582 = vst [vmem:[#allocation2 + $0x98] sm:$0xff] %v420
  %583 = vst [vmem:[#allocation2 + $0xa0] sm:$0xff] %v425
  %584 = vst [vmem:[#allocation2 + $0xa8] sm:$0xff] %v430
  %585 = vst [vmem:[#allocation2 + $0xb0] sm:$0xff] %v435
  %586 = vst [vmem:[#allocation2 + $0xb8] sm:$0xff] %v440
  %587 = vst [vmem:[#allocation2 + $0xc0] sm:$0xff] %v445
  %588 = vst [vmem:[#allocation2 + $0xc8] sm:$0xff] %v450
  %589 = vst [vmem:[#allocation2 + $0xd0] sm:$0xff] %v455
  %590 = vst [vmem:[#allocation2 + $0xd8] sm:$0xff] %v460
  %591 = vst [vmem:[#allocation2 + $0xe0] sm:$0xff] %v465
  %592 = vst [vmem:[#allocation2 + $0xe8] sm:$0xff] %v470
  %593 = vst [vmem:[#allocation2 + $0xf0] sm:$0xff] %v475
  %594 = vst [vmem:[#allocation2 + $0xf8] sm:$0xff] %v480
  %595 = vst [vmem:[#allocation2 + $0x100] sm:$0xff] %v485
  %596 = vst [vmem:[#allocation2 + $0x108] sm:$0xff] %v490
  %597 = vst [vmem:[#allocation2 + $0x110] sm:$0xff] %v495
  %598 = vst [vmem:[#allocation2 + $0x118] sm:$0xff] %v500
  %599 = vst [vmem:[#allocation2 + $0x120] sm:$0xff] %v505
  %600 = vst [vmem:[#allocation2 + $0x128] sm:$0xff] %v510
  %601 = vst [vmem:[#allocation2 + $0x130] sm:$0xff] %v515
  %602 = vst [vmem:[#allocation2 + $0x138] sm:$0xff] %v520
  %603 = vst [vmem:[#allocation2 + $0x140] sm:$0xff] %v525
  %604 = vst [vmem:[#allocation2 + $0x148] sm:$0xff] %v530
  %605 = vst [vmem:[#allocation2 + $0x150] sm:$0xff] %v535
  %606 = vst [vmem:[#allocation2 + $0x158] sm:$0xff] %v540
  %607 = vst [vmem:[#allocation2 + $0x160] sm:$0xff] %v545
  %608 = vst [vmem:[#allocation2 + $0x168] sm:$0xff] %v550
  %609 = vst [vmem:[#allocation2 + $0x170] sm:$0xff] %v555
  %610 = vst [vmem:[#allocation2 + $0x178] sm:$0xff] %v560
  %v611 = vld [vmem:[#allocation2] sm:$0xff]
  %v612 = vld [vmem:[#allocation2 + $0x8] sm:$0xff]
  %v613 = vld [vmem:[#allocation2 + $0x10] sm:$0xff]
  %v614 = vld [vmem:[#allocation2 + $0x18] sm:$0xff]
  %v615 = vld [vmem:[#allocation2 + $0x20] sm:$0xff]
  %v616 = vld [vmem:[#allocation2 + $0x28] sm:$0xff]
  %vm617 = vcmask 261120
  %v619 = vsel %vm617, 0.0, 0
  %621 = vmatprep.subr.mxu0 0.0
  %622 = vmatpush1.msra.mxu0 %v97
  %623 = vmatprep.subr.mxu0 0.0
  %624 = vmatpush1.msra.mxu0 %v98
  %625 = vmatprep.subr.mxu0 0.0
  %626 = vmatpush1.msra.mxu0 %v99
  %627 = vmatprep.subr.mxu0 0.0
  %628 = vmatpush1.msra.mxu0 %v100
  %629 = vmatprep.subr.mxu0 0.0
  %630 = vmatpush1.msra.mxu0 0.0
  %631 = vmatprep.subr.mxu0 0.0
  %632 = vmatpush1.msra.mxu0 0.0
  %633 = vmatprep.subr.mxu0 0.0
  %634 = vmatpush1.msra.mxu0 0.0
  %635 = vmatprep.subr.mxu0 0.0
  %636 = vmatpush1.msra.mxu0 0.0
  %637 = vmatprep.subr.mxu0 0.0
  %638 = vmatpush1.msra.mxu0 0.0
  %639 = vmatprep.subr.mxu0 0.0
  %640 = vmatpush1.msra.mxu0 0.0
  %641 = vmatprep.subr.mxu0 0.0
  %642 = vmatpush1.msra.mxu0 0.0
  %643 = vmatprep.subr.mxu0 0.0
  %644 = vmatpush1.msra.mxu0 0.0
  %645 = vmatprep.subr.mxu0 0.0
  %646 = vmatpush1.msra.mxu0 0.0
  %647 = vmatprep.subr.mxu0 0.0
  %648 = vmatpush1.msra.mxu0 0.0
  %649 = vmatprep.subr.mxu0 0.0
  %650 = vmatpush1.msra.mxu0 0.0
  %651 = vmatprep.subr.mxu0 0.0
  %652 = vmatpush1.msra.mxu0 0.0
  %653 = vmatprep.subr.mxu0 0.0
  %654 = vmatpush1.msra.mxu0 0.0
  %655 = vmatprep.subr.mxu0 0.0
  %656 = vmatpush1.msra.mxu0 0.0
  %657 = vmatprep.subr.mxu0 0.0
  %658 = vmatpush1.msra.mxu0 0.0
  %659 = vmatprep.subr.mxu0 0.0
  %660 = vmatpush1.msra.mxu0 0.0
  %661 = vmatprep.subr.mxu0 0.0
  %662 = vmatpush1.msra.mxu0 0.0
  %663 = vmatprep.subr.mxu0 0.0
  %664 = vmatpush1.msra.mxu0 0.0
  %665 = vmatprep.subr.mxu0 0.0
  %666 = vmatpush1.msra.mxu0 0.0
  %667 = vmatprep.subr.mxu0 0.0
  %668 = vmatpush1.msra.mxu0 0.0
  %669 = vmatprep.subr.mxu0 0.0
  %670 = vmatpush1.msra.mxu0 0.0
  %671 = vmatprep.subr.mxu0 0.0
  %672 = vmatpush1.msra.mxu0 0.0
  %673 = vmatprep.subr.mxu0 0.0
  %674 = vmatpush1.msra.mxu0 0.0
  %675 = vmatprep.subr.mxu0 0.0
  %676 = vmatpush1.msra.mxu0 0.0
  %677 = vmatprep.subr.mxu0 0.0
  %678 = vmatpush1.msra.mxu0 0.0
  %679 = vmatprep.subr.mxu0 0.0
  %680 = vmatpush1.msra.mxu0 0.0
  %681 = vmatprep.subr.mxu0 0.0
  %682 = vmatpush1.msra.mxu0 0.0
  %683 = vmatprep.subr.mxu0 0.0
  %684 = vmatpush1.msra.mxu0 0.0
  %685 = vmatprep.mubr.f32.mxu0 0.0
  %686 = vmatmul.mubr.f32.gmra.mrb[0].mxu0 %v619
  %v687 = vpop.f32.mrb[0].mxu0
  %v688 = vadd.f32 0.0, %v687
  %v689 = vpop.f32.mrb[0].mxu0
  %690 = vmatprep.mubr.f32.mxu0 0.0
  %691 = vmatmul.mubr.f32.gmra.mrb[0].mxu0 %v619
  %v692 = vpop.f32.mrb[0].mxu0
  %v693 = vadd.f32 0.0, %v692
  %v694 = vpop.f32.mrb[0].mxu0
  %695 = vmatprep.mubr.f32.mxu0 0.0
  %696 = vmatmul.mubr.f32.gmra.mrb[0].mxu0 %v619
  %v697 = vpop.f32.mrb[0].mxu0
  %v698 = vadd.f32 0.0, %v697
  %v699 = vpop.f32.mrb[0].mxu0
  %700 = vmatprep.mubr.f32.mxu0 0.0
  %701 = vmatmul.mubr.f32.gmra.mrb[0].mxu0 %v619
  %v702 = vpop.f32.mrb[0].mxu0
  %v703 = vadd.f32 0.0, %v702
  %v704 = vpop.f32.mrb[0].mxu0
  %705 = vmatprep.mubr.f32.mxu0 0.0
  %706 = vmatmul.mubr.f32.gmra.mrb[0].mxu0 %v619
  %v707 = vpop.f32.mrb[0].mxu0
  %v708 = vadd.f32 0.0, %v707
  %v709 = vpop.f32.mrb[0].mxu0
  %710 = vmatprep.mubr.f32.mxu0 0.0
  %711 = vmatmul.mubr.f32.gmra.mrb[0].mxu0 %v619
  %v712 = vpop.f32.mrb[0].mxu0
  %v713 = vadd.f32 0.0, %v712
  %v714 = vpop.f32.mrb[0].mxu0
  %715 = vdwg.mxu0
  %v716 = vadd.f32 %v611, %v688
  %v717 = vadd.f32 %v612, %v693
  %v718 = vadd.f32 %v613, %v698
  %v719 = vadd.f32 %v614, %v703
  %v720 = vadd.f32 %v615, %v708
  %v721 = vadd.f32 %v616, %v713
  %v722 = vxor.u32 %v716, 2147483648
  %v723 = vxor.u32 %v717, 2147483648
  %v724 = vxor.u32 %v718, 2147483648
  %v725 = vxor.u32 %v719, 2147483648
  %v726 = vxor.u32 %v720, 2147483648
  %v727 = vxor.u32 %v721, 2147483648
  %v728 = vmul.f32 %v722, 1.442695
  %v729 = vpow.pop %v728
  %v730 = vmul.f32 %v723, 1.442695
  %v731 = vpow.pop %v730
  %v732 = vmul.f32 %v724, 1.442695
  %v733 = vpow.pop %v732
  %v734 = vmul.f32 %v725, 1.442695
  %v735 = vpow.pop %v734
  %v736 = vmul.f32 %v726, 1.442695
  %v737 = vpow.pop %v736
  %v738 = vmul.f32 %v727, 1.442695
  %v739 = vpow.pop %v738
  %v740 = vadd.f32 %v729, 1.0
  %v741 = vadd.f32 %v731, 1.0
  %v742 = vadd.f32 %v733, 1.0
  %v743 = vadd.f32 %v735, 1.0
  %v744 = vadd.f32 %v737, 1.0
  %v745 = vadd.f32 %v739, 1.0
  %v746 = vrcp.pop %v740
  %v747 = vmul.f32 1.0, %v746
  %v748 = vrcp.pop %v741
  %v749 = vmul.f32 1.0, %v748
  %v750 = vrcp.pop %v742
  %v751 = vmul.f32 1.0, %v750
  %v752 = vrcp.pop %v743
  %v753 = vmul.f32 1.0, %v752
  %v754 = vrcp.pop %v744
  %v755 = vmul.f32 1.0, %v754
  %v756 = vrcp.pop %v745
  %v757 = vmul.f32 1.0, %v756
  %v758 = vtanh.pop %v716
  %v759 = vtanh.pop %v717
  %v760 = vtanh.pop %v718
  %v761 = vtanh.pop %v719
  %v762 = vtanh.pop %v720
  %v763 = vtanh.pop %v721
  %v764 = vmul.f32 %v747, 0.0
  %v765 = vmul.f32 %v749, 0.0
  %v766 = vmul.f32 %v751, 0.0
  %v767 = vmul.f32 %v753, 0.0
  %v768 = vmul.f32 %v755, 0.0
  %v769 = vmul.f32 %v757, 0.0
  %776 = vrot.lane.b32.xlu0 %v758, 64
  %v777 = vpop.permute.xlu0 %776
  %778 = vrot.lane.b32.xlu0 %v759, 64
  %v779 = vpop.permute.xlu0 %778
  %780 = vrot.lane.b32.xlu0 %v760, 64
  %v781 = vpop.permute.xlu0 %780
  %782 = vrot.lane.b32.xlu0 %v761, 64
  %v783 = vpop.permute.xlu0 %782
  %784 = vrot.lane.b32.xlu0 %v762, 64
  %v785 = vpop.permute.xlu0 %784
  %786 = vrot.lane.b32.xlu0 %v763, 64
  %v787 = vpop.permute.xlu0 %786
  %v794 = vmul.f32 %v747, %v777
  %v795 = vmul.f32 %v749, %v779
  %v796 = vmul.f32 %v751, %v781
  %v797 = vmul.f32 %v753, %v783
  %v798 = vmul.f32 %v755, %v785
  %v799 = vmul.f32 %v757, %v787
  %806 = vrot.lane.b32.xlu0 %v794, 32
  %v807 = vpop.permute.xlu0 %806
  %808 = vrot.lane.b32.xlu0 %v795, 32
  %v809 = vpop.permute.xlu0 %808
  %810 = vrot.lane.b32.xlu0 %v796, 32
  %v811 = vpop.permute.xlu0 %810
  %812 = vrot.lane.b32.xlu0 %v797, 32
  %v813 = vpop.permute.xlu0 %812
  %814 = vrot.lane.b32.xlu0 %v798, 32
  %v815 = vpop.permute.xlu0 %814
  %816 = vrot.lane.b32.xlu0 %v799, 32
  %v817 = vpop.permute.xlu0 %816
  %v824 = vadd.f32 %v764, %v807
  %v825 = vadd.f32 %v765, %v809
  %v826 = vadd.f32 %v766, %v811
  %v827 = vadd.f32 %v767, %v813
  %v828 = vadd.f32 %v768, %v815
  %v829 = vadd.f32 %v769, %v817
  %v830 = vtanh.pop %v824
  %v831 = vtanh.pop %v825
  %v832 = vtanh.pop %v826
  %v833 = vtanh.pop %v827
  %v834 = vtanh.pop %v828
  %v835 = vtanh.pop %v829
  %842 = vrot.lane.b32.xlu0 %v830, 64
  %v843 = vpop.permute.xlu0 %842
  %844 = vrot.lane.b32.xlu0 %v831, 64
  %v845 = vpop.permute.xlu0 %844
  %846 = vrot.lane.b32.xlu0 %v832, 64
  %v847 = vpop.permute.xlu0 %846
  %848 = vrot.lane.b32.xlu0 %v833, 64
  %v849 = vpop.permute.xlu0 %848
  %850 = vrot.lane.b32.xlu0 %v834, 64
  %v851 = vpop.permute.xlu0 %850
  %852 = vrot.lane.b32.xlu0 %v835, 64
  %v853 = vpop.permute.xlu0 %852
  %v860 = vmul.f32 %v747, %v843
  %v861 = vmul.f32 %v749, %v845
  %v862 = vmul.f32 %v751, %v847
  %v863 = vmul.f32 %v753, %v849
  %v864 = vmul.f32 %v755, %v851
  %v865 = vmul.f32 %v757, %v853
  %v866 = vld [vmem:[#allocation2 + $0x30] sm:$0xff]
  %v867 = vld [vmem:[#allocation2 + $0x38] sm:$0xff]
  %v868 = vld [vmem:[#allocation2 + $0x40] sm:$0xff]
  %v869 = vld [vmem:[#allocation2 + $0x48] sm:$0xff]
  %v870 = vld [vmem:[#allocation2 + $0x50] sm:$0xff]
  %v871 = vld [vmem:[#allocation2 + $0x58] sm:$0xff]
  %878 = vrot.lane.b32.xlu0 %v860, 32
  %v879 = vpop.permute.xlu0 %878
  %880 = vrot.lane.b32.xlu0 %v861, 32
  %v881 = vpop.permute.xlu0 %880
  %882 = vrot.lane.b32.xlu0 %v862, 32
  %v883 = vpop.permute.xlu0 %882
  %884 = vrot.lane.b32.xlu0 %v863, 32
  %v885 = vpop.permute.xlu0 %884
  %886 = vrot.lane.b32.xlu0 %v864, 32
  %v887 = vpop.permute.xlu0 %886
  %888 = vrot.lane.b32.xlu0 %v865, 32
  %v889 = vpop.permute.xlu0 %888
  %v890 = vsel %vm617, %v879, 0
  %v892 = vsel %vm617, %v881, 0
  %v894 = vsel %vm617, %v883, 0
  %v896 = vsel %vm617, %v885, 0
  %v898 = vsel %vm617, %v887, 0
  %v900 = vsel %vm617, %v889, 0
  %902 = vmatprep.subr.mxu0 0.0
  %903 = vmatpush1.msra.mxu0 %v97
  %904 = vmatprep.subr.mxu0 0.0
  %905 = vmatpush1.msra.mxu0 %v98
  %906 = vmatprep.subr.mxu0 0.0
  %907 = vmatpush1.msra.mxu0 %v99
  %908 = vmatprep.subr.mxu0 0.0
  %909 = vmatpush1.msra.mxu0 %v100
  %910 = vmatprep.subr.mxu0 0.0
  %911 = vmatpush1.msra.mxu0 0.0
  %912 = vmatprep.subr.mxu0 0.0
  %913 = vmatpush1.msra.mxu0 0.0
  %914 = vmatprep.subr.mxu0 0.0
  %915 = vmatpush1.msra.mxu0 0.0
  %916 = vmatprep.subr.mxu0 0.0
  %917 = vmatpush1.msra.mxu0 0.0
  %918 = vmatprep.subr.mxu0 0.0
  %919 = vmatpush1.msra.mxu0 0.0
  %920 = vmatprep.subr.mxu0 0.0
  %921 = vmatpush1.msra.mxu0 0.0
  %922 = vmatprep.subr.mxu0 0.0
  %923 = vmatpush1.msra.mxu0 0.0
  %924 = vmatprep.subr.mxu0 0.0
  %925 = vmatpush1.msra.mxu0 0.0
  %926 = vmatprep.subr.mxu0 0.0
  %927 = vmatpush1.msra.mxu0 0.0
  %928 = vmatprep.subr.mxu0 0.0
  %929 = vmatpush1.msra.mxu0 0.0
  %930 = vmatprep.subr.mxu0 0.0
  %931 = vmatpush1.msra.mxu0 0.0
  %932 = vmatprep.subr.mxu0 0.0
  %933 = vmatpush1.msra.mxu0 0.0
  %934 = vmatprep.subr.mxu0 0.0
  %935 = vmatpush1.msra.mxu0 0.0
  %936 = vmatprep.subr.mxu0 0.0
  %937 = vmatpush1.msra.mxu0 0.0
  %938 = vmatprep.subr.mxu0 0.0
  %939 = vmatpush1.msra.mxu0 0.0
  %940 = vmatprep.subr.mxu0 0.0
  %941 = vmatpush1.msra.mxu0 0.0
  %942 = vmatprep.subr.mxu0 0.0
  %943 = vmatpush1.msra.mxu0 0.0
  %944 = vmatprep.subr.mxu0 0.0
  %945 = vmatpush1.msra.mxu0 0.0
  %946 = vmatprep.subr.mxu0 0.0
  %947 = vmatpush1.msra.mxu0 0.0
  %948 = vmatprep.subr.mxu0 0.0
  %949 = vmatpush1.msra.mxu0 0.0
  %950 = vmatprep.subr.mxu0 0.0
  %951 = vmatpush1.msra.mxu0 0.0
  %952 = vmatprep.subr.mxu0 0.0
  %953 = vmatpush1.msra.mxu0 0.0
  %954 = vmatprep.subr.mxu0 0.0
  %955 = vmatpush1.msra.mxu0 0.0
  %956 = vmatprep.subr.mxu0 0.0
  %957 = vmatpush1.msra.mxu0 0.0
  %958 = vmatprep.subr.mxu0 0.0
  %959 = vmatpush1.msra.mxu0 0.0
  %960 = vmatprep.subr.mxu0 0.0
  %961 = vmatpush1.msra.mxu0 0.0
  %962 = vmatprep.subr.mxu0 0.0
  %963 = vmatpush1.msra.mxu0 0.0
  %964 = vmatprep.subr.mxu0 0.0
  %965 = vmatpush1.msra.mxu0 0.0
  %966 = vmatprep.mubr.f32.mxu0 0.0
  %967 = vmatmul.mubr.f32.gmra.mrb[0].mxu0 %v890
  %v968 = vpop.f32.mrb[0].mxu0
  %v969 = vadd.f32 0.0, %v968
  %v970 = vpop.f32.mrb[0].mxu0
  %971 = vmatprep.mubr.f32.mxu0 0.0
  %972 = vmatmul.mubr.f32.gmra.mrb[0].mxu0 %v892
  %v973 = vpop.f32.mrb[0].mxu0
  %v974 = vadd.f32 0.0, %v973
  %v975 = vpop.f32.mrb[0].mxu0
  %976 = vmatprep.mubr.f32.mxu0 0.0
  %977 = vmatmul.mubr.f32.gmra.mrb[0].mxu0 %v894
  %v978 = vpop.f32.mrb[0].mxu0
  %v979 = vadd.f32 0.0, %v978
  %v980 = vpop.f32.mrb[0].mxu0
  %981 = vmatprep.mubr.f32.mxu0 0.0
  %982 = vmatmul.mubr.f32.gmra.mrb[0].mxu0 %v896
  %v983 = vpop.f32.mrb[0].mxu0
  %v984 = vadd.f32 0.0, %v983
  %v985 = vpop.f32.mrb[0].mxu0
  %986 = vmatprep.mubr.f32.mxu0 0.0
  %987 = vmatmul.mubr.f32.gmra.mrb[0].mxu0 %v898
  %v988 = vpop.f32.mrb[0].mxu0
  %v989 = vadd.f32 0.0, %v988
  %v990 = vpop.f32.mrb[0].mxu0
  %991 = vmatprep.mubr.f32.mxu0 0.0
  %992 = vmatmul.mubr.f32.gmra.mrb[0].mxu0 %v900
  %v993 = vpop.f32.mrb[0].mxu0
  %v994 = vadd.f32 0.0, %v993
  %v995 = vpop.f32.mrb[0].mxu0
  %996 = vdwg.mxu0
  %v997 = vadd.f32 %v866, %v969
  %v998 = vadd.f32 %v867, %v974
  %v999 = vadd.f32 %v868, %v979
  %v1000 = vadd.f32 %v869, %v984
  %v1001 = vadd.f32 %v870, %v989
  %v1002 = vadd.f32 %v871, %v994
  %v1003 = vxor.u32 %v997, 2147483648
  %v1004 = vxor.u32 %v998, 2147483648
  %v1005 = vxor.u32 %v999, 2147483648
  %v1006 = vxor.u32 %v1000, 2147483648
  %v1007 = vxor.u32 %v1001, 2147483648
  %v1008 = vxor.u32 %v1002, 2147483648
  %v1009 = vmul.f32 %v1003, 1.442695
  %v1010 = vpow.pop %v1009
  %v1011 = vmul.f32 %v1004, 1.442695
  %v1012 = vpow.pop %v1011
  %v1013 = vmul.f32 %v1005, 1.442695
  %v1014 = vpow.pop %v1013
  %v1015 = vmul.f32 %v1006, 1.442695
  %v1016 = vpow.pop %v1015
  %v1017 = vmul.f32 %v1007, 1.442695
  %v1018 = vpow.pop %v1017
  %v1019 = vmul.f32 %v1008, 1.442695
  %v1020 = vpow.pop %v1019
  %v1021 = vadd.f32 %v1010, 1.0
  %v1022 = vadd.f32 %v1012, 1.0
  %v1023 = vadd.f32 %v1014, 1.0
  %v1024 = vadd.f32 %v1016, 1.0
  %v1025 = vadd.f32 %v1018, 1.0
  %v1026 = vadd.f32 %v1020, 1.0
  %v1027 = vrcp.pop %v1021
  %v1028 = vmul.f32 1.0, %v1027
  %v1029 = vrcp.pop %v1022
  %v1030 = vmul.f32 1.0, %v1029
  %v1031 = vrcp.pop %v1023
  %v1032 = vmul.f32 1.0, %v1031
  %v1033 = vrcp.pop %v1024
  %v1034 = vmul.f32 1.0, %v1033
  %v1035 = vrcp.pop %v1025
  %v1036 = vmul.f32 1.0, %v1035
  %v1037 = vrcp.pop %v1026
  %v1038 = vmul.f32 1.0, %v1037
  %v1039 = vtanh.pop %v997
  %v1040 = vtanh.pop %v998
  %v1041 = vtanh.pop %v999
  %v1042 = vtanh.pop %v1000
  %v1043 = vtanh.pop %v1001
  %v1044 = vtanh.pop %v1002
  %v1045 = vmul.f32 %v1028, %v824
  %v1046 = vmul.f32 %v1030, %v825
  %v1047 = vmul.f32 %v1032, %v826
  %v1048 = vmul.f32 %v1034, %v827
  %v1049 = vmul.f32 %v1036, %v828
  %v1050 = vmul.f32 %v1038, %v829
  %1057 = vrot.lane.b32.xlu0 %v1039, 64
  %v1058 = vpop.permute.xlu0 %1057
  %1059 = vrot.lane.b32.xlu0 %v1040, 64
  %v1060 = vpop.permute.xlu0 %1059
  %1061 = vrot.lane.b32.xlu0 %v1041, 64
  %v1062 = vpop.permute.xlu0 %1061
  %1063 = vrot.lane.b32.xlu0 %v1042, 64
  %v1064 = vpop.permute.xlu0 %1063
  %1065 = vrot.lane.b32.xlu0 %v1043, 64
  %v1066 = vpop.permute.xlu0 %1065
  %1067 = vrot.lane.b32.xlu0 %v1044, 64
  %v1068 = vpop.permute.xlu0 %1067
  %v1075 = vmul.f32 %v1028, %v1058
  %v1076 = vmul.f32 %v1030, %v1060
  %v1077 = vmul.f32 %v1032, %v1062
  %v1078 = vmul.f32 %v1034, %v1064
  %v1079 = vmul.f32 %v1036, %v1066
  %v1080 = vmul.f32 %v1038, %v1068
  %1087 = vrot.lane.b32.xlu0 %v1075, 32
  %v1088 = vpop.permute.xlu0 %1087
  %1089 = vrot.lane.b32.xlu0 %v1076, 32
  %v1090 = vpop.permute.xlu0 %1089
  %1091 = vrot.lane.b32.xlu0 %v1077, 32
  %v1092 = vpop.permute.xlu0 %1091
  %1093 = vrot.lane.b32.xlu0 %v1078, 32
  %v1094 = vpop.permute.xlu0 %1093
  %1095 = vrot.lane.b32.xlu0 %v1079, 32
  %v1096 = vpop.permute.xlu0 %1095
  %1097 = vrot.lane.b32.xlu0 %v1080, 32
  %v1098 = vpop.permute.xlu0 %1097
  %v1105 = vadd.f32 %v1045, %v1088
  %v1106 = vadd.f32 %v1046, %v1090
  %v1107 = vadd.f32 %v1047, %v1092
  %v1108 = vadd.f32 %v1048, %v1094
  %v1109 = vadd.f32 %v1049, %v1096
  %v1110 = vadd.f32 %v1050, %v1098
  %v1111 = vtanh.pop %v1105
  %v1112 = vtanh.pop %v1106
  %v1113 = vtanh.pop %v1107
  %v1114 = vtanh.pop %v1108
  %v1115 = vtanh.pop %v1109
  %v1116 = vtanh.pop %v1110
  %1123 = vrot.lane.b32.xlu0 %v1111, 64
  %v1124 = vpop.permute.xlu0 %1123
  %1125 = vrot.lane.b32.xlu0 %v1112, 64
  %v1126 = vpop.permute.xlu0 %1125
  %1127 = vrot.lane.b32.xlu0 %v1113, 64
  %v1128 = vpop.permute.xlu0 %1127
  %1129 = vrot.lane.b32.xlu0 %v1114, 64
  %v1130 = vpop.permute.xlu0 %1129
  %1131 = vrot.lane.b32.xlu0 %v1115, 64
  %v1132 = vpop.permute.xlu0 %1131
  %1133 = vrot.lane.b32.xlu0 %v1116, 64
  %v1134 = vpop.permute.xlu0 %1133
  %v1141 = vmul.f32 %v1028, %v1124
  %v1142 = vmul.f32 %v1030, %v1126
  %v1143 = vmul.f32 %v1032, %v1128
  %v1144 = vmul.f32 %v1034, %v1130
  %v1145 = vmul.f32 %v1036, %v1132
  %v1146 = vmul.f32 %v1038, %v1134
  %v1147 = vld [vmem:[#allocation2 + $0x60] sm:$0xff]
  %v1148 = vld [vmem:[#allocation2 + $0x68] sm:$0xff]
  %v1149 = vld [vmem:[#allocation2 + $0x70] sm:$0xff]
  %v1150 = vld [vmem:[#allocation2 + $0x78] sm:$0xff]
  %v1151 = vld [vmem:[#allocation2 + $0x80] sm:$0xff]
  %v1152 = vld [vmem:[#allocation2 + $0x88] sm:$0xff]
  %1159 = vrot.lane.b32.xlu0 %v1141, 32
  %v1160 = vpop.permute.xlu0 %1159
  %1161 = vrot.lane.b32.xlu0 %v1142, 32
  %v1162 = vpop.permute.xlu0 %1161
  %1163 = vrot.lane.b32.xlu0 %v1143, 32
  %v1164 = vpop.permute.xlu0 %1163
  %1165 = vrot.lane.b32.xlu0 %v1144, 32
  %v1166 = vpop.permute.xlu0 %1165
  %1167 = vrot.lane.b32.xlu0 %v1145, 32
  %v1168 = vpop.permute.xlu0 %1167
  %1169 = vrot.lane.b32.xlu0 %v1146, 32
  %v1170 = vpop.permute.xlu0 %1169
  %v1171 = vsel %vm617, %v1160, 0
  %v1173 = vsel %vm617, %v1162, 0
  %v1175 = vsel %vm617, %v1164, 0
  %v1177 = vsel %vm617, %v1166, 0
  %v1179 = vsel %vm617, %v1168, 0
  %v1181 = vsel %vm617, %v1170, 0
  %1183 = vmatprep.subr.mxu0 0.0
  %1184 = vmatpush1.msra.mxu0 %v97
  %1185 = vmatprep.subr.mxu0 0.0
  %1186 = vmatpush1.msra.mxu0 %v98
  %1187 = vmatprep.subr.mxu0 0.0
  %1188 = vmatpush1.msra.mxu0 %v99
  %1189 = vmatprep.subr.mxu0 0.0
  %1190 = vmatpush1.msra.mxu0 %v100
  %1191 = vmatprep.subr.mxu0 0.0
  %1192 = vmatpush1.msra.mxu0 0.0
  %1193 = vmatprep.subr.mxu0 0.0
  %1194 = vmatpush1.msra.mxu0 0.0
  %1195 = vmatprep.subr.mxu0 0.0
  %1196 = vmatpush1.msra.mxu0 0.0
  %1197 = vmatprep.subr.mxu0 0.0
  %1198 = vmatpush1.msra.mxu0 0.0
  %1199 = vmatprep.subr.mxu0 0.0
  %1200 = vmatpush1.msra.mxu0 0.0
  %1201 = vmatprep.subr.mxu0 0.0
  %1202 = vmatpush1.msra.mxu0 0.0
  %1203 = vmatprep.subr.mxu0 0.0
  %1204 = vmatpush1.msra.mxu0 0.0
  %1205 = vmatprep.subr.mxu0 0.0
  %1206 = vmatpush1.msra.mxu0 0.0
  %1207 = vmatprep.subr.mxu0 0.0
  %1208 = vmatpush1.msra.mxu0 0.0
  %1209 = vmatprep.subr.mxu0 0.0
  %1210 = vmatpush1.msra.mxu0 0.0
  %1211 = vmatprep.subr.mxu0 0.0
  %1212 = vmatpush1.msra.mxu0 0.0
  %1213 = vmatprep.subr.mxu0 0.0
  %1214 = vmatpush1.msra.mxu0 0.0
  %1215 = vmatprep.subr.mxu0 0.0
  %1216 = vmatpush1.msra.mxu0 0.0
  %1217 = vmatprep.subr.mxu0 0.0
  %1218 = vmatpush1.msra.mxu0 0.0
  %1219 = vmatprep.subr.mxu0 0.0
  %1220 = vmatpush1.msra.mxu0 0.0
  %1221 = vmatprep.subr.mxu0 0.0
  %1222 = vmatpush1.msra.mxu0 0.0
  %1223 = vmatprep.subr.mxu0 0.0
  %1224 = vmatpush1.msra.mxu0 0.0
  %1225 = vmatprep.subr.mxu0 0.0
  %1226 = vmatpush1.msra.mxu0 0.0
  %1227 = vmatprep.subr.mxu0 0.0
  %1228 = vmatpush1.msra.mxu0 0.0
  %1229 = vmatprep.subr.mxu0 0.0
  %1230 = vmatpush1.msra.mxu0 0.0
  %1231 = vmatprep.subr.mxu0 0.0
  %1232 = vmatpush1.msra.mxu0 0.0
  %1233 = vmatprep.subr.mxu0 0.0
  %1234 = vmatpush1.msra.mxu0 0.0
  %1235 = vmatprep.subr.mxu0 0.0
  %1236 = vmatpush1.msra.mxu0 0.0
  %1237 = vmatprep.subr.mxu0 0.0
  %1238 = vmatpush1.msra.mxu0 0.0
  %1239 = vmatprep.subr.mxu0 0.0
  %1240 = vmatpush1.msra.mxu0 0.0
  %1241 = vmatprep.subr.mxu0 0.0
  %1242 = vmatpush1.msra.mxu0 0.0
  %1243 = vmatprep.subr.mxu0 0.0
  %1244 = vmatpush1.msra.mxu0 0.0
  %1245 = vmatprep.subr.mxu0 0.0
  %1246 = vmatpush1.msra.mxu0 0.0
  %1247 = vmatprep.mubr.f32.mxu0 0.0
  %1248 = vmatmul.mubr.f32.gmra.mrb[0].mxu0 %v1171
  %v1249 = vpop.f32.mrb[0].mxu0
  %v1250 = vadd.f32 0.0, %v1249
  %v1251 = vpop.f32.mrb[0].mxu0
  %1252 = vmatprep.mubr.f32.mxu0 0.0
  %1253 = vmatmul.mubr.f32.gmra.mrb[0].mxu0 %v1173
  %v1254 = vpop.f32.mrb[0].mxu0
  %v1255 = vadd.f32 0.0, %v1254
  %v1256 = vpop.f32.mrb[0].mxu0
  %1257 = vmatprep.mubr.f32.mxu0 0.0
  %1258 = vmatmul.mubr.f32.gmra.mrb[0].mxu0 %v1175
  %v1259 = vpop.f32.mrb[0].mxu0
  %v1260 = vadd.f32 0.0, %v1259
  %v1261 = vpop.f32.mrb[0].mxu0
  %1262 = vmatprep.mubr.f32.mxu0 0.0
  %1263 = vmatmul.mubr.f32.gmra.mrb[0].mxu0 %v1177
  %v1264 = vpop.f32.mrb[0].mxu0
  %v1265 = vadd.f32 0.0, %v1264
  %v1266 = vpop.f32.mrb[0].mxu0
  %1267 = vmatprep.mubr.f32.mxu0 0.0
  %1268 = vmatmul.mubr.f32.gmra.mrb[0].mxu0 %v1179
  %v1269 = vpop.f32.mrb[0].mxu0
  %v1270 = vadd.f32 0.0, %v1269
  %v1271 = vpop.f32.mrb[0].mxu0
  %1272 = vmatprep.mubr.f32.mxu0 0.0
  %1273 = vmatmul.mubr.f32.gmra.mrb[0].mxu0 %v1181
  %v1274 = vpop.f32.mrb[0].mxu0
  %v1275 = vadd.f32 0.0, %v1274
  %v1276 = vpop.f32.mrb[0].mxu0
  %1277 = vdwg.mxu0
  %v1278 = vadd.f32 %v1147, %v1250
  %v1279 = vadd.f32 %v1148, %v1255
  %v1280 = vadd.f32 %v1149, %v1260
  %v1281 = vadd.f32 %v1150, %v1265
  %v1282 = vadd.f32 %v1151, %v1270
  %v1283 = vadd.f32 %v1152, %v1275
  %v1284 = vxor.u32 %v1278, 2147483648
  %v1285 = vxor.u32 %v1279, 2147483648
  %v1286 = vxor.u32 %v1280, 2147483648
  %v1287 = vxor.u32 %v1281, 2147483648
  %v1288 = vxor.u32 %v1282, 2147483648
  %v1289 = vxor.u32 %v1283, 2147483648
  %v1290 = vmul.f32 %v1284, 1.442695
  %v1291 = vpow.pop %v1290
  %v1292 = vmul.f32 %v1285, 1.442695
  %v1293 = vpow.pop %v1292
  %v1294 = vmul.f32 %v1286, 1.442695
  %v1295 = vpow.pop %v1294
  %v1296 = vmul.f32 %v1287, 1.442695
  %v1297 = vpow.pop %v1296
  %v1298 = vmul.f32 %v1288, 1.442695
  %v1299 = vpow.pop %v1298
  %v1300 = vmul.f32 %v1289, 1.442695
  %v1301 = vpow.pop %v1300
  %v1302 = vadd.f32 %v1291, 1.0
  %v1303 = vadd.f32 %v1293, 1.0
  %v1304 = vadd.f32 %v1295, 1.0
  %v1305 = vadd.f32 %v1297, 1.0
  %v1306 = vadd.f32 %v1299, 1.0
  %v1307 = vadd.f32 %v1301, 1.0
  %v1308 = vrcp.pop %v1302
  %v1309 = vmul.f32 1.0, %v1308
  %v1310 = vrcp.pop %v1303
  %v1311 = vmul.f32 1.0, %v1310
  %v1312 = vrcp.pop %v1304
  %v1313 = vmul.f32 1.0, %v1312
  %v1314 = vrcp.pop %v1305
  %v1315 = vmul.f32 1.0, %v1314
  %v1316 = vrcp.pop %v1306
  %v1317 = vmul.f32 1.0, %v1316
  %v1318 = vrcp.pop %v1307
  %v1319 = vmul.f32 1.0, %v1318
  %v1320 = vtanh.pop %v1278
  %v1321 = vtanh.pop %v1279
  %v1322 = vtanh.pop %v1280
  %v1323 = vtanh.pop %v1281
  %v1324 = vtanh.pop %v1282
  %v1325 = vtanh.pop %v1283
  %v1326 = vmul.f32 %v1309, %v1105
  %v1327 = vmul.f32 %v1311, %v1106
  %v1328 = vmul.f32 %v1313, %v1107
  %v1329 = vmul.f32 %v1315, %v1108
  %v1330 = vmul.f32 %v1317, %v1109
  %v1331 = vmul.f32 %v1319, %v1110
  %1338 = vrot.lane.b32.xlu0 %v1320, 64
  %v1339 = vpop.permute.xlu0 %1338
  %1340 = vrot.lane.b32.xlu0 %v1321, 64
  %v1341 = vpop.permute.xlu0 %1340
  %1342 = vrot.lane.b32.xlu0 %v1322, 64
  %v1343 = vpop.permute.xlu0 %1342
  %1344 = vrot.lane.b32.xlu0 %v1323, 64
  %v1345 = vpop.permute.xlu0 %1344
  %1346 = vrot.lane.b32.xlu0 %v1324, 64
  %v1347 = vpop.permute.xlu0 %1346
  %1348 = vrot.lane.b32.xlu0 %v1325, 64
  %v1349 = vpop.permute.xlu0 %1348
  %v1356 = vmul.f32 %v1309, %v1339
  %v1357 = vmul.f32 %v1311, %v1341
  %v1358 = vmul.f32 %v1313, %v1343
  %v1359 = vmul.f32 %v1315, %v1345
  %v1360 = vmul.f32 %v1317, %v1347
  %v1361 = vmul.f32 %v1319, %v1349
  %1368 = vrot.lane.b32.xlu0 %v1356, 32
  %v1369 = vpop.permute.xlu0 %1368
  %1370 = vrot.lane.b32.xlu0 %v1357, 32
  %v1371 = vpop.permute.xlu0 %1370
  %1372 = vrot.lane.b32.xlu0 %v1358, 32
  %v1373 = vpop.permute.xlu0 %1372
  %1374 = vrot.lane.b32.xlu0 %v1359, 32
  %v1375 = vpop.permute.xlu0 %1374
  %1376 = vrot.lane.b32.xlu0 %v1360, 32
  %v1377 = vpop.permute.xlu0 %1376
  %1378 = vrot.lane.b32.xlu0 %v1361, 32
  %v1379 = vpop.permute.xlu0 %1378
  %v1386 = vadd.f32 %v1326, %v1369
  %v1387 = vadd.f32 %v1327, %v1371
  %v1388 = vadd.f32 %v1328, %v1373
  %v1389 = vadd.f32 %v1329, %v1375
  %v1390 = vadd.f32 %v1330, %v1377
  %v1391 = vadd.f32 %v1331, %v1379
  %v1392 = vtanh.pop %v1386
  %v1393 = vtanh.pop %v1387
  %v1394 = vtanh.pop %v1388
  %v1395 = vtanh.pop %v1389
  %v1396 = vtanh.pop %v1390
  %v1397 = vtanh.pop %v1391
  %1404 = vrot.lane.b32.xlu0 %v1392, 64
  %v1405 = vpop.permute.xlu0 %1404
  %1406 = vrot.lane.b32.xlu0 %v1393, 64
  %v1407 = vpop.permute.xlu0 %1406
  %1408 = vrot.lane.b32.xlu0 %v1394, 64
  %v1409 = vpop.permute.xlu0 %1408
  %1410 = vrot.lane.b32.xlu0 %v1395, 64
  %v1411 = vpop.permute.xlu0 %1410
  %1412 = vrot.lane.b32.xlu0 %v1396, 64
  %v1413 = vpop.permute.xlu0 %1412
  %1414 = vrot.lane.b32.xlu0 %v1397, 64
  %v1415 = vpop.permute.xlu0 %1414
  %v1422 = vmul.f32 %v1309, %v1405
  %v1423 = vmul.f32 %v1311, %v1407
  %v1424 = vmul.f32 %v1313, %v1409
  %v1425 = vmul.f32 %v1315, %v1411
  %v1426 = vmul.f32 %v1317, %v1413
  %v1427 = vmul.f32 %v1319, %v1415
  %v1428 = vld [vmem:[#allocation2 + $0x90] sm:$0xff]
  %v1429 = vld [vmem:[#allocation2 + $0x98] sm:$0xff]
  %v1430 = vld [vmem:[#allocation2 + $0xa0] sm:$0xff]
  %v1431 = vld [vmem:[#allocation2 + $0xa8] sm:$0xff]
  %v1432 = vld [vmem:[#allocation2 + $0xb0] sm:$0xff]
  %v1433 = vld [vmem:[#allocation2 + $0xb8] sm:$0xff]
  %1440 = vrot.lane.b32.xlu0 %v1422, 32
  %v1441 = vpop.permute.xlu0 %1440
  %1442 = vrot.lane.b32.xlu0 %v1423, 32
  %v1443 = vpop.permute.xlu0 %1442
  %1444 = vrot.lane.b32.xlu0 %v1424, 32
  %v1445 = vpop.permute.xlu0 %1444
  %1446 = vrot.lane.b32.xlu0 %v1425, 32
  %v1447 = vpop.permute.xlu0 %1446
  %1448 = vrot.lane.b32.xlu0 %v1426, 32
  %v1449 = vpop.permute.xlu0 %1448
  %1450 = vrot.lane.b32.xlu0 %v1427, 32
  %v1451 = vpop.permute.xlu0 %1450
  %v1452 = vsel %vm617, %v1441, 0
  %v1454 = vsel %vm617, %v1443, 0
  %v1456 = vsel %vm617, %v1445, 0
  %v1458 = vsel %vm617, %v1447, 0
  %v1460 = vsel %vm617, %v1449, 0
  %v1462 = vsel %vm617, %v1451, 0
  %1464 = vmatprep.subr.mxu0 0.0
  %1465 = vmatpush1.msra.mxu0 %v97
  %1466 = vmatprep.subr.mxu0 0.0
  %1467 = vmatpush1.msra.mxu0 %v98
  %1468 = vmatprep.subr.mxu0 0.0
  %1469 = vmatpush1.msra.mxu0 %v99
  %1470 = vmatprep.subr.mxu0 0.0
  %1471 = vmatpush1.msra.mxu0 %v100
  %1472 = vmatprep.subr.mxu0 0.0
  %1473 = vmatpush1.msra.mxu0 0.0
  %1474 = vmatprep.subr.mxu0 0.0
  %1475 = vmatpush1.msra.mxu0 0.0
  %1476 = vmatprep.subr.mxu0 0.0
  %1477 = vmatpush1.msra.mxu0 0.0
  %1478 = vmatprep.subr.mxu0 0.0
  %1479 = vmatpush1.msra.mxu0 0.0
  %1480 = vmatprep.subr.mxu0 0.0
  %1481 = vmatpush1.msra.mxu0 0.0
  %1482 = vmatprep.subr.mxu0 0.0
  %1483 = vmatpush1.msra.mxu0 0.0
  %1484 = vmatprep.subr.mxu0 0.0
  %1485 = vmatpush1.msra.mxu0 0.0
  %1486 = vmatprep.subr.mxu0 0.0
  %1487 = vmatpush1.msra.mxu0 0.0
  %1488 = vmatprep.subr.mxu0 0.0
  %1489 = vmatpush1.msra.mxu0 0.0
  %1490 = vmatprep.subr.mxu0 0.0
  %1491 = vmatpush1.msra.mxu0 0.0
  %1492 = vmatprep.subr.mxu0 0.0
  %1493 = vmatpush1.msra.mxu0 0.0
  %1494 = vmatprep.subr.mxu0 0.0
  %1495 = vmatpush1.msra.mxu0 0.0
  %1496 = vmatprep.subr.mxu0 0.0
  %1497 = vmatpush1.msra.mxu0 0.0
  %1498 = vmatprep.subr.mxu0 0.0
  %1499 = vmatpush1.msra.mxu0 0.0
  %1500 = vmatprep.subr.mxu0 0.0
  %1501 = vmatpush1.msra.mxu0 0.0
  %1502 = vmatprep.subr.mxu0 0.0
  %1503 = vmatpush1.msra.mxu0 0.0
  %1504 = vmatprep.subr.mxu0 0.0
  %1505 = vmatpush1.msra.mxu0 0.0
  %1506 = vmatprep.subr.mxu0 0.0
  %1507 = vmatpush1.msra.mxu0 0.0
  %1508 = vmatprep.subr.mxu0 0.0
  %1509 = vmatpush1.msra.mxu0 0.0
  %1510 = vmatprep.subr.mxu0 0.0
  %1511 = vmatpush1.msra.mxu0 0.0
  %1512 = vmatprep.subr.mxu0 0.0
  %1513 = vmatpush1.msra.mxu0 0.0
  %1514 = vmatprep.subr.mxu0 0.0
  %1515 = vmatpush1.msra.mxu0 0.0
  %1516 = vmatprep.subr.mxu0 0.0
  %1517 = vmatpush1.msra.mxu0 0.0
  %1518 = vmatprep.subr.mxu0 0.0
  %1519 = vmatpush1.msra.mxu0 0.0
  %1520 = vmatprep.subr.mxu0 0.0
  %1521 = vmatpush1.msra.mxu0 0.0
  %1522 = vmatprep.subr.mxu0 0.0
  %1523 = vmatpush1.msra.mxu0 0.0
  %1524 = vmatprep.subr.mxu0 0.0
  %1525 = vmatpush1.msra.mxu0 0.0
  %1526 = vmatprep.subr.mxu0 0.0
  %1527 = vmatpush1.msra.mxu0 0.0
  %1528 = vmatprep.mubr.f32.mxu0 0.0
  %1529 = vmatmul.mubr.f32.gmra.mrb[0].mxu0 %v1452
  %v1530 = vpop.f32.mrb[0].mxu0
  %v1531 = vadd.f32 0.0, %v1530
  %v1532 = vpop.f32.mrb[0].mxu0
  %1533 = vmatprep.mubr.f32.mxu0 0.0
  %1534 = vmatmul.mubr.f32.gmra.mrb[0].mxu0 %v1454
  %v1535 = vpop.f32.mrb[0].mxu0
  %v1536 = vadd.f32 0.0, %v1535
  %v1537 = vpop.f32.mrb[0].mxu0
  %1538 = vmatprep.mubr.f32.mxu0 0.0
  %1539 = vmatmul.mubr.f32.gmra.mrb[0].mxu0 %v1456
  %v1540 = vpop.f32.mrb[0].mxu0
  %v1541 = vadd.f32 0.0, %v1540
  %v1542 = vpop.f32.mrb[0].mxu0
  %1543 = vmatprep.mubr.f32.mxu0 0.0
  %1544 = vmatmul.mubr.f32.gmra.mrb[0].mxu0 %v1458
  %v1545 = vpop.f32.mrb[0].mxu0
  %v1546 = vadd.f32 0.0, %v1545
  %v1547 = vpop.f32.mrb[0].mxu0
  %1548 = vmatprep.mubr.f32.mxu0 0.0
  %1549 = vmatmul.mubr.f32.gmra.mrb[0].mxu0 %v1460
  %v1550 = vpop.f32.mrb[0].mxu0
  %v1551 = vadd.f32 0.0, %v1550
  %v1552 = vpop.f32.mrb[0].mxu0
  %1553 = vmatprep.mubr.f32.mxu0 0.0
  %1554 = vmatmul.mubr.f32.gmra.mrb[0].mxu0 %v1462
  %v1555 = vpop.f32.mrb[0].mxu0
  %v1556 = vadd.f32 0.0, %v1555
  %v1557 = vpop.f32.mrb[0].mxu0
  %1558 = vdwg.mxu0
  %v1559 = vadd.f32 %v1428, %v1531
  %v1560 = vadd.f32 %v1429, %v1536
  %v1561 = vadd.f32 %v1430, %v1541
  %v1562 = vadd.f32 %v1431, %v1546
  %v1563 = vadd.f32 %v1432, %v1551
  %v1564 = vadd.f32 %v1433, %v1556
  %v1565 = vxor.u32 %v1559, 2147483648
  %v1566 = vxor.u32 %v1560, 2147483648
  %v1567 = vxor.u32 %v1561, 2147483648
  %v1568 = vxor.u32 %v1562, 2147483648
  %v1569 = vxor.u32 %v1563, 2147483648
  %v1570 = vxor.u32 %v1564, 2147483648
  %v1571 = vmul.f32 %v1565, 1.442695
  %v1572 = vpow.pop %v1571
  %v1573 = vmul.f32 %v1566, 1.442695
  %v1574 = vpow.pop %v1573
  %v1575 = vmul.f32 %v1567, 1.442695
  %v1576 = vpow.pop %v1575
  %v1577 = vmul.f32 %v1568, 1.442695
  %v1578 = vpow.pop %v1577
  %v1579 = vmul.f32 %v1569, 1.442695
  %v1580 = vpow.pop %v1579
  %v1581 = vmul.f32 %v1570, 1.442695
  %v1582 = vpow.pop %v1581
  %v1583 = vadd.f32 %v1572, 1.0
  %v1584 = vadd.f32 %v1574, 1.0
  %v1585 = vadd.f32 %v1576, 1.0
  %v1586 = vadd.f32 %v1578, 1.0
  %v1587 = vadd.f32 %v1580, 1.0
  %v1588 = vadd.f32 %v1582, 1.0
  %v1589 = vrcp.pop %v1583
  %v1590 = vmul.f32 1.0, %v1589
  %v1591 = vrcp.pop %v1584
  %v1592 = vmul.f32 1.0, %v1591
  %v1593 = vrcp.pop %v1585
  %v1594 = vmul.f32 1.0, %v1593
  %v1595 = vrcp.pop %v1586
  %v1596 = vmul.f32 1.0, %v1595
  %v1597 = vrcp.pop %v1587
  %v1598 = vmul.f32 1.0, %v1597
  %v1599 = vrcp.pop %v1588
  %v1600 = vmul.f32 1.0, %v1599
  %v1601 = vtanh.pop %v1559
  %v1602 = vtanh.pop %v1560
  %v1603 = vtanh.pop %v1561
  %v1604 = vtanh.pop %v1562
  %v1605 = vtanh.pop %v1563
  %v1606 = vtanh.pop %v1564
  %v1607 = vmul.f32 %v1590, %v1386
  %v1608 = vmul.f32 %v1592, %v1387
  %v1609 = vmul.f32 %v1594, %v1388
  %v1610 = vmul.f32 %v1596, %v1389
  %v1611 = vmul.f32 %v1598, %v1390
  %v1612 = vmul.f32 %v1600, %v1391
  %1619 = vrot.lane.b32.xlu0 %v1601, 64
  %v1620 = vpop.permute.xlu0 %1619
  %1621 = vrot.lane.b32.xlu0 %v1602, 64
  %v1622 = vpop.permute.xlu0 %1621
  %1623 = vrot.lane.b32.xlu0 %v1603, 64
  %v1624 = vpop.permute.xlu0 %1623
  %1625 = vrot.lane.b32.xlu0 %v1604, 64
  %v1626 = vpop.permute.xlu0 %1625
  %1627 = vrot.lane.b32.xlu0 %v1605, 64
  %v1628 = vpop.permute.xlu0 %1627
  %1629 = vrot.lane.b32.xlu0 %v1606, 64
  %v1630 = vpop.permute.xlu0 %1629
  %v1637 = vmul.f32 %v1590, %v1620
  %v1638 = vmul.f32 %v1592, %v1622
  %v1639 = vmul.f32 %v1594, %v1624
  %v1640 = vmul.f32 %v1596, %v1626
  %v1641 = vmul.f32 %v1598, %v1628
  %v1642 = vmul.f32 %v1600, %v1630
  %1649 = vrot.lane.b32.xlu0 %v1637, 32
  %v1650 = vpop.permute.xlu0 %1649
  %1651 = vrot.lane.b32.xlu0 %v1638, 32
  %v1652 = vpop.permute.xlu0 %1651
  %1653 = vrot.lane.b32.xlu0 %v1639, 32
  %v1654 = vpop.permute.xlu0 %1653
  %1655 = vrot.lane.b32.xlu0 %v1640, 32
  %v1656 = vpop.permute.xlu0 %1655
  %1657 = vrot.lane.b32.xlu0 %v1641, 32
  %v1658 = vpop.permute.xlu0 %1657
  %1659 = vrot.lane.b32.xlu0 %v1642, 32
  %v1660 = vpop.permute.xlu0 %1659
  %v1667 = vadd.f32 %v1607, %v1650
  %v1668 = vadd.f32 %v1608, %v1652
  %v1669 = vadd.f32 %v1609, %v1654
  %v1670 = vadd.f32 %v1610, %v1656
  %v1671 = vadd.f32 %v1611, %v1658
  %v1672 = vadd.f32 %v1612, %v1660
  %v1673 = vtanh.pop %v1667
  %v1674 = vtanh.pop %v1668
  %v1675 = vtanh.pop %v1669
  %v1676 = vtanh.pop %v1670
  %v1677 = vtanh.pop %v1671
  %v1678 = vtanh.pop %v1672
  %1685 = vrot.lane.b32.xlu0 %v1673, 64
  %v1686 = vpop.permute.xlu0 %1685
  %1687 = vrot.lane.b32.xlu0 %v1674, 64
  %v1688 = vpop.permute.xlu0 %1687
  %1689 = vrot.lane.b32.xlu0 %v1675, 64
  %v1690 = vpop.permute.xlu0 %1689
  %1691 = vrot.lane.b32.xlu0 %v1676, 64
  %v1692 = vpop.permute.xlu0 %1691
  %1693 = vrot.lane.b32.xlu0 %v1677, 64
  %v1694 = vpop.permute.xlu0 %1693
  %1695 = vrot.lane.b32.xlu0 %v1678, 64
  %v1696 = vpop.permute.xlu0 %1695
  %v1703 = vmul.f32 %v1590, %v1686
  %v1704 = vmul.f32 %v1592, %v1688
  %v1705 = vmul.f32 %v1594, %v1690
  %v1706 = vmul.f32 %v1596, %v1692
  %v1707 = vmul.f32 %v1598, %v1694
  %v1708 = vmul.f32 %v1600, %v1696
  %v1709 = vld [vmem:[#allocation2 + $0xc0] sm:$0xff]
  %v1710 = vld [vmem:[#allocation2 + $0xc8] sm:$0xff]
  %v1711 = vld [vmem:[#allocation2 + $0xd0] sm:$0xff]
  %v1712 = vld [vmem:[#allocation2 + $0xd8] sm:$0xff]
  %v1713 = vld [vmem:[#allocation2 + $0xe0] sm:$0xff]
  %v1714 = vld [vmem:[#allocation2 + $0xe8] sm:$0xff]
  %1721 = vrot.lane.b32.xlu0 %v1703, 32
  %v1722 = vpop.permute.xlu0 %1721
  %1723 = vrot.lane.b32.xlu0 %v1704, 32
  %v1724 = vpop.permute.xlu0 %1723
  %1725 = vrot.lane.b32.xlu0 %v1705, 32
  %v1726 = vpop.permute.xlu0 %1725
  %1727 = vrot.lane.b32.xlu0 %v1706, 32
  %v1728 = vpop.permute.xlu0 %1727
  %1729 = vrot.lane.b32.xlu0 %v1707, 32
  %v1730 = vpop.permute.xlu0 %1729
  %1731 = vrot.lane.b32.xlu0 %v1708, 32
  %v1732 = vpop.permute.xlu0 %1731
  %v1733 = vsel %vm617, %v1722, 0
  %v1735 = vsel %vm617, %v1724, 0
  %v1737 = vsel %vm617, %v1726, 0
  %v1739 = vsel %vm617, %v1728, 0
  %v1741 = vsel %vm617, %v1730, 0
  %v1743 = vsel %vm617, %v1732, 0
  %1745 = vmatprep.subr.mxu0 0.0
  %1746 = vmatpush1.msra.mxu0 %v97
  %1747 = vmatprep.subr.mxu0 0.0
  %1748 = vmatpush1.msra.mxu0 %v98
  %1749 = vmatprep.subr.mxu0 0.0
  %1750 = vmatpush1.msra.mxu0 %v99
  %1751 = vmatprep.subr.mxu0 0.0
  %1752 = vmatpush1.msra.mxu0 %v100
  %1753 = vmatprep.subr.mxu0 0.0
  %1754 = vmatpush1.msra.mxu0 0.0
  %1755 = vmatprep.subr.mxu0 0.0
  %1756 = vmatpush1.msra.mxu0 0.0
  %1757 = vmatprep.subr.mxu0 0.0
  %1758 = vmatpush1.msra.mxu0 0.0
  %1759 = vmatprep.subr.mxu0 0.0
  %1760 = vmatpush1.msra.mxu0 0.0
  %1761 = vmatprep.subr.mxu0 0.0
  %1762 = vmatpush1.msra.mxu0 0.0
  %1763 = vmatprep.subr.mxu0 0.0
  %1764 = vmatpush1.msra.mxu0 0.0
  %1765 = vmatprep.subr.mxu0 0.0
  %1766 = vmatpush1.msra.mxu0 0.0
  %1767 = vmatprep.subr.mxu0 0.0
  %1768 = vmatpush1.msra.mxu0 0.0
  %1769 = vmatprep.subr.mxu0 0.0
  %1770 = vmatpush1.msra.mxu0 0.0
  %1771 = vmatprep.subr.mxu0 0.0
  %1772 = vmatpush1.msra.mxu0 0.0
  %1773 = vmatprep.subr.mxu0 0.0
  %1774 = vmatpush1.msra.mxu0 0.0
  %1775 = vmatprep.subr.mxu0 0.0
  %1776 = vmatpush1.msra.mxu0 0.0
  %1777 = vmatprep.subr.mxu0 0.0
  %1778 = vmatpush1.msra.mxu0 0.0
  %1779 = vmatprep.subr.mxu0 0.0
  %1780 = vmatpush1.msra.mxu0 0.0
  %1781 = vmatprep.subr.mxu0 0.0
  %1782 = vmatpush1.msra.mxu0 0.0
  %1783 = vmatprep.subr.mxu0 0.0
  %1784 = vmatpush1.msra.mxu0 0.0
  %1785 = vmatprep.subr.mxu0 0.0
  %1786 = vmatpush1.msra.mxu0 0.0
  %1787 = vmatprep.subr.mxu0 0.0
  %1788 = vmatpush1.msra.mxu0 0.0
  %1789 = vmatprep.subr.mxu0 0.0
  %1790 = vmatpush1.msra.mxu0 0.0
  %1791 = vmatprep.subr.mxu0 0.0
  %1792 = vmatpush1.msra.mxu0 0.0
  %1793 = vmatprep.subr.mxu0 0.0
  %1794 = vmatpush1.msra.mxu0 0.0
  %1795 = vmatprep.subr.mxu0 0.0
  %1796 = vmatpush1.msra.mxu0 0.0
  %1797 = vmatprep.subr.mxu0 0.0
  %1798 = vmatpush1.msra.mxu0 0.0
  %1799 = vmatprep.subr.mxu0 0.0
  %1800 = vmatpush1.msra.mxu0 0.0
  %1801 = vmatprep.subr.mxu0 0.0
  %1802 = vmatpush1.msra.mxu0 0.0
  %1803 = vmatprep.subr.mxu0 0.0
  %1804 = vmatpush1.msra.mxu0 0.0
  %1805 = vmatprep.subr.mxu0 0.0
  %1806 = vmatpush1.msra.mxu0 0.0
  %1807 = vmatprep.subr.mxu0 0.0
  %1808 = vmatpush1.msra.mxu0 0.0
  %1809 = vmatprep.mubr.f32.mxu0 0.0
  %1810 = vmatmul.mubr.f32.gmra.mrb[0].mxu0 %v1733
  %v1811 = vpop.f32.mrb[0].mxu0
  %v1812 = vadd.f32 0.0, %v1811
  %v1813 = vpop.f32.mrb[0].mxu0
  %1814 = vmatprep.mubr.f32.mxu0 0.0
  %1815 = vmatmul.mubr.f32.gmra.mrb[0].mxu0 %v1735
  %v1816 = vpop.f32.mrb[0].mxu0
  %v1817 = vadd.f32 0.0, %v1816
  %v1818 = vpop.f32.mrb[0].mxu0
  %1819 = vmatprep.mubr.f32.mxu0 0.0
  %1820 = vmatmul.mubr.f32.gmra.mrb[0].mxu0 %v1737
  %v1821 = vpop.f32.mrb[0].mxu0
  %v1822 = vadd.f32 0.0, %v1821
  %v1823 = vpop.f32.mrb[0].mxu0
  %1824 = vmatprep.mubr.f32.mxu0 0.0
  %1825 = vmatmul.mubr.f32.gmra.mrb[0].mxu0 %v1739
  %v1826 = vpop.f32.mrb[0].mxu0
  %v1827 = vadd.f32 0.0, %v1826
  %v1828 = vpop.f32.mrb[0].mxu0
  %1829 = vmatprep.mubr.f32.mxu0 0.0
  %1830 = vmatmul.mubr.f32.gmra.mrb[0].mxu0 %v1741
  %v1831 = vpop.f32.mrb[0].mxu0
  %v1832 = vadd.f32 0.0, %v1831
  %v1833 = vpop.f32.mrb[0].mxu0
  %1834 = vmatprep.mubr.f32.mxu0 0.0
  %1835 = vmatmul.mubr.f32.gmra.mrb[0].mxu0 %v1743
  %v1836 = vpop.f32.mrb[0].mxu0
  %v1837 = vadd.f32 0.0, %v1836
  %v1838 = vpop.f32.mrb[0].mxu0
  %1839 = vdwg.mxu0
  %v1840 = vadd.f32 %v1709, %v1812
  %v1841 = vadd.f32 %v1710, %v1817
  %v1842 = vadd.f32 %v1711, %v1822
  %v1843 = vadd.f32 %v1712, %v1827
  %v1844 = vadd.f32 %v1713, %v1832
  %v1845 = vadd.f32 %v1714, %v1837
  %v1846 = vxor.u32 %v1840, 2147483648
  %v1847 = vxor.u32 %v1841, 2147483648
  %v1848 = vxor.u32 %v1842, 2147483648
  %v1849 = vxor.u32 %v1843, 2147483648
  %v1850 = vxor.u32 %v1844, 2147483648
  %v1851 = vxor.u32 %v1845, 2147483648
  %v1852 = vmul.f32 %v1846, 1.442695
  %v1853 = vpow.pop %v1852
  %v1854 = vmul.f32 %v1847, 1.442695
  %v1855 = vpow.pop %v1854
  %v1856 = vmul.f32 %v1848, 1.442695
  %v1857 = vpow.pop %v1856
  %v1858 = vmul.f32 %v1849, 1.442695
  %v1859 = vpow.pop %v1858
  %v1860 = vmul.f32 %v1850, 1.442695
  %v1861 = vpow.pop %v1860
  %v1862 = vmul.f32 %v1851, 1.442695
  %v1863 = vpow.pop %v1862
  %v1864 = vadd.f32 %v1853, 1.0
  %v1865 = vadd.f32 %v1855, 1.0
  %v1866 = vadd.f32 %v1857, 1.0
  %v1867 = vadd.f32 %v1859, 1.0
  %v1868 = vadd.f32 %v1861, 1.0
  %v1869 = vadd.f32 %v1863, 1.0
  %v1870 = vrcp.pop %v1864
  %v1871 = vmul.f32 1.0, %v1870
  %v1872 = vrcp.pop %v1865
  %v1873 = vmul.f32 1.0, %v1872
  %v1874 = vrcp.pop %v1866
  %v1875 = vmul.f32 1.0, %v1874
  %v1876 = vrcp.pop %v1867
  %v1877 = vmul.f32 1.0, %v1876
  %v1878 = vrcp.pop %v1868
  %v1879 = vmul.f32 1.0, %v1878
  %v1880 = vrcp.pop %v1869
  %v1881 = vmul.f32 1.0, %v1880
  %v1882 = vtanh.pop %v1840
  %v1883 = vtanh.pop %v1841
  %v1884 = vtanh.pop %v1842
  %v1885 = vtanh.pop %v1843
  %v1886 = vtanh.pop %v1844
  %v1887 = vtanh.pop %v1845
  %v1888 = vmul.f32 %v1871, %v1667
  %v1889 = vmul.f32 %v1873, %v1668
  %v1890 = vmul.f32 %v1875, %v1669
  %v1891 = vmul.f32 %v1877, %v1670
  %v1892 = vmul.f32 %v1879, %v1671
  %v1893 = vmul.f32 %v1881, %v1672
  %1900 = vrot.lane.b32.xlu0 %v1882, 64
  %v1901 = vpop.permute.xlu0 %1900
  %1902 = vrot.lane.b32.xlu0 %v1883, 64
  %v1903 = vpop.permute.xlu0 %1902
  %1904 = vrot.lane.b32.xlu0 %v1884, 64
  %v1905 = vpop.permute.xlu0 %1904
  %1906 = vrot.lane.b32.xlu0 %v1885, 64
  %v1907 = vpop.permute.xlu0 %1906
  %1908 = vrot.lane.b32.xlu0 %v1886, 64
  %v1909 = vpop.permute.xlu0 %1908
  %1910 = vrot.lane.b32.xlu0 %v1887, 64
  %v1911 = vpop.permute.xlu0 %1910
  %v1918 = vmul.f32 %v1871, %v1901
  %v1919 = vmul.f32 %v1873, %v1903
  %v1920 = vmul.f32 %v1875, %v1905
  %v1921 = vmul.f32 %v1877, %v1907
  %v1922 = vmul.f32 %v1879, %v1909
  %v1923 = vmul.f32 %v1881, %v1911
  %1930 = vrot.lane.b32.xlu0 %v1918, 32
  %v1931 = vpop.permute.xlu0 %1930
  %1932 = vrot.lane.b32.xlu0 %v1919, 32
  %v1933 = vpop.permute.xlu0 %1932
  %1934 = vrot.lane.b32.xlu0 %v1920, 32
  %v1935 = vpop.permute.xlu0 %1934
  %1936 = vrot.lane.b32.xlu0 %v1921, 32
  %v1937 = vpop.permute.xlu0 %1936
  %1938 = vrot.lane.b32.xlu0 %v1922, 32
  %v1939 = vpop.permute.xlu0 %1938
  %1940 = vrot.lane.b32.xlu0 %v1923, 32
  %v1941 = vpop.permute.xlu0 %1940
  %v1948 = vadd.f32 %v1888, %v1931
  %v1949 = vadd.f32 %v1889, %v1933
  %v1950 = vadd.f32 %v1890, %v1935
  %v1951 = vadd.f32 %v1891, %v1937
  %v1952 = vadd.f32 %v1892, %v1939
  %v1953 = vadd.f32 %v1893, %v1941
  %v1954 = vtanh.pop %v1948
  %v1955 = vtanh.pop %v1949
  %v1956 = vtanh.pop %v1950
  %v1957 = vtanh.pop %v1951
  %v1958 = vtanh.pop %v1952
  %v1959 = vtanh.pop %v1953
  %1966 = vrot.lane.b32.xlu0 %v1954, 64
  %v1967 = vpop.permute.xlu0 %1966
  %1968 = vrot.lane.b32.xlu0 %v1955, 64
  %v1969 = vpop.permute.xlu0 %1968
  %1970 = vrot.lane.b32.xlu0 %v1956, 64
  %v1971 = vpop.permute.xlu0 %1970
  %1972 = vrot.lane.b32.xlu0 %v1957, 64
  %v1973 = vpop.permute.xlu0 %1972
  %1974 = vrot.lane.b32.xlu0 %v1958, 64
  %v1975 = vpop.permute.xlu0 %1974
  %1976 = vrot.lane.b32.xlu0 %v1959, 64
  %v1977 = vpop.permute.xlu0 %1976
  %v1984 = vmul.f32 %v1871, %v1967
  %v1985 = vmul.f32 %v1873, %v1969
  %v1986 = vmul.f32 %v1875, %v1971
  %v1987 = vmul.f32 %v1877, %v1973
  %v1988 = vmul.f32 %v1879, %v1975
  %v1989 = vmul.f32 %v1881, %v1977
  %v1990 = vld [vmem:[#allocation2 + $0xf0] sm:$0xff]
  %v1991 = vld [vmem:[#allocation2 + $0xf8] sm:$0xff]
  %v1992 = vld [vmem:[#allocation2 + $0x100] sm:$0xff]
  %v1993 = vld [vmem:[#allocation2 + $0x108] sm:$0xff]
  %v1994 = vld [vmem:[#allocation2 + $0x110] sm:$0xff]
  %v1995 = vld [vmem:[#allocation2 + $0x118] sm:$0xff]
  %2002 = vrot.lane.b32.xlu0 %v1984, 32
  %v2003 = vpop.permute.xlu0 %2002
  %2004 = vrot.lane.b32.xlu0 %v1985, 32
  %v2005 = vpop.permute.xlu0 %2004
  %2006 = vrot.lane.b32.xlu0 %v1986, 32
  %v2007 = vpop.permute.xlu0 %2006
  %2008 = vrot.lane.b32.xlu0 %v1987, 32
  %v2009 = vpop.permute.xlu0 %2008
  %2010 = vrot.lane.b32.xlu0 %v1988, 32
  %v2011 = vpop.permute.xlu0 %2010
  %2012 = vrot.lane.b32.xlu0 %v1989, 32
  %v2013 = vpop.permute.xlu0 %2012
  %v2014 = vsel %vm617, %v2003, 0
  %v2016 = vsel %vm617, %v2005, 0
  %v2018 = vsel %vm617, %v2007, 0
  %v2020 = vsel %vm617, %v2009, 0
  %v2022 = vsel %vm617, %v2011, 0
  %v2024 = vsel %vm617, %v2013, 0
  %2026 = vmatprep.subr.mxu0 0.0
  %2027 = vmatpush1.msra.mxu0 %v97
  %2028 = vmatprep.subr.mxu0 0.0
  %2029 = vmatpush1.msra.mxu0 %v98
  %2030 = vmatprep.subr.mxu0 0.0
  %2031 = vmatpush1.msra.mxu0 %v99
  %2032 = vmatprep.subr.mxu0 0.0
  %2033 = vmatpush1.msra.mxu0 %v100
  %2034 = vmatprep.subr.mxu0 0.0
  %2035 = vmatpush1.msra.mxu0 0.0
  %2036 = vmatprep.subr.mxu0 0.0
  %2037 = vmatpush1.msra.mxu0 0.0
  %2038 = vmatprep.subr.mxu0 0.0
  %2039 = vmatpush1.msra.mxu0 0.0
  %2040 = vmatprep.subr.mxu0 0.0
  %2041 = vmatpush1.msra.mxu0 0.0
  %2042 = vmatprep.subr.mxu0 0.0
  %2043 = vmatpush1.msra.mxu0 0.0
  %2044 = vmatprep.subr.mxu0 0.0
  %2045 = vmatpush1.msra.mxu0 0.0
  %2046 = vmatprep.subr.mxu0 0.0
  %2047 = vmatpush1.msra.mxu0 0.0
  %2048 = vmatprep.subr.mxu0 0.0
  %2049 = vmatpush1.msra.mxu0 0.0
  %2050 = vmatprep.subr.mxu0 0.0
  %2051 = vmatpush1.msra.mxu0 0.0
  %2052 = vmatprep.subr.mxu0 0.0
  %2053 = vmatpush1.msra.mxu0 0.0
  %2054 = vmatprep.subr.mxu0 0.0
  %2055 = vmatpush1.msra.mxu0 0.0
  %2056 = vmatprep.subr.mxu0 0.0
  %2057 = vmatpush1.msra.mxu0 0.0
  %2058 = vmatprep.subr.mxu0 0.0
  %2059 = vmatpush1.msra.mxu0 0.0
  %2060 = vmatprep.subr.mxu0 0.0
  %2061 = vmatpush1.msra.mxu0 0.0
  %2062 = vmatprep.subr.mxu0 0.0
  %2063 = vmatpush1.msra.mxu0 0.0
  %2064 = vmatprep.subr.mxu0 0.0
  %2065 = vmatpush1.msra.mxu0 0.0
  %2066 = vmatprep.subr.mxu0 0.0
  %2067 = vmatpush1.msra.mxu0 0.0
  %2068 = vmatprep.subr.mxu0 0.0
  %2069 = vmatpush1.msra.mxu0 0.0
  %2070 = vmatprep.subr.mxu0 0.0
  %2071 = vmatpush1.msra.mxu0 0.0
  %2072 = vmatprep.subr.mxu0 0.0
  %2073 = vmatpush1.msra.mxu0 0.0
  %2074 = vmatprep.subr.mxu0 0.0
  %2075 = vmatpush1.msra.mxu0 0.0
  %2076 = vmatprep.subr.mxu0 0.0
  %2077 = vmatpush1.msra.mxu0 0.0
  %2078 = vmatprep.subr.mxu0 0.0
  %2079 = vmatpush1.msra.mxu0 0.0
  %2080 = vmatprep.subr.mxu0 0.0
  %2081 = vmatpush1.msra.mxu0 0.0
  %2082 = vmatprep.subr.mxu0 0.0
  %2083 = vmatpush1.msra.mxu0 0.0
  %2084 = vmatprep.subr.mxu0 0.0
  %2085 = vmatpush1.msra.mxu0 0.0
  %2086 = vmatprep.subr.mxu0 0.0
  %2087 = vmatpush1.msra.mxu0 0.0
  %2088 = vmatprep.subr.mxu0 0.0
  %2089 = vmatpush1.msra.mxu0 0.0
  %2090 = vmatprep.mubr.f32.mxu0 0.0
  %2091 = vmatmul.mubr.f32.gmra.mrb[0].mxu0 %v2014
  %v2092 = vpop.f32.mrb[0].mxu0
  %v2093 = vadd.f32 0.0, %v2092
  %v2094 = vpop.f32.mrb[0].mxu0
  %2095 = vmatprep.mubr.f32.mxu0 0.0
  %2096 = vmatmul.mubr.f32.gmra.mrb[0].mxu0 %v2016
  %v2097 = vpop.f32.mrb[0].mxu0
  %v2098 = vadd.f32 0.0, %v2097
  %v2099 = vpop.f32.mrb[0].mxu0
  %2100 = vmatprep.mubr.f32.mxu0 0.0
  %2101 = vmatmul.mubr.f32.gmra.mrb[0].mxu0 %v2018
  %v2102 = vpop.f32.mrb[0].mxu0
  %v2103 = vadd.f32 0.0, %v2102
  %v2104 = vpop.f32.mrb[0].mxu0
  %2105 = vmatprep.mubr.f32.mxu0 0.0
  %2106 = vmatmul.mubr.f32.gmra.mrb[0].mxu0 %v2020
  %v2107 = vpop.f32.mrb[0].mxu0
  %v2108 = vadd.f32 0.0, %v2107
  %v2109 = vpop.f32.mrb[0].mxu0
  %2110 = vmatprep.mubr.f32.mxu0 0.0
  %2111 = vmatmul.mubr.f32.gmra.mrb[0].mxu0 %v2022
  %v2112 = vpop.f32.mrb[0].mxu0
  %v2113 = vadd.f32 0.0, %v2112
  %v2114 = vpop.f32.mrb[0].mxu0
  %2115 = vmatprep.mubr.f32.mxu0 0.0
  %2116 = vmatmul.mubr.f32.gmra.mrb[0].mxu0 %v2024
  %v2117 = vpop.f32.mrb[0].mxu0
  %v2118 = vadd.f32 0.0, %v2117
  %v2119 = vpop.f32.mrb[0].mxu0
  %2120 = vdwg.mxu0
  %v2121 = vadd.f32 %v1990, %v2093
  %v2122 = vadd.f32 %v1991, %v2098
  %v2123 = vadd.f32 %v1992, %v2103
  %v2124 = vadd.f32 %v1993, %v2108
  %v2125 = vadd.f32 %v1994, %v2113
  %v2126 = vadd.f32 %v1995, %v2118
  %v2127 = vxor.u32 %v2121, 2147483648
  %v2128 = vxor.u32 %v2122, 2147483648
  %v2129 = vxor.u32 %v2123, 2147483648
  %v2130 = vxor.u32 %v2124, 2147483648
  %v2131 = vxor.u32 %v2125, 2147483648
  %v2132 = vxor.u32 %v2126, 2147483648
  %v2133 = vmul.f32 %v2127, 1.442695
  %v2134 = vpow.pop %v2133
  %v2135 = vmul.f32 %v2128, 1.442695
  %v2136 = vpow.pop %v2135
  %v2137 = vmul.f32 %v2129, 1.442695
  %v2138 = vpow.pop %v2137
  %v2139 = vmul.f32 %v2130, 1.442695
  %v2140 = vpow.pop %v2139
  %v2141 = vmul.f32 %v2131, 1.442695
  %v2142 = vpow.pop %v2141
  %v2143 = vmul.f32 %v2132, 1.442695
  %v2144 = vpow.pop %v2143
  %v2145 = vadd.f32 %v2134, 1.0
  %v2146 = vadd.f32 %v2136, 1.0
  %v2147 = vadd.f32 %v2138, 1.0
  %v2148 = vadd.f32 %v2140, 1.0
  %v2149 = vadd.f32 %v2142, 1.0
  %v2150 = vadd.f32 %v2144, 1.0
  %v2151 = vrcp.pop %v2145
  %v2152 = vmul.f32 1.0, %v2151
  %v2153 = vrcp.pop %v2146
  %v2154 = vmul.f32 1.0, %v2153
  %v2155 = vrcp.pop %v2147
  %v2156 = vmul.f32 1.0, %v2155
  %v2157 = vrcp.pop %v2148
  %v2158 = vmul.f32 1.0, %v2157
  %v2159 = vrcp.pop %v2149
  %v2160 = vmul.f32 1.0, %v2159
  %v2161 = vrcp.pop %v2150
  %v2162 = vmul.f32 1.0, %v2161
  %v2163 = vtanh.pop %v2121
  %v2164 = vtanh.pop %v2122
  %v2165 = vtanh.pop %v2123
  %v2166 = vtanh.pop %v2124
  %v2167 = vtanh.pop %v2125
  %v2168 = vtanh.pop %v2126
  %v2169 = vmul.f32 %v2152, %v1948
  %v2170 = vmul.f32 %v2154, %v1949
  %v2171 = vmul.f32 %v2156, %v1950
  %v2172 = vmul.f32 %v2158, %v1951
  %v2173 = vmul.f32 %v2160, %v1952
  %v2174 = vmul.f32 %v2162, %v1953
  %2181 = vrot.lane.b32.xlu0 %v2163, 64
  %v2182 = vpop.permute.xlu0 %2181
  %2183 = vrot.lane.b32.xlu0 %v2164, 64
  %v2184 = vpop.permute.xlu0 %2183
  %2185 = vrot.lane.b32.xlu0 %v2165, 64
  %v2186 = vpop.permute.xlu0 %2185
  %2187 = vrot.lane.b32.xlu0 %v2166, 64
  %v2188 = vpop.permute.xlu0 %2187
  %2189 = vrot.lane.b32.xlu0 %v2167, 64
  %v2190 = vpop.permute.xlu0 %2189
  %2191 = vrot.lane.b32.xlu0 %v2168, 64
  %v2192 = vpop.permute.xlu0 %2191
  %v2199 = vmul.f32 %v2152, %v2182
  %v2200 = vmul.f32 %v2154, %v2184
  %v2201 = vmul.f32 %v2156, %v2186
  %v2202 = vmul.f32 %v2158, %v2188
  %v2203 = vmul.f32 %v2160, %v2190
  %v2204 = vmul.f32 %v2162, %v2192
  %2211 = vrot.lane.b32.xlu0 %v2199, 32
  %v2212 = vpop.permute.xlu0 %2211
  %2213 = vrot.lane.b32.xlu0 %v2200, 32
  %v2214 = vpop.permute.xlu0 %2213
  %2215 = vrot.lane.b32.xlu0 %v2201, 32
  %v2216 = vpop.permute.xlu0 %2215
  %2217 = vrot.lane.b32.xlu0 %v2202, 32
  %v2218 = vpop.permute.xlu0 %2217
  %2219 = vrot.lane.b32.xlu0 %v2203, 32
  %v2220 = vpop.permute.xlu0 %2219
  %2221 = vrot.lane.b32.xlu0 %v2204, 32
  %v2222 = vpop.permute.xlu0 %2221
  %v2229 = vadd.f32 %v2169, %v2212
  %v2230 = vadd.f32 %v2170, %v2214
  %v2231 = vadd.f32 %v2171, %v2216
  %v2232 = vadd.f32 %v2172, %v2218
  %v2233 = vadd.f32 %v2173, %v2220
  %v2234 = vadd.f32 %v2174, %v2222
  %v2235 = vtanh.pop %v2229
  %v2236 = vtanh.pop %v2230
  %v2237 = vtanh.pop %v2231
  %v2238 = vtanh.pop %v2232
  %v2239 = vtanh.pop %v2233
  %v2240 = vtanh.pop %v2234
  %2247 = vrot.lane.b32.xlu0 %v2235, 64
  %v2248 = vpop.permute.xlu0 %2247
  %2249 = vrot.lane.b32.xlu0 %v2236, 64
  %v2250 = vpop.permute.xlu0 %2249
  %2251 = vrot.lane.b32.xlu0 %v2237, 64
  %v2252 = vpop.permute.xlu0 %2251
  %2253 = vrot.lane.b32.xlu0 %v2238, 64
  %v2254 = vpop.permute.xlu0 %2253
  %2255 = vrot.lane.b32.xlu0 %v2239, 64
  %v2256 = vpop.permute.xlu0 %2255
  %2257 = vrot.lane.b32.xlu0 %v2240, 64
  %v2258 = vpop.permute.xlu0 %2257
  %v2265 = vmul.f32 %v2152, %v2248
  %v2266 = vmul.f32 %v2154, %v2250
  %v2267 = vmul.f32 %v2156, %v2252
  %v2268 = vmul.f32 %v2158, %v2254
  %v2269 = vmul.f32 %v2160, %v2256
  %v2270 = vmul.f32 %v2162, %v2258
  %v2271 = vld [vmem:[#allocation2 + $0x120] sm:$0xff]
  %v2272 = vld [vmem:[#allocation2 + $0x128] sm:$0xff]
  %v2273 = vld [vmem:[#allocation2 + $0x130] sm:$0xff]
  %v2274 = vld [vmem:[#allocation2 + $0x138] sm:$0xff]
  %v2275 = vld [vmem:[#allocation2 + $0x140] sm:$0xff]
  %v2276 = vld [vmem:[#allocation2 + $0x148] sm:$0xff]
  %2283 = vrot.lane.b32.xlu0 %v2265, 32
  %v2284 = vpop.permute.xlu0 %2283
  %2285 = vrot.lane.b32.xlu0 %v2266, 32
  %v2286 = vpop.permute.xlu0 %2285
  %2287 = vrot.lane.b32.xlu0 %v2267, 32
  %v2288 = vpop.permute.xlu0 %2287
  %2289 = vrot.lane.b32.xlu0 %v2268, 32
  %v2290 = vpop.permute.xlu0 %2289
  %2291 = vrot.lane.b32.xlu0 %v2269, 32
  %v2292 = vpop.permute.xlu0 %2291
  %2293 = vrot.lane.b32.xlu0 %v2270, 32
  %v2294 = vpop.permute.xlu0 %2293
  %v2295 = vsel %vm617, %v2284, 0
  %v2297 = vsel %vm617, %v2286, 0
  %v2299 = vsel %vm617, %v2288, 0
  %v2301 = vsel %vm617, %v2290, 0
  %v2303 = vsel %vm617, %v2292, 0
  %v2305 = vsel %vm617, %v2294, 0
  %2307 = vmatprep.subr.mxu0 0.0
  %2308 = vmatpush1.msra.mxu0 %v97
  %2309 = vmatprep.subr.mxu0 0.0
  %2310 = vmatpush1.msra.mxu0 %v98
  %2311 = vmatprep.subr.mxu0 0.0
  %2312 = vmatpush1.msra.mxu0 %v99
  %2313 = vmatprep.subr.mxu0 0.0
  %2314 = vmatpush1.msra.mxu0 %v100
  %2315 = vmatprep.subr.mxu0 0.0
  %2316 = vmatpush1.msra.mxu0 0.0
  %2317 = vmatprep.subr.mxu0 0.0
  %2318 = vmatpush1.msra.mxu0 0.0
  %2319 = vmatprep.subr.mxu0 0.0
  %2320 = vmatpush1.msra.mxu0 0.0
  %2321 = vmatprep.subr.mxu0 0.0
  %2322 = vmatpush1.msra.mxu0 0.0
  %2323 = vmatprep.subr.mxu0 0.0
  %2324 = vmatpush1.msra.mxu0 0.0
  %2325 = vmatprep.subr.mxu0 0.0
  %2326 = vmatpush1.msra.mxu0 0.0
  %2327 = vmatprep.subr.mxu0 0.0
  %2328 = vmatpush1.msra.mxu0 0.0
  %2329 = vmatprep.subr.mxu0 0.0
  %2330 = vmatpush1.msra.mxu0 0.0
  %2331 = vmatprep.subr.mxu0 0.0
  %2332 = vmatpush1.msra.mxu0 0.0
  %2333 = vmatprep.subr.mxu0 0.0
  %2334 = vmatpush1.msra.mxu0 0.0
  %2335 = vmatprep.subr.mxu0 0.0
  %2336 = vmatpush1.msra.mxu0 0.0
  %2337 = vmatprep.subr.mxu0 0.0
  %2338 = vmatpush1.msra.mxu0 0.0
  %2339 = vmatprep.subr.mxu0 0.0
  %2340 = vmatpush1.msra.mxu0 0.0
  %2341 = vmatprep.subr.mxu0 0.0
  %2342 = vmatpush1.msra.mxu0 0.0
  %2343 = vmatprep.subr.mxu0 0.0
  %2344 = vmatpush1.msra.mxu0 0.0
  %2345 = vmatprep.subr.mxu0 0.0
  %2346 = vmatpush1.msra.mxu0 0.0
  %2347 = vmatprep.subr.mxu0 0.0
  %2348 = vmatpush1.msra.mxu0 0.0
  %2349 = vmatprep.subr.mxu0 0.0
  %2350 = vmatpush1.msra.mxu0 0.0
  %2351 = vmatprep.subr.mxu0 0.0
  %2352 = vmatpush1.msra.mxu0 0.0
  %2353 = vmatprep.subr.mxu0 0.0
  %2354 = vmatpush1.msra.mxu0 0.0
  %2355 = vmatprep.subr.mxu0 0.0
  %2356 = vmatpush1.msra.mxu0 0.0
  %2357 = vmatprep.subr.mxu0 0.0
  %2358 = vmatpush1.msra.mxu0 0.0
  %2359 = vmatprep.subr.mxu0 0.0
  %2360 = vmatpush1.msra.mxu0 0.0
  %2361 = vmatprep.subr.mxu0 0.0
  %2362 = vmatpush1.msra.mxu0 0.0
  %2363 = vmatprep.subr.mxu0 0.0
  %2364 = vmatpush1.msra.mxu0 0.0
  %2365 = vmatprep.subr.mxu0 0.0
  %2366 = vmatpush1.msra.mxu0 0.0
  %2367 = vmatprep.subr.mxu0 0.0
  %2368 = vmatpush1.msra.mxu0 0.0
  %2369 = vmatprep.subr.mxu0 0.0
  %2370 = vmatpush1.msra.mxu0 0.0
  %2371 = vmatprep.mubr.f32.mxu0 0.0
  %2372 = vmatmul.mubr.f32.gmra.mrb[0].mxu0 %v2295
  %v2373 = vpop.f32.mrb[0].mxu0
  %v2374 = vadd.f32 0.0, %v2373
  %v2375 = vpop.f32.mrb[0].mxu0
  %2376 = vmatprep.mubr.f32.mxu0 0.0
  %2377 = vmatmul.mubr.f32.gmra.mrb[0].mxu0 %v2297
  %v2378 = vpop.f32.mrb[0].mxu0
  %v2379 = vadd.f32 0.0, %v2378
  %v2380 = vpop.f32.mrb[0].mxu0
  %2381 = vmatprep.mubr.f32.mxu0 0.0
  %2382 = vmatmul.mubr.f32.gmra.mrb[0].mxu0 %v2299
  %v2383 = vpop.f32.mrb[0].mxu0
  %v2384 = vadd.f32 0.0, %v2383
  %v2385 = vpop.f32.mrb[0].mxu0
  %2386 = vmatprep.mubr.f32.mxu0 0.0
  %2387 = vmatmul.mubr.f32.gmra.mrb[0].mxu0 %v2301
  %v2388 = vpop.f32.mrb[0].mxu0
  %v2389 = vadd.f32 0.0, %v2388
  %v2390 = vpop.f32.mrb[0].mxu0
  %2391 = vmatprep.mubr.f32.mxu0 0.0
  %2392 = vmatmul.mubr.f32.gmra.mrb[0].mxu0 %v2303
  %v2393 = vpop.f32.mrb[0].mxu0
  %v2394 = vadd.f32 0.0, %v2393
  %v2395 = vpop.f32.mrb[0].mxu0
  %2396 = vmatprep.mubr.f32.mxu0 0.0
  %2397 = vmatmul.mubr.f32.gmra.mrb[0].mxu0 %v2305
  %v2398 = vpop.f32.mrb[0].mxu0
  %v2399 = vadd.f32 0.0, %v2398
  %v2400 = vpop.f32.mrb[0].mxu0
  %2401 = vdwg.mxu0
  %v2402 = vadd.f32 %v2271, %v2374
  %v2403 = vadd.f32 %v2272, %v2379
  %v2404 = vadd.f32 %v2273, %v2384
  %v2405 = vadd.f32 %v2274, %v2389
  %v2406 = vadd.f32 %v2275, %v2394
  %v2407 = vadd.f32 %v2276, %v2399
  %v2408 = vxor.u32 %v2402, 2147483648
  %v2409 = vxor.u32 %v2403, 2147483648
  %v2410 = vxor.u32 %v2404, 2147483648
  %v2411 = vxor.u32 %v2405, 2147483648
  %v2412 = vxor.u32 %v2406, 2147483648
  %v2413 = vxor.u32 %v2407, 2147483648
  %v2414 = vmul.f32 %v2408, 1.442695
  %v2415 = vpow.pop %v2414
  %v2416 = vmul.f32 %v2409, 1.442695
  %v2417 = vpow.pop %v2416
  %v2418 = vmul.f32 %v2410, 1.442695
  %v2419 = vpow.pop %v2418
  %v2420 = vmul.f32 %v2411, 1.442695
  %v2421 = vpow.pop %v2420
  %v2422 = vmul.f32 %v2412, 1.442695
  %v2423 = vpow.pop %v2422
  %v2424 = vmul.f32 %v2413, 1.442695
  %v2425 = vpow.pop %v2424
  %v2426 = vadd.f32 %v2415, 1.0
  %v2427 = vadd.f32 %v2417, 1.0
  %v2428 = vadd.f32 %v2419, 1.0
  %v2429 = vadd.f32 %v2421, 1.0
  %v2430 = vadd.f32 %v2423, 1.0
  %v2431 = vadd.f32 %v2425, 1.0
  %v2432 = vrcp.pop %v2426
  %v2433 = vmul.f32 1.0, %v2432
  %v2434 = vrcp.pop %v2427
  %v2435 = vmul.f32 1.0, %v2434
  %v2436 = vrcp.pop %v2428
  %v2437 = vmul.f32 1.0, %v2436
  %v2438 = vrcp.pop %v2429
  %v2439 = vmul.f32 1.0, %v2438
  %v2440 = vrcp.pop %v2430
  %v2441 = vmul.f32 1.0, %v2440
  %v2442 = vrcp.pop %v2431
  %v2443 = vmul.f32 1.0, %v2442
  %v2444 = vtanh.pop %v2402
  %v2445 = vtanh.pop %v2403
  %v2446 = vtanh.pop %v2404
  %v2447 = vtanh.pop %v2405
  %v2448 = vtanh.pop %v2406
  %v2449 = vtanh.pop %v2407
  %v2450 = vmul.f32 %v2433, %v2229
  %v2451 = vmul.f32 %v2435, %v2230
  %v2452 = vmul.f32 %v2437, %v2231
  %v2453 = vmul.f32 %v2439, %v2232
  %v2454 = vmul.f32 %v2441, %v2233
  %v2455 = vmul.f32 %v2443, %v2234
  %2462 = vrot.lane.b32.xlu0 %v2444, 64
  %v2463 = vpop.permute.xlu0 %2462
  %2464 = vrot.lane.b32.xlu0 %v2445, 64
  %v2465 = vpop.permute.xlu0 %2464
  %2466 = vrot.lane.b32.xlu0 %v2446, 64
  %v2467 = vpop.permute.xlu0 %2466
  %2468 = vrot.lane.b32.xlu0 %v2447, 64
  %v2469 = vpop.permute.xlu0 %2468
  %2470 = vrot.lane.b32.xlu0 %v2448, 64
  %v2471 = vpop.permute.xlu0 %2470
  %2472 = vrot.lane.b32.xlu0 %v2449, 64
  %v2473 = vpop.permute.xlu0 %2472
  %v2480 = vmul.f32 %v2433, %v2463
  %v2481 = vmul.f32 %v2435, %v2465
  %v2482 = vmul.f32 %v2437, %v2467
  %v2483 = vmul.f32 %v2439, %v2469
  %v2484 = vmul.f32 %v2441, %v2471
  %v2485 = vmul.f32 %v2443, %v2473
  %2492 = vrot.lane.b32.xlu0 %v2480, 32
  %v2493 = vpop.permute.xlu0 %2492
  %2494 = vrot.lane.b32.xlu0 %v2481, 32
  %v2495 = vpop.permute.xlu0 %2494
  %2496 = vrot.lane.b32.xlu0 %v2482, 32
  %v2497 = vpop.permute.xlu0 %2496
  %2498 = vrot.lane.b32.xlu0 %v2483, 32
  %v2499 = vpop.permute.xlu0 %2498
  %2500 = vrot.lane.b32.xlu0 %v2484, 32
  %v2501 = vpop.permute.xlu0 %2500
  %2502 = vrot.lane.b32.xlu0 %v2485, 32
  %v2503 = vpop.permute.xlu0 %2502
  %v2510 = vadd.f32 %v2450, %v2493
  %v2511 = vadd.f32 %v2451, %v2495
  %v2512 = vadd.f32 %v2452, %v2497
  %v2513 = vadd.f32 %v2453, %v2499
  %v2514 = vadd.f32 %v2454, %v2501
  %v2515 = vadd.f32 %v2455, %v2503
  %v2516 = vtanh.pop %v2510
  %v2517 = vtanh.pop %v2511
  %v2518 = vtanh.pop %v2512
  %v2519 = vtanh.pop %v2513
  %v2520 = vtanh.pop %v2514
  %v2521 = vtanh.pop %v2515
  %2528 = vrot.lane.b32.xlu0 %v2516, 64
  %v2529 = vpop.permute.xlu0 %2528
  %2530 = vrot.lane.b32.xlu0 %v2517, 64
  %v2531 = vpop.permute.xlu0 %2530
  %2532 = vrot.lane.b32.xlu0 %v2518, 64
  %v2533 = vpop.permute.xlu0 %2532
  %2534 = vrot.lane.b32.xlu0 %v2519, 64
  %v2535 = vpop.permute.xlu0 %2534
  %2536 = vrot.lane.b32.xlu0 %v2520, 64
  %v2537 = vpop.permute.xlu0 %2536
  %2538 = vrot.lane.b32.xlu0 %v2521, 64
  %v2539 = vpop.permute.xlu0 %2538
  %v2546 = vmul.f32 %v2433, %v2529
  %v2547 = vmul.f32 %v2435, %v2531
  %v2548 = vmul.f32 %v2437, %v2533
  %v2549 = vmul.f32 %v2439, %v2535
  %v2550 = vmul.f32 %v2441, %v2537
  %v2551 = vmul.f32 %v2443, %v2539
  %v2552 = vld [vmem:[#allocation2 + $0x150] sm:$0xff]
  %v2553 = vld [vmem:[#allocation2 + $0x158] sm:$0xff]
  %v2554 = vld [vmem:[#allocation2 + $0x160] sm:$0xff]
  %v2555 = vld [vmem:[#allocation2 + $0x168] sm:$0xff]
  %v2556 = vld [vmem:[#allocation2 + $0x170] sm:$0xff]
  %v2557 = vld [vmem:[#allocation2 + $0x178] sm:$0xff]
  %2564 = vrot.lane.b32.xlu0 %v2546, 32
  %v2565 = vpop.permute.xlu0 %2564
  %2566 = vrot.lane.b32.xlu0 %v2547, 32
  %v2567 = vpop.permute.xlu0 %2566
  %2568 = vrot.lane.b32.xlu0 %v2548, 32
  %v2569 = vpop.permute.xlu0 %2568
  %2570 = vrot.lane.b32.xlu0 %v2549, 32
  %v2571 = vpop.permute.xlu0 %2570
  %2572 = vrot.lane.b32.xlu0 %v2550, 32
  %v2573 = vpop.permute.xlu0 %2572
  %2574 = vrot.lane.b32.xlu0 %v2551, 32
  %v2575 = vpop.permute.xlu0 %2574
  %v2576 = vsel %vm617, %v2565, 0
  %v2578 = vsel %vm617, %v2567, 0
  %v2580 = vsel %vm617, %v2569, 0
  %v2582 = vsel %vm617, %v2571, 0
  %v2584 = vsel %vm617, %v2573, 0
  %v2586 = vsel %vm617, %v2575, 0
  %2588 = vmatprep.subr.mxu0 0.0
  %2589 = vmatpush1.msra.mxu0 %v97
  %2590 = vmatprep.subr.mxu0 0.0
  %2591 = vmatpush1.msra.mxu0 %v98
  %2592 = vmatprep.subr.mxu0 0.0
  %2593 = vmatpush1.msra.mxu0 %v99
  %2594 = vmatprep.subr.mxu0 0.0
  %2595 = vmatpush1.msra.mxu0 %v100
  %2596 = vmatprep.subr.mxu0 0.0
  %2597 = vmatpush1.msra.mxu0 0.0
  %2598 = vmatprep.subr.mxu0 0.0
  %2599 = vmatpush1.msra.mxu0 0.0
  %2600 = vmatprep.subr.mxu0 0.0
  %2601 = vmatpush1.msra.mxu0 0.0
  %2602 = vmatprep.subr.mxu0 0.0
  %2603 = vmatpush1.msra.mxu0 0.0
  %2604 = vmatprep.subr.mxu0 0.0
  %2605 = vmatpush1.msra.mxu0 0.0
  %2606 = vmatprep.subr.mxu0 0.0
  %2607 = vmatpush1.msra.mxu0 0.0
  %2608 = vmatprep.subr.mxu0 0.0
  %2609 = vmatpush1.msra.mxu0 0.0
  %2610 = vmatprep.subr.mxu0 0.0
  %2611 = vmatpush1.msra.mxu0 0.0
  %2612 = vmatprep.subr.mxu0 0.0
  %2613 = vmatpush1.msra.mxu0 0.0
  %2614 = vmatprep.subr.mxu0 0.0
  %2615 = vmatpush1.msra.mxu0 0.0
  %2616 = vmatprep.subr.mxu0 0.0
  %2617 = vmatpush1.msra.mxu0 0.0
  %2618 = vmatprep.subr.mxu0 0.0
  %2619 = vmatpush1.msra.mxu0 0.0
  %2620 = vmatprep.subr.mxu0 0.0
  %2621 = vmatpush1.msra.mxu0 0.0
  %2622 = vmatprep.subr.mxu0 0.0
  %2623 = vmatpush1.msra.mxu0 0.0
  %2624 = vmatprep.subr.mxu0 0.0
  %2625 = vmatpush1.msra.mxu0 0.0
  %2626 = vmatprep.subr.mxu0 0.0
  %2627 = vmatpush1.msra.mxu0 0.0
  %2628 = vmatprep.subr.mxu0 0.0
  %2629 = vmatpush1.msra.mxu0 0.0
  %2630 = vmatprep.subr.mxu0 0.0
  %2631 = vmatpush1.msra.mxu0 0.0
  %2632 = vmatprep.subr.mxu0 0.0
  %2633 = vmatpush1.msra.mxu0 0.0
  %2634 = vmatprep.subr.mxu0 0.0
  %2635 = vmatpush1.msra.mxu0 0.0
  %2636 = vmatprep.subr.mxu0 0.0
  %2637 = vmatpush1.msra.mxu0 0.0
  %2638 = vmatprep.subr.mxu0 0.0
  %2639 = vmatpush1.msra.mxu0 0.0
  %2640 = vmatprep.subr.mxu0 0.0
  %2641 = vmatpush1.msra.mxu0 0.0
  %2642 = vmatprep.subr.mxu0 0.0
  %2643 = vmatpush1.msra.mxu0 0.0
  %2644 = vmatprep.subr.mxu0 0.0
  %2645 = vmatpush1.msra.mxu0 0.0
  %2646 = vmatprep.subr.mxu0 0.0
  %2647 = vmatpush1.msra.mxu0 0.0
  %2648 = vmatprep.subr.mxu0 0.0
  %2649 = vmatpush1.msra.mxu0 0.0
  %2650 = vmatprep.subr.mxu0 0.0
  %2651 = vmatpush1.msra.mxu0 0.0
  %2652 = vmatprep.mubr.f32.mxu0 0.0
  %2653 = vmatmul.mubr.f32.gmra.mrb[0].mxu0 %v2576
  %v2654 = vpop.f32.mrb[0].mxu0
  %v2655 = vadd.f32 0.0, %v2654
  %v2656 = vpop.f32.mrb[0].mxu0
  %2657 = vmatprep.mubr.f32.mxu0 0.0
  %2658 = vmatmul.mubr.f32.gmra.mrb[0].mxu0 %v2578
  %v2659 = vpop.f32.mrb[0].mxu0
  %v2660 = vadd.f32 0.0, %v2659
  %v2661 = vpop.f32.mrb[0].mxu0
  %2662 = vmatprep.mubr.f32.mxu0 0.0
  %2663 = vmatmul.mubr.f32.gmra.mrb[0].mxu0 %v2580
  %v2664 = vpop.f32.mrb[0].mxu0
  %v2665 = vadd.f32 0.0, %v2664
  %v2666 = vpop.f32.mrb[0].mxu0
  %2667 = vmatprep.mubr.f32.mxu0 0.0
  %2668 = vmatmul.mubr.f32.gmra.mrb[0].mxu0 %v2582
  %v2669 = vpop.f32.mrb[0].mxu0
  %v2670 = vadd.f32 0.0, %v2669
  %v2671 = vpop.f32.mrb[0].mxu0
  %2672 = vmatprep.mubr.f32.mxu0 0.0
  %2673 = vmatmul.mubr.f32.gmra.mrb[0].mxu0 %v2584
  %v2674 = vpop.f32.mrb[0].mxu0
  %v2675 = vadd.f32 0.0, %v2674
  %v2676 = vpop.f32.mrb[0].mxu0
  %2677 = vmatprep.mubr.f32.mxu0 0.0
  %2678 = vmatmul.mubr.f32.gmra.mrb[0].mxu0 %v2586
  %v2679 = vpop.f32.mrb[0].mxu0
  %v2680 = vadd.f32 0.0, %v2679
  %v2681 = vpop.f32.mrb[0].mxu0
  %2682 = vdwg.mxu0
  %v2683 = vadd.f32 %v2552, %v2655
  %v2684 = vadd.f32 %v2553, %v2660
  %v2685 = vadd.f32 %v2554, %v2665
  %v2686 = vadd.f32 %v2555, %v2670
  %v2687 = vadd.f32 %v2556, %v2675
  %v2688 = vadd.f32 %v2557, %v2680
  %v2689 = vxor.u32 %v2683, 2147483648
  %v2690 = vxor.u32 %v2684, 2147483648
  %v2691 = vxor.u32 %v2685, 2147483648
  %v2692 = vxor.u32 %v2686, 2147483648
  %v2693 = vxor.u32 %v2687, 2147483648
  %v2694 = vxor.u32 %v2688, 2147483648
  %v2695 = vmul.f32 %v2689, 1.442695
  %v2696 = vpow.pop %v2695
  %v2697 = vmul.f32 %v2690, 1.442695
  %v2698 = vpow.pop %v2697
  %v2699 = vmul.f32 %v2691, 1.442695
  %v2700 = vpow.pop %v2699
  %v2701 = vmul.f32 %v2692, 1.442695
  %v2702 = vpow.pop %v2701
  %v2703 = vmul.f32 %v2693, 1.442695
  %v2704 = vpow.pop %v2703
  %v2705 = vmul.f32 %v2694, 1.442695
  %v2706 = vpow.pop %v2705
  %v2707 = vadd.f32 %v2696, 1.0
  %v2708 = vadd.f32 %v2698, 1.0
  %v2709 = vadd.f32 %v2700, 1.0
  %v2710 = vadd.f32 %v2702, 1.0
  %v2711 = vadd.f32 %v2704, 1.0
  %v2712 = vadd.f32 %v2706, 1.0
  %v2713 = vrcp.pop %v2707
  %v2714 = vmul.f32 1.0, %v2713
  %v2715 = vrcp.pop %v2708
  %v2716 = vmul.f32 1.0, %v2715
  %v2717 = vrcp.pop %v2709
  %v2718 = vmul.f32 1.0, %v2717
  %v2719 = vrcp.pop %v2710
  %v2720 = vmul.f32 1.0, %v2719
  %v2721 = vrcp.pop %v2711
  %v2722 = vmul.f32 1.0, %v2721
  %v2723 = vrcp.pop %v2712
  %v2724 = vmul.f32 1.0, %v2723
  %v2725 = vtanh.pop %v2683
  %v2726 = vtanh.pop %v2684
  %v2727 = vtanh.pop %v2685
  %v2728 = vtanh.pop %v2686
  %v2729 = vtanh.pop %v2687
  %v2730 = vtanh.pop %v2688
  %v2731 = vmul.f32 %v2714, %v2510
  %v2732 = vmul.f32 %v2716, %v2511
  %v2733 = vmul.f32 %v2718, %v2512
  %v2734 = vmul.f32 %v2720, %v2513
  %v2735 = vmul.f32 %v2722, %v2514
  %v2736 = vmul.f32 %v2724, %v2515
  %2743 = vrot.lane.b32.xlu0 %v2725, 64
  %v2744 = vpop.permute.xlu0 %2743
  %2745 = vrot.lane.b32.xlu0 %v2726, 64
  %v2746 = vpop.permute.xlu0 %2745
  %2747 = vrot.lane.b32.xlu0 %v2727, 64
  %v2748 = vpop.permute.xlu0 %2747
  %2749 = vrot.lane.b32.xlu0 %v2728, 64
  %v2750 = vpop.permute.xlu0 %2749
  %2751 = vrot.lane.b32.xlu0 %v2729, 64
  %v2752 = vpop.permute.xlu0 %2751
  %2753 = vrot.lane.b32.xlu0 %v2730, 64
  %v2754 = vpop.permute.xlu0 %2753
  %v2761 = vmul.f32 %v2714, %v2744
  %v2762 = vmul.f32 %v2716, %v2746
  %v2763 = vmul.f32 %v2718, %v2748
  %v2764 = vmul.f32 %v2720, %v2750
  %v2765 = vmul.f32 %v2722, %v2752
  %v2766 = vmul.f32 %v2724, %v2754
  %2773 = vrot.lane.b32.xlu0 %v2761, 32
  %v2774 = vpop.permute.xlu0 %2773
  %2775 = vrot.lane.b32.xlu0 %v2762, 32
  %v2776 = vpop.permute.xlu0 %2775
  %2777 = vrot.lane.b32.xlu0 %v2763, 32
  %v2778 = vpop.permute.xlu0 %2777
  %2779 = vrot.lane.b32.xlu0 %v2764, 32
  %v2780 = vpop.permute.xlu0 %2779
  %2781 = vrot.lane.b32.xlu0 %v2765, 32
  %v2782 = vpop.permute.xlu0 %2781
  %2783 = vrot.lane.b32.xlu0 %v2766, 32
  %v2784 = vpop.permute.xlu0 %2783
  %v2791 = vadd.f32 %v2731, %v2774
  %v2792 = vadd.f32 %v2732, %v2776
  %v2793 = vadd.f32 %v2733, %v2778
  %v2794 = vadd.f32 %v2734, %v2780
  %v2795 = vadd.f32 %v2735, %v2782
  %v2796 = vadd.f32 %v2736, %v2784
  %v2797 = vtanh.pop %v2791
  %v2798 = vtanh.pop %v2792
  %v2799 = vtanh.pop %v2793
  %v2800 = vtanh.pop %v2794
  %v2801 = vtanh.pop %v2795
  %v2802 = vtanh.pop %v2796
  %2809 = vrot.lane.b32.xlu0 %v2797, 64
  %v2810 = vpop.permute.xlu0 %2809
  %2811 = vrot.lane.b32.xlu0 %v2798, 64
  %v2812 = vpop.permute.xlu0 %2811
  %2813 = vrot.lane.b32.xlu0 %v2799, 64
  %v2814 = vpop.permute.xlu0 %2813
  %2815 = vrot.lane.b32.xlu0 %v2800, 64
  %v2816 = vpop.permute.xlu0 %2815
  %2817 = vrot.lane.b32.xlu0 %v2801, 64
  %v2818 = vpop.permute.xlu0 %2817
  %2819 = vrot.lane.b32.xlu0 %v2802, 64
  %v2820 = vpop.permute.xlu0 %2819
  %v2827 = vmul.f32 %v2714, %v2810
  %v2828 = vmul.f32 %v2716, %v2812
  %v2829 = vmul.f32 %v2718, %v2814
  %v2830 = vmul.f32 %v2720, %v2816
  %v2831 = vmul.f32 %v2722, %v2818
  %v2832 = vmul.f32 %v2724, %v2820
  %v2833 = vld [vmem:[%s4] sm:$0x1]
  %v2834 = vld [vmem:[%s5] sm:$0x1]
  %v2835 = vld [vmem:[#allocation4] sm:$0x1]
  %v2837 = vlaneseq
  %v2838 = vshrl.u32 %v2837, 7
  %v2839 = vsub.s32 0, %v2838
  %v2840 = vrot.slane %v2834, %v2839
  %2841 = vrot.lane.b32.xlu0 %v2840, 96
  %v2842 = vpop.permute.xlu0 %2841
  %v2844 = vmul.f32 %v2827, %v2842
  %v2845 = vmul.f32 %v2828, %v2842
  %v2846 = vmul.f32 %v2829, %v2842
  %v2847 = vmul.f32 %v2830, %v2842
  %v2848 = vmul.f32 %v2831, %v2842
  %v2849 = vmul.f32 %v2832, %v2842
  %2856 = vrot.lane.b32.xlu0 %v2844, 32
  %v2857 = vpop.permute.xlu0 %2856
  %2858 = vrot.lane.b32.xlu0 %v2845, 32
  %v2859 = vpop.permute.xlu0 %2858
  %2860 = vrot.lane.b32.xlu0 %v2846, 32
  %v2861 = vpop.permute.xlu0 %2860
  %2862 = vrot.lane.b32.xlu0 %v2847, 32
  %v2863 = vpop.permute.xlu0 %2862
  %2864 = vrot.lane.b32.xlu0 %v2848, 32
  %v2865 = vpop.permute.xlu0 %2864
  %2866 = vrot.lane.b32.xlu0 %v2849, 32
  %v2867 = vpop.permute.xlu0 %2866
  %v2874 = vsel %vm617, %v2857, 0.0
  %2875 = vadd.xlane.f32.xlu0 %v2874
  %v2876 = vpop.xlane.xlu0 %2875
  %v2877 = vsel %vm617, %v2859, 0.0
  %2878 = vadd.xlane.f32.xlu0 %v2877
  %v2879 = vpop.xlane.xlu0 %2878
  %v2880 = vsel %vm617, %v2861, 0.0
  %2881 = vadd.xlane.f32.xlu0 %v2880
  %v2882 = vpop.xlane.xlu0 %2881
  %v2883 = vsel %vm617, %v2863, 0.0
  %2884 = vadd.xlane.f32.xlu0 %v2883
  %v2885 = vpop.xlane.xlu0 %2884
  %v2886 = vsel %vm617, %v2865, 0.0
  %2887 = vadd.xlane.f32.xlu0 %v2886
  %v2888 = vpop.xlane.xlu0 %2887
  %v2889 = vsel %vm617, %v2867, 0.0
  %2890 = vadd.xlane.f32.xlu0 %v2889
  %v2891 = vpop.xlane.xlu0 %2890
  %v2893 = vlaneseq
  %v2894 = vshrl.u32 %v2893, 7
  %v2895 = vsub.s32 0, %v2894
  %v2896 = vrot.slane %v2833, %v2895
  %2897 = vrot.lane.b32.xlu0 %v2896, 96
  %v2898 = vpop.permute.xlu0 %2897
  %v2900 = vmul.f32 %v2828, %v2898
  %v2901 = vmul.f32 %v2829, %v2898
  %v2902 = vmul.f32 %v2830, %v2898
  %2906 = vrot.lane.b32.xlu0 %v2900, 32
  %v2907 = vpop.permute.xlu0 %2906
  %2908 = vrot.lane.b32.xlu0 %v2901, 32
  %v2909 = vpop.permute.xlu0 %2908
  %2910 = vrot.lane.b32.xlu0 %v2902, 32
  %v2911 = vpop.permute.xlu0 %2910
  %v2915 = vsel %vm617, %v2907, 0.0
  %2916 = vadd.xlane.f32.xlu0 %v2915
  %v2917 = vpop.xlane.xlu0 %2916
  %v2918 = vsel %vm617, %v2909, 0.0
  %2919 = vadd.xlane.f32.xlu0 %v2918
  %v2920 = vpop.xlane.xlu0 %2919
  %v2921 = vsel %vm617, %v2911, 0.0
  %2922 = vadd.xlane.f32.xlu0 %v2921
  %v2923 = vpop.xlane.xlu0 %2922
  %v2925 = vlaneseq
  %v2926 = vshrl.u32 %v2925, 7
  %v2927 = vsub.s32 0, %v2926
  %v2928 = vrot.slane %v2835, %v2927
  %v2930 = vadd.f32 %v2917, %v2928
  %v2931 = vadd.f32 %v2920, %v2928
  %v2932 = vadd.f32 %v2923, %v2928
  %v2933 = vadd.f32 %v2876, %v2930
  %v2934 = vadd.f32 %v2879, %v2930
  %v2935 = vadd.f32 %v2882, %v2930
  %v2936 = vadd.f32 %v2885, %v2930
  %v2937 = vadd.f32 %v2888, %v2930
  %v2938 = vadd.f32 %v2891, %v2930
  %vm2939 = vcmask 7168
  %v2940 = vsel %vm2939, %v2933, -inf
  %v2941 = vsel %vm2939, %v2934, -inf
  %v2942 = vsel %vm2939, %v2935, -inf
  %v2943 = vsel %vm2939, %v2936, -inf
  %v2944 = vsel %vm2939, %v2937, -inf
  %v2945 = vmax.f32 %v2940, %v2944
  %v2946 = vsel %vm2939, %v2938, -inf
  %v2947 = vmax.f32 %v2941, %v2946
  %v2948 = vmax.f32 %v2945, %v2947
  %v2949 = vmax.f32 %v2942, %v2943
  %v2950 = vmax.f32 %v2948, %v2949
  %v2951 = vsub.f32 %v2933, %v2950
  %v2952 = vsub.f32 %v2934, %v2950
  %v2953 = vsub.f32 %v2935, %v2950
  %v2954 = vsub.f32 %v2936, %v2950
  %v2955 = vsub.f32 %v2937, %v2950
  %v2956 = vsub.f32 %v2938, %v2950
  %v2957 = vmul.f32 %v2951, 1.442695
  %v2958 = vpow.pop %v2957
  %v2959 = vmul.f32 %v2952, 1.442695
  %v2960 = vpow.pop %v2959
  %v2961 = vmul.f32 %v2953, 1.442695
  %v2962 = vpow.pop %v2961
  %v2963 = vmul.f32 %v2954, 1.442695
  %v2964 = vpow.pop %v2963
  %v2965 = vmul.f32 %v2955, 1.442695
  %v2966 = vpow.pop %v2965
  %v2967 = vmul.f32 %v2956, 1.442695
  %v2968 = vpow.pop %v2967
  %v2969 = vsel %vm2939, %v2958, 0.0
  %v2970 = vsel %vm2939, %v2960, 0.0
  %v2971 = vadd.f32 %v2969, %v2970
  %v2972 = vsel %vm2939, %v2962, 0.0
  %v2973 = vadd.f32 %v2971, %v2972
  %v2974 = vsel %vm2939, %v2964, 0.0
  %v2975 = vadd.f32 %v2973, %v2974
  %v2976 = vsel %vm2939, %v2966, 0.0
  %v2977 = vadd.f32 %v2975, %v2976
  %v2978 = vsel %vm2939, %v2968, 0.0
  %v2979 = vadd.f32 %v2977, %v2978
  %v2980 = vrcp.pop %v2979
  %v2981 = vmul.f32 %v2958, %v2980
  %v2982 = vmul.f32 %v2960, %v2980
  %v2983 = vmul.f32 %v2962, %v2980
  %v2984 = vmul.f32 %v2964, %v2980
  %v2985 = vmul.f32 %v2966, %v2980
  %v2986 = vmul.f32 %v2968, %v2980
  %2988 = vset.pattern.permute.xlu0 0
  %2989 = vperm.xlu0 %2988, %v2981
  %v2990 = vpop.permute.xlu0 %2989
  %2993 = vset.pattern.permute.xlu0 0
  %2994 = vperm.xlu0 %2993, %v2982
  %v2995 = vpop.permute.xlu0 %2994
  %2998 = vset.pattern.permute.xlu0 0
  %2999 = vperm.xlu0 %2998, %v2983
  %v3000 = vpop.permute.xlu0 %2999
  %3003 = vset.pattern.permute.xlu0 0
  %3004 = vperm.xlu0 %3003, %v2984
  %v3005 = vpop.permute.xlu0 %3004
  %3008 = vset.pattern.permute.xlu0 0
  %3009 = vperm.xlu0 %3008, %v2985
  %v3010 = vpop.permute.xlu0 %3009
  %3013 = vset.pattern.permute.xlu0 0
  %3014 = vperm.xlu0 %3013, %v2986
  %v3015 = vpop.permute.xlu0 %3014
  %v3017 = vmul.f32 %v2990, %v2827
  %v3018 = vmul.f32 %v2995, %v2828
  %v3019 = vmul.f32 %v3000, %v2829
  %v3020 = vmul.f32 %v3005, %v2830
  %v3021 = vmul.f32 %v3010, %v2831
  %v3022 = vmul.f32 %v3015, %v2832
  %vm3023 = vcmask 1048320
  %v3024 = vsel %vm3023, %v3017, 0.0
  %v3025 = vsel %vm3023, %v3018, 0.0
  %v3026 = vadd.f32 %v3024, %v3025
  %v3027 = vsel %vm3023, %v3019, 0.0
  %v3028 = vadd.f32 %v3026, %v3027
  %v3029 = vsel %vm3023, %v3020, 0.0
  %v3030 = vadd.f32 %v3028, %v3029
  %v3031 = vsel %vm3023, %v3021, 0.0
  %v3032 = vadd.f32 %v3030, %v3031
  %v3033 = vsel %vm3023, %v3022, 0.0
  %v3034 = vadd.f32 %v3032, %v3033
  %v3035 = vmul.f32 %v2990, %v2791
  %v3036 = vmul.f32 %v2995, %v2792
  %v3037 = vmul.f32 %v3000, %v2793
  %v3038 = vmul.f32 %v3005, %v2794
  %v3039 = vmul.f32 %v3010, %v2795
  %v3040 = vmul.f32 %v3015, %v2796
  %vm3041 = vcmask 523520
  %v3042 = vsel %vm3041, %v3035, 0.0
  %v3043 = vsel %vm3041, %v3036, 0.0
  %v3044 = vadd.f32 %v3042, %v3043
  %v3045 = vsel %vm3041, %v3037, 0.0
  %v3046 = vadd.f32 %v3044, %v3045
  %v3047 = vsel %vm3041, %v3038, 0.0
  %v3048 = vadd.f32 %v3046, %v3047
  %v3049 = vsel %vm3041, %v3039, 0.0
  %v3050 = vadd.f32 %v3048, %v3049
  %v3051 = vsel %vm3041, %v3040, 0.0
  %v3052 = vadd.f32 %v3050, %v3051
  %v3053 = vadd.f32 %v2876, %v2931
  %v3054 = vadd.f32 %v2879, %v2931
  %v3055 = vadd.f32 %v2882, %v2931
  %v3056 = vadd.f32 %v2885, %v2931
  %v3057 = vadd.f32 %v2888, %v2931
  %v3058 = vadd.f32 %v2891, %v2931
  %v3059 = vsel %vm2939, %v3053, -inf
  %v3060 = vsel %vm2939, %v3054, -inf
  %v3061 = vsel %vm2939, %v3055, -inf
  %v3062 = vsel %vm2939, %v3056, -inf
  %v3063 = vsel %vm2939, %v3057, -inf
  %v3064 = vmax.f32 %v3059, %v3063
  %v3065 = vsel %vm2939, %v3058, -inf
  %v3066 = vmax.f32 %v3060, %v3065
  %v3067 = vmax.f32 %v3064, %v3066
  %v3068 = vmax.f32 %v3061, %v3062
  %v3069 = vmax.f32 %v3067, %v3068
  %v3070 = vsub.f32 %v3053, %v3069
  %v3071 = vsub.f32 %v3054, %v3069
  %v3072 = vsub.f32 %v3055, %v3069
  %v3073 = vsub.f32 %v3056, %v3069
  %v3074 = vsub.f32 %v3057, %v3069
  %v3075 = vsub.f32 %v3058, %v3069
  %v3076 = vmul.f32 %v3070, 1.442695
  %v3077 = vpow.pop %v3076
  %v3078 = vmul.f32 %v3071, 1.442695
  %v3079 = vpow.pop %v3078
  %v3080 = vmul.f32 %v3072, 1.442695
  %v3081 = vpow.pop %v3080
  %v3082 = vmul.f32 %v3073, 1.442695
  %v3083 = vpow.pop %v3082
  %v3084 = vmul.f32 %v3074, 1.442695
  %v3085 = vpow.pop %v3084
  %v3086 = vmul.f32 %v3075, 1.442695
  %v3087 = vpow.pop %v3086
  %v3088 = vsel %vm2939, %v3077, 0.0
  %v3089 = vsel %vm2939, %v3079, 0.0
  %v3090 = vadd.f32 %v3088, %v3089
  %v3091 = vsel %vm2939, %v3081, 0.0
  %v3092 = vadd.f32 %v3090, %v3091
  %v3093 = vsel %vm2939, %v3083, 0.0
  %v3094 = vadd.f32 %v3092, %v3093
  %v3095 = vsel %vm2939, %v3085, 0.0
  %v3096 = vadd.f32 %v3094, %v3095
  %v3097 = vsel %vm2939, %v3087, 0.0
  %v3098 = vadd.f32 %v3096, %v3097
  %v3099 = vrcp.pop %v3098
  %v3100 = vmul.f32 %v3077, %v3099
  %v3101 = vmul.f32 %v3079, %v3099
  %v3102 = vmul.f32 %v3081, %v3099
  %v3103 = vmul.f32 %v3083, %v3099
  %v3104 = vmul.f32 %v3085, %v3099
  %v3105 = vmul.f32 %v3087, %v3099
  %3107 = vset.pattern.permute.xlu0 0
  %3108 = vperm.xlu0 %3107, %v3100
  %v3109 = vpop.permute.xlu0 %3108
  %3112 = vset.pattern.permute.xlu0 0
  %3113 = vperm.xlu0 %3112, %v3101
  %v3114 = vpop.permute.xlu0 %3113
  %3117 = vset.pattern.permute.xlu0 0
  %3118 = vperm.xlu0 %3117, %v3102
  %v3119 = vpop.permute.xlu0 %3118
  %3122 = vset.pattern.permute.xlu0 0
  %3123 = vperm.xlu0 %3122, %v3103
  %v3124 = vpop.permute.xlu0 %3123
  %3127 = vset.pattern.permute.xlu0 0
  %3128 = vperm.xlu0 %3127, %v3104
  %v3129 = vpop.permute.xlu0 %3128
  %3132 = vset.pattern.permute.xlu0 0
  %3133 = vperm.xlu0 %3132, %v3105
  %v3134 = vpop.permute.xlu0 %3133
  %v3136 = vmul.f32 %v3109, %v2827
  %v3137 = vmul.f32 %v3114, %v2828
  %v3138 = vmul.f32 %v3119, %v2829
  %v3139 = vmul.f32 %v3124, %v2830
  %v3140 = vmul.f32 %v3129, %v2831
  %v3141 = vmul.f32 %v3134, %v2832
  %v3142 = vsel %vm3023, %v3136, 0.0
  %v3143 = vsel %vm3023, %v3137, 0.0
  %v3144 = vadd.f32 %v3142, %v3143
  %v3145 = vsel %vm3023, %v3138, 0.0
  %v3146 = vadd.f32 %v3144, %v3145
  %v3147 = vsel %vm3023, %v3139, 0.0
  %v3148 = vadd.f32 %v3146, %v3147
  %v3149 = vsel %vm3023, %v3140, 0.0
  %v3150 = vadd.f32 %v3148, %v3149
  %v3151 = vsel %vm3023, %v3141, 0.0
  %v3152 = vadd.f32 %v3150, %v3151
  %v3153 = vmul.f32 %v3109, %v2791
  %v3154 = vmul.f32 %v3114, %v2792
  %v3155 = vmul.f32 %v3119, %v2793
  %v3156 = vmul.f32 %v3124, %v2794
  %v3157 = vmul.f32 %v3129, %v2795
  %v3158 = vmul.f32 %v3134, %v2796
  %v3159 = vsel %vm3041, %v3153, 0.0
  %v3160 = vsel %vm3041, %v3154, 0.0
  %v3161 = vadd.f32 %v3159, %v3160
  %v3162 = vsel %vm3041, %v3155, 0.0
  %v3163 = vadd.f32 %v3161, %v3162
  %v3164 = vsel %vm3041, %v3156, 0.0
  %v3165 = vadd.f32 %v3163, %v3164
  %v3166 = vsel %vm3041, %v3157, 0.0
  %v3167 = vadd.f32 %v3165, %v3166
  %v3168 = vsel %vm3041, %v3158, 0.0
  %v3169 = vadd.f32 %v3167, %v3168
  %v3170 = vadd.f32 %v2876, %v2932
  %v3171 = vadd.f32 %v2879, %v2932
  %v3172 = vadd.f32 %v2882, %v2932
  %v3173 = vadd.f32 %v2885, %v2932
  %v3174 = vadd.f32 %v2888, %v2932
  %v3175 = vadd.f32 %v2891, %v2932
  %v3176 = vsel %vm2939, %v3170, -inf
  %v3177 = vsel %vm2939, %v3171, -inf
  %v3178 = vsel %vm2939, %v3172, -inf
  %v3179 = vsel %vm2939, %v3173, -inf
  %v3180 = vsel %vm2939, %v3174, -inf
  %v3181 = vmax.f32 %v3176, %v3180
  %v3182 = vsel %vm2939, %v3175, -inf
  %v3183 = vmax.f32 %v3177, %v3182
  %v3184 = vmax.f32 %v3181, %v3183
  %v3185 = vmax.f32 %v3178, %v3179
  %v3186 = vmax.f32 %v3184, %v3185
  %v3187 = vsub.f32 %v3170, %v3186
  %v3188 = vsub.f32 %v3171, %v3186
  %v3189 = vsub.f32 %v3172, %v3186
  %v3190 = vsub.f32 %v3173, %v3186
  %v3191 = vsub.f32 %v3174, %v3186
  %v3192 = vsub.f32 %v3175, %v3186
  %v3193 = vmul.f32 %v3187, 1.442695
  %v3194 = vpow.pop %v3193
  %v3195 = vmul.f32 %v3188, 1.442695
  %v3196 = vpow.pop %v3195
  %v3197 = vmul.f32 %v3189, 1.442695
  %v3198 = vpow.pop %v3197
  %v3199 = vmul.f32 %v3190, 1.442695
  %v3200 = vpow.pop %v3199
  %v3201 = vmul.f32 %v3191, 1.442695
  %v3202 = vpow.pop %v3201
  %v3203 = vmul.f32 %v3192, 1.442695
  %v3204 = vpow.pop %v3203
  %v3205 = vsel %vm2939, %v3194, 0.0
  %v3206 = vsel %vm2939, %v3196, 0.0
  %v3207 = vadd.f32 %v3205, %v3206
  %v3208 = vsel %vm2939, %v3198, 0.0
  %v3209 = vadd.f32 %v3207, %v3208
  %v3210 = vsel %vm2939, %v3200, 0.0
  %v3211 = vadd.f32 %v3209, %v3210
  %v3212 = vsel %vm2939, %v3202, 0.0
  %v3213 = vadd.f32 %v3211, %v3212
  %v3214 = vsel %vm2939, %v3204, 0.0
  %v3215 = vadd.f32 %v3213, %v3214
  %v3216 = vrcp.pop %v3215
  %v3217 = vmul.f32 %v3194, %v3216
  %v3218 = vmul.f32 %v3196, %v3216
  %v3219 = vmul.f32 %v3198, %v3216
  %v3220 = vmul.f32 %v3200, %v3216
  %v3221 = vmul.f32 %v3202, %v3216
  %v3222 = vmul.f32 %v3204, %v3216
  %3224 = vset.pattern.permute.xlu0 0
  %3225 = vperm.xlu0 %3224, %v3217
  %v3226 = vpop.permute.xlu0 %3225
  %3229 = vset.pattern.permute.xlu0 0
  %3230 = vperm.xlu0 %3229, %v3218
  %v3231 = vpop.permute.xlu0 %3230
  %3234 = vset.pattern.permute.xlu0 0
  %3235 = vperm.xlu0 %3234, %v3219
  %v3236 = vpop.permute.xlu0 %3235
  %3239 = vset.pattern.permute.xlu0 0
  %3240 = vperm.xlu0 %3239, %v3220
  %v3241 = vpop.permute.xlu0 %3240
  %3244 = vset.pattern.permute.xlu0 0
  %3245 = vperm.xlu0 %3244, %v3221
  %v3246 = vpop.permute.xlu0 %3245
  %3249 = vset.pattern.permute.xlu0 0
  %3250 = vperm.xlu0 %3249, %v3222
  %v3251 = vpop.permute.xlu0 %3250
  %v3253 = vmul.f32 %v3226, %v2827
  %v3254 = vmul.f32 %v3231, %v2828
  %v3255 = vmul.f32 %v3236, %v2829
  %v3256 = vmul.f32 %v3241, %v2830
  %v3257 = vmul.f32 %v3246, %v2831
  %v3258 = vmul.f32 %v3251, %v2832
  %v3259 = vsel %vm3023, %v3253, 0.0
  %v3260 = vsel %vm3023, %v3254, 0.0
  %v3261 = vadd.f32 %v3259, %v3260
  %v3262 = vsel %vm3023, %v3255, 0.0
  %v3263 = vadd.f32 %v3261, %v3262
  %v3264 = vsel %vm3023, %v3256, 0.0
  %v3265 = vadd.f32 %v3263, %v3264
  %v3266 = vsel %vm3023, %v3257, 0.0
  %v3267 = vadd.f32 %v3265, %v3266
  %v3268 = vsel %vm3023, %v3258, 0.0
  %v3269 = vadd.f32 %v3267, %v3268
  %v3270 = vmul.f32 %v3226, %v2791
  %v3271 = vmul.f32 %v3231, %v2792
  %v3272 = vmul.f32 %v3236, %v2793
  %v3273 = vmul.f32 %v3241, %v2794
  %v3274 = vmul.f32 %v3246, %v2795
  %v3275 = vmul.f32 %v3251, %v2796
  %v3276 = vsel %vm3041, %v3270, 0.0
  %v3277 = vsel %vm3041, %v3271, 0.0
  %v3278 = vadd.f32 %v3276, %v3277
  %v3279 = vsel %vm3041, %v3272, 0.0
  %v3280 = vadd.f32 %v3278, %v3279
  %v3281 = vsel %vm3041, %v3273, 0.0
  %v3282 = vadd.f32 %v3280, %v3281
  %v3283 = vsel %vm3041, %v3274, 0.0
  %v3284 = vadd.f32 %v3282, %v3283
  %v3285 = vsel %vm3041, %v3275, 0.0
  %v3286 = vadd.f32 %v3284, %v3285
  %v3287 = vld [vmem:[%s12] sm:$0xff]
  %v3288 = vld [vmem:[%s12 + $0x8] sm:$0xff]
  %v3289 = vld [vmem:[%s12 + $0x10] sm:$0xff]
  %v3290 = vld [vmem:[%s12 + $0x18] sm:$0xff]
  %v3291 = vld [vmem:[%s13] sm:$0x1]
  %v3292 = vld [vmem:[%s8] sm:$0xff]
  %v3293 = vld [vmem:[%s8 + $0x8] sm:$0xff]
  %v3294 = vld [vmem:[%s8 + $0x10] sm:$0xff]
  %v3295 = vld [vmem:[%s8 + $0x18] sm:$0xff]
  %v3296 = vld [vmem:[%s9] sm:$0x1]
  %v3298 = vlaneseq
  %v3299 = vshrl.u32 %v3298, 7
  %v3300 = vsub.s32 0, %v3299
  %v3301 = vrot.slane %v3296, %v3300
  %3306 = vrot.lane.b32.xlu0 %v3034, 32
  %v3307 = vpop.permute.xlu0 %3306
  %3308 = vrot.lane.b32.xlu0 %v3152, 32
  %v3309 = vpop.permute.xlu0 %3308
  %3310 = vrot.lane.b32.xlu0 %v3269, 32
  %v3311 = vpop.permute.xlu0 %3310
  %v3312 = vsel %vm617, %v3307, 0
  %v3314 = vsel %vm617, %v3309, 0
  %v3316 = vsel %vm617, %v3311, 0
  %3318 = vmatprep.subr.mxu0 0.0
  %3319 = vmatpush1.msra.mxu0 %v3292
  %3320 = vmatprep.subr.mxu0 0.0
  %3321 = vmatpush1.msra.mxu0 %v3293
  %3322 = vmatprep.subr.mxu0 0.0
  %3323 = vmatpush1.msra.mxu0 %v3294
  %3324 = vmatprep.subr.mxu0 0.0
  %3325 = vmatpush1.msra.mxu0 %v3295
  %3326 = vmatprep.subr.mxu0 0.0
  %3327 = vmatpush1.msra.mxu0 0.0
  %3328 = vmatprep.subr.mxu0 0.0
  %3329 = vmatpush1.msra.mxu0 0.0
  %3330 = vmatprep.subr.mxu0 0.0
  %3331 = vmatpush1.msra.mxu0 0.0
  %3332 = vmatprep.subr.mxu0 0.0
  %3333 = vmatpush1.msra.mxu0 0.0
  %3334 = vmatprep.subr.mxu0 0.0
  %3335 = vmatpush1.msra.mxu0 0.0
  %3336 = vmatprep.subr.mxu0 0.0
  %3337 = vmatpush1.msra.mxu0 0.0
  %3338 = vmatprep.subr.mxu0 0.0
  %3339 = vmatpush1.msra.mxu0 0.0
  %3340 = vmatprep.subr.mxu0 0.0
  %3341 = vmatpush1.msra.mxu0 0.0
  %3342 = vmatprep.subr.mxu0 0.0
  %3343 = vmatpush1.msra.mxu0 0.0
  %3344 = vmatprep.subr.mxu0 0.0
  %3345 = vmatpush1.msra.mxu0 0.0
  %3346 = vmatprep.subr.mxu0 0.0
  %3347 = vmatpush1.msra.mxu0 0.0
  %3348 = vmatprep.subr.mxu0 0.0
  %3349 = vmatpush1.msra.mxu0 0.0
  %3350 = vmatprep.subr.mxu0 0.0
  %3351 = vmatpush1.msra.mxu0 0.0
  %3352 = vmatprep.subr.mxu0 0.0
  %3353 = vmatpush1.msra.mxu0 0.0
  %3354 = vmatprep.subr.mxu0 0.0
  %3355 = vmatpush1.msra.mxu0 0.0
  %3356 = vmatprep.subr.mxu0 0.0
  %3357 = vmatpush1.msra.mxu0 0.0
  %3358 = vmatprep.subr.mxu0 0.0
  %3359 = vmatpush1.msra.mxu0 0.0
  %3360 = vmatprep.subr.mxu0 0.0
  %3361 = vmatpush1.msra.mxu0 0.0
  %3362 = vmatprep.subr.mxu0 0.0
  %3363 = vmatpush1.msra.mxu0 0.0
  %3364 = vmatprep.subr.mxu0 0.0
  %3365 = vmatpush1.msra.mxu0 0.0
  %3366 = vmatprep.subr.mxu0 0.0
  %3367 = vmatpush1.msra.mxu0 0.0
  %3368 = vmatprep.subr.mxu0 0.0
  %3369 = vmatpush1.msra.mxu0 0.0
  %3370 = vmatprep.subr.mxu0 0.0
  %3371 = vmatpush1.msra.mxu0 0.0
  %3372 = vmatprep.subr.mxu0 0.0
  %3373 = vmatpush1.msra.mxu0 0.0
  %3374 = vmatprep.subr.mxu0 0.0
  %3375 = vmatpush1.msra.mxu0 0.0
  %3376 = vmatprep.subr.mxu0 0.0
  %3377 = vmatpush1.msra.mxu0 0.0
  %3378 = vmatprep.subr.mxu0 0.0
  %3379 = vmatpush1.msra.mxu0 0.0
  %3380 = vmatprep.subr.mxu0 0.0
  %3381 = vmatpush1.msra.mxu0 0.0
  %3382 = vmatprep.mubr.f32.mxu0 0.0
  %3383 = vmatmul.mubr.f32.gmra.mrb[0].mxu0 %v3312
  %v3384 = vpop.f32.mrb[0].mxu0
  %v3385 = vadd.f32 %v3301, %v3384
  %v3386 = vpop.f32.mrb[0].mxu0
  %3387 = vmatprep.mubr.f32.mxu0 0.0
  %3388 = vmatmul.mubr.f32.gmra.mrb[0].mxu0 %v3314
  %v3389 = vpop.f32.mrb[0].mxu0
  %v3390 = vadd.f32 %v3301, %v3389
  %v3391 = vpop.f32.mrb[0].mxu0
  %3392 = vmatprep.mubr.f32.mxu0 0.0
  %3393 = vmatmul.mubr.f32.gmra.mrb[0].mxu0 %v3316
  %v3394 = vpop.f32.mrb[0].mxu0
  %v3395 = vadd.f32 %v3301, %v3394
  %v3396 = vpop.f32.mrb[0].mxu0
  %3397 = vdwg.mxu0
  %v3398 = vld [vmem:[%s7] sm:$0x3]
  %v3400 = vsel %vm254, %v3398, 0
  %3402 = vmatprep.subr.mxu0 0.0
  %3403 = vmatpush1.msra.mxu0 %v3400
  %3404 = vmatprep.subr.mxu0 0.0
  %3405 = vmatpush1.msra.mxu0 0.0
  %3406 = vmatprep.subr.mxu0 0.0
  %3407 = vmatpush1.msra.mxu0 0.0
  %3408 = vmatprep.subr.mxu0 0.0
  %3409 = vmatpush1.msra.mxu0 0.0
  %3410 = vmatprep.subr.mxu0 0.0
  %3411 = vmatpush1.msra.mxu0 0.0
  %3412 = vmatprep.subr.mxu0 0.0
  %3413 = vmatpush1.msra.mxu0 0.0
  %3414 = vmatprep.subr.mxu0 0.0
  %3415 = vmatpush1.msra.mxu0 0.0
  %3416 = vmatprep.subr.mxu0 0.0
  %3417 = vmatpush1.msra.mxu0 0.0
  %3418 = vmatprep.subr.mxu0 0.0
  %3419 = vmatpush1.msra.mxu0 0.0
  %3420 = vmatprep.subr.mxu0 0.0
  %3421 = vmatpush1.msra.mxu0 0.0
  %3422 = vmatprep.subr.mxu0 0.0
  %3423 = vmatpush1.msra.mxu0 0.0
  %3424 = vmatprep.subr.mxu0 0.0
  %3425 = vmatpush1.msra.mxu0 0.0
  %3426 = vmatprep.subr.mxu0 0.0
  %3427 = vmatpush1.msra.mxu0 0.0
  %3428 = vmatprep.subr.mxu0 0.0
  %3429 = vmatpush1.msra.mxu0 0.0
  %3430 = vmatprep.subr.mxu0 0.0
  %3431 = vmatpush1.msra.mxu0 0.0
  %3432 = vmatprep.subr.mxu0 0.0
  %3433 = vmatpush1.msra.mxu0 0.0
  %3434 = vmatprep.subr.mxu0 0.0
  %3435 = vmatpush1.msra.mxu0 0.0
  %3436 = vmatprep.subr.mxu0 0.0
  %3437 = vmatpush1.msra.mxu0 0.0
  %3438 = vmatprep.subr.mxu0 0.0
  %3439 = vmatpush1.msra.mxu0 0.0
  %3440 = vmatprep.subr.mxu0 0.0
  %3441 = vmatpush1.msra.mxu0 0.0
  %3442 = vmatprep.subr.mxu0 0.0
  %3443 = vmatpush1.msra.mxu0 0.0
  %3444 = vmatprep.subr.mxu0 0.0
  %3445 = vmatpush1.msra.mxu0 0.0
  %3446 = vmatprep.subr.mxu0 0.0
  %3447 = vmatpush1.msra.mxu0 0.0
  %3448 = vmatprep.subr.mxu0 0.0
  %3449 = vmatpush1.msra.mxu0 0.0
  %3450 = vmatprep.subr.mxu0 0.0
  %3451 = vmatpush1.msra.mxu0 0.0
  %3452 = vmatprep.subr.mxu0 0.0
  %3453 = vmatpush1.msra.mxu0 0.0
  %3454 = vmatprep.subr.mxu0 0.0
  %3455 = vmatpush1.msra.mxu0 0.0
  %3456 = vmatprep.subr.mxu0 0.0
  %3457 = vmatpush1.msra.mxu0 0.0
  %3458 = vmatprep.subr.mxu0 0.0
  %3459 = vmatpush1.msra.mxu0 0.0
  %3460 = vmatprep.subr.mxu0 0.0
  %3461 = vmatpush1.msra.mxu0 0.0
  %3462 = vmatprep.subr.mxu0 0.0
  %3463 = vmatpush1.msra.mxu0 0.0
  %3464 = vmatprep.subr.mxu0 0.0
  %3465 = vmatpush1.msra.mxu0 0.0
  %3466 = vmatprep.mubr.f32.mxu0 0.0
  %3467 = vmatmul.mubr.f32.gmra.mrb[0].mxu0 %v240
  %v3468 = vpop.f32.mrb[0].mxu0
  %v3469 = vadd.f32 %v3385, %v3468
  %v3470 = vpop.f32.mrb[0].mxu0
  %3471 = vmatprep.mubr.f32.mxu0 0.0
  %3472 = vmatmul.mubr.f32.gmra.mrb[0].mxu0 %v243
  %v3473 = vpop.f32.mrb[0].mxu0
  %v3474 = vadd.f32 %v3390, %v3473
  %v3475 = vpop.f32.mrb[0].mxu0
  %3476 = vmatprep.mubr.f32.mxu0 0.0
  %3477 = vmatmul.mubr.f32.gmra.mrb[0].mxu0 %v246
  %v3478 = vpop.f32.mrb[0].mxu0
  %v3479 = vadd.f32 %v3395, %v3478
  %v3480 = vpop.f32.mrb[0].mxu0
  %3481 = vdwg.mxu0
  %v3482 = vxor.u32 %v3469, 2147483648
  %v3483 = vxor.u32 %v3474, 2147483648
  %v3484 = vxor.u32 %v3479, 2147483648
  %v3485 = vmul.f32 %v3482, 1.442695
  %v3486 = vpow.pop %v3485
  %v3487 = vmul.f32 %v3483, 1.442695
  %v3488 = vpow.pop %v3487
  %v3489 = vmul.f32 %v3484, 1.442695
  %v3490 = vpow.pop %v3489
  %v3491 = vadd.f32 %v3486, 1.0
  %v3492 = vadd.f32 %v3488, 1.0
  %v3493 = vadd.f32 %v3490, 1.0
  %v3494 = vrcp.pop %v3491
  %v3495 = vmul.f32 1.0, %v3494
  %v3496 = vrcp.pop %v3492
  %v3497 = vmul.f32 1.0, %v3496
  %v3498 = vrcp.pop %v3493
  %v3499 = vmul.f32 1.0, %v3498
  %v3500 = vtanh.pop %v3469
  %v3501 = vtanh.pop %v3474
  %v3502 = vtanh.pop %v3479
  %v3503 = vmul.f32 %v3495, %v3052
  %v3504 = vmul.f32 %v3497, %v3169
  %v3505 = vmul.f32 %v3499, %v3286
  %3509 = vrot.lane.b32.xlu0 %v3500, 64
  %v3510 = vpop.permute.xlu0 %3509
  %3511 = vrot.lane.b32.xlu0 %v3501, 64
  %v3512 = vpop.permute.xlu0 %3511
  %3513 = vrot.lane.b32.xlu0 %v3502, 64
  %v3514 = vpop.permute.xlu0 %3513
  %v3518 = vmul.f32 %v3495, %v3510
  %v3519 = vmul.f32 %v3497, %v3512
  %v3520 = vmul.f32 %v3499, %v3514
  %3524 = vrot.lane.b32.xlu0 %v3518, 32
  %v3525 = vpop.permute.xlu0 %3524
  %3526 = vrot.lane.b32.xlu0 %v3519, 32
  %v3527 = vpop.permute.xlu0 %3526
  %3528 = vrot.lane.b32.xlu0 %v3520, 32
  %v3529 = vpop.permute.xlu0 %3528
  %v3533 = vadd.f32 %v3503, %v3525
  %v3534 = vadd.f32 %v3504, %v3527
  %v3535 = vadd.f32 %v3505, %v3529
  %v3536 = vtanh.pop %v3533
  %v3537 = vtanh.pop %v3534
  %v3538 = vtanh.pop %v3535
  %3542 = vrot.lane.b32.xlu0 %v3536, 64
  %v3543 = vpop.permute.xlu0 %3542
  %3544 = vrot.lane.b32.xlu0 %v3537, 64
  %v3545 = vpop.permute.xlu0 %3544
  %3546 = vrot.lane.b32.xlu0 %v3538, 64
  %v3547 = vpop.permute.xlu0 %3546
  %v3551 = vmul.f32 %v3495, %v3543
  %v3552 = vmul.f32 %v3497, %v3545
  %v3553 = vmul.f32 %v3499, %v3547
  %3557 = vrot.lane.b32.xlu0 %v3551, 32
  %v3558 = vpop.permute.xlu0 %3557
  %3559 = vrot.lane.b32.xlu0 %v3552, 32
  %v3560 = vpop.permute.xlu0 %3559
  %3561 = vrot.lane.b32.xlu0 %v3553, 32
  %v3562 = vpop.permute.xlu0 %3561
  %3566 = vst.msk [vmem:[#allocation3] sm:$0xff] %vm617, %v3558
  %3567 = vst.msk [vmem:[#allocation3 + $0x8] sm:$0xff] %vm617, %v3560
  %3568 = vst.msk [vmem:[#allocation3 + $0x10] sm:$0xff] %vm617, %v3562
  %v3570 = vlaneseq
  %v3571 = vshrl.u32 %v3570, 7
  %v3572 = vsub.s32 0, %v3571
  %v3573 = vrot.slane %v3291, %v3572
  %v3575 = vsel %vm617, %v3558, 0
  %v3577 = vsel %vm617, %v3560, 0
  %v3579 = vsel %vm617, %v3562, 0
  %3581 = vmatprep.subr.mxu0 0.0
  %3582 = vmatpush1.msra.mxu0 %v3287
  %3583 = vmatprep.subr.mxu0 0.0
  %3584 = vmatpush1.msra.mxu0 %v3288
  %3585 = vmatprep.subr.mxu0 0.0
  %3586 = vmatpush1.msra.mxu0 %v3289
  %3587 = vmatprep.subr.mxu0 0.0
  %3588 = vmatpush1.msra.mxu0 %v3290
  %3589 = vmatprep.subr.mxu0 0.0
  %3590 = vmatpush1.msra.mxu0 0.0
  %3591 = vmatprep.subr.mxu0 0.0
  %3592 = vmatpush1.msra.mxu0 0.0
  %3593 = vmatprep.subr.mxu0 0.0
  %3594 = vmatpush1.msra.mxu0 0.0
  %3595 = vmatprep.subr.mxu0 0.0
  %3596 = vmatpush1.msra.mxu0 0.0
  %3597 = vmatprep.subr.mxu0 0.0
  %3598 = vmatpush1.msra.mxu0 0.0
  %3599 = vmatprep.subr.mxu0 0.0
  %3600 = vmatpush1.msra.mxu0 0.0
  %3601 = vmatprep.subr.mxu0 0.0
  %3602 = vmatpush1.msra.mxu0 0.0
  %3603 = vmatprep.subr.mxu0 0.0
  %3604 = vmatpush1.msra.mxu0 0.0
  %3605 = vmatprep.subr.mxu0 0.0
  %3606 = vmatpush1.msra.mxu0 0.0
  %3607 = vmatprep.subr.mxu0 0.0
  %3608 = vmatpush1.msra.mxu0 0.0
  %3609 = vmatprep.subr.mxu0 0.0
  %3610 = vmatpush1.msra.mxu0 0.0
  %3611 = vmatprep.subr.mxu0 0.0
  %3612 = vmatpush1.msra.mxu0 0.0
  %3613 = vmatprep.subr.mxu0 0.0
  %3614 = vmatpush1.msra.mxu0 0.0
  %3615 = vmatprep.subr.mxu0 0.0
  %3616 = vmatpush1.msra.mxu0 0.0
  %3617 = vmatprep.subr.mxu0 0.0
  %3618 = vmatpush1.msra.mxu0 0.0
  %3619 = vmatprep.subr.mxu0 0.0
  %3620 = vmatpush1.msra.mxu0 0.0
  %3621 = vmatprep.subr.mxu0 0.0
  %3622 = vmatpush1.msra.mxu0 0.0
  %3623 = vmatprep.subr.mxu0 0.0
  %3624 = vmatpush1.msra.mxu0 0.0
  %3625 = vmatprep.subr.mxu0 0.0
  %3626 = vmatpush1.msra.mxu0 0.0
  %3627 = vmatprep.subr.mxu0 0.0
  %3628 = vmatpush1.msra.mxu0 0.0
  %3629 = vmatprep.subr.mxu0 0.0
  %3630 = vmatpush1.msra.mxu0 0.0
  %3631 = vmatprep.subr.mxu0 0.0
  %3632 = vmatpush1.msra.mxu0 0.0
  %3633 = vmatprep.subr.mxu0 0.0
  %3634 = vmatpush1.msra.mxu0 0.0
  %3635 = vmatprep.subr.mxu0 0.0
  %3636 = vmatpush1.msra.mxu0 0.0
  %3637 = vmatprep.subr.mxu0 0.0
  %3638 = vmatpush1.msra.mxu0 0.0
  %3639 = vmatprep.subr.mxu0 0.0
  %3640 = vmatpush1.msra.mxu0 0.0
  %3641 = vmatprep.subr.mxu0 0.0
  %3642 = vmatpush1.msra.mxu0 0.0
  %3643 = vmatprep.subr.mxu0 0.0
  %3644 = vmatpush1.msra.mxu0 0.0
  %3645 = vmatprep.mubr.f32.mxu0 0.0
  %3646 = vmatmul.mubr.f32.gmra.mrb[0].mxu0 %v3575
  %v3647 = vpop.f32.mrb[0].mxu0
  %v3648 = vadd.f32 %v3573, %v3647
  %v3649 = vpop.f32.mrb[0].mxu0
  %3650 = vmatprep.mubr.f32.mxu0 0.0
  %3651 = vmatmul.mubr.f32.gmra.mrb[0].mxu0 %v3577
  %v3652 = vpop.f32.mrb[0].mxu0
  %v3653 = vadd.f32 %v3573, %v3652
  %v3654 = vpop.f32.mrb[0].mxu0
  %3655 = vmatprep.mubr.f32.mxu0 0.0
  %3656 = vmatmul.mubr.f32.gmra.mrb[0].mxu0 %v3579
  %v3657 = vpop.f32.mrb[0].mxu0
  %v3658 = vadd.f32 %v3573, %v3657
  %v3659 = vpop.f32.mrb[0].mxu0
  %3660 = vdwg.mxu0
  %v3661 = vadd.f32 %v3648, %v3385
  %v3662 = vadd.f32 %v3653, %v3390
  %v3663 = vadd.f32 %v3658, %v3395
  %v3664 = vxor.u32 %v3661, 2147483648
  %v3665 = vxor.u32 %v3662, 2147483648
  %v3666 = vxor.u32 %v3663, 2147483648
  %v3667 = vmul.f32 %v3664, 1.442695
  %v3668 = vpow.pop %v3667
  %v3669 = vmul.f32 %v3665, 1.442695
  %v3670 = vpow.pop %v3669
  %v3671 = vmul.f32 %v3666, 1.442695
  %v3672 = vpow.pop %v3671
  %v3673 = vadd.f32 %v3668, 1.0
  %v3674 = vadd.f32 %v3670, 1.0
  %v3675 = vadd.f32 %v3672, 1.0
  %v3676 = vrcp.pop %v3673
  %v3677 = vmul.f32 1.0, %v3676
  %v3678 = vrcp.pop %v3674
  %v3679 = vmul.f32 1.0, %v3678
  %v3680 = vrcp.pop %v3675
  %v3681 = vmul.f32 1.0, %v3680
  %v3682 = vtanh.pop %v3661
  %v3683 = vtanh.pop %v3662
  %v3684 = vtanh.pop %v3663
  %v3685 = vmul.f32 %v3677, %v3052
  %v3686 = vmul.f32 %v3679, %v3169
  %v3687 = vmul.f32 %v3681, %v3286
  %3691 = vrot.lane.b32.xlu0 %v3682, 64
  %v3692 = vpop.permute.xlu0 %3691
  %3693 = vrot.lane.b32.xlu0 %v3683, 64
  %v3694 = vpop.permute.xlu0 %3693
  %3695 = vrot.lane.b32.xlu0 %v3684, 64
  %v3696 = vpop.permute.xlu0 %3695
  %v3700 = vmul.f32 %v3677, %v3692
  %v3701 = vmul.f32 %v3679, %v3694
  %v3702 = vmul.f32 %v3681, %v3696
  %3706 = vrot.lane.b32.xlu0 %v3700, 32
  %v3707 = vpop.permute.xlu0 %3706
  %3708 = vrot.lane.b32.xlu0 %v3701, 32
  %v3709 = vpop.permute.xlu0 %3708
  %3710 = vrot.lane.b32.xlu0 %v3702, 32
  %v3711 = vpop.permute.xlu0 %3710
  %v3715 = vadd.f32 %v3685, %v3707
  %v3716 = vadd.f32 %v3686, %v3709
  %v3717 = vadd.f32 %v3687, %v3711
  %v3718 = vtanh.pop %v3715
  %v3719 = vtanh.pop %v3716
  %v3720 = vtanh.pop %v3717
  %3724 = vrot.lane.b32.xlu0 %v3718, 64
  %v3725 = vpop.permute.xlu0 %3724
  %3726 = vrot.lane.b32.xlu0 %v3719, 64
  %v3727 = vpop.permute.xlu0 %3726
  %3728 = vrot.lane.b32.xlu0 %v3720, 64
  %v3729 = vpop.permute.xlu0 %3728
  %v3733 = vmul.f32 %v3677, %v3725
  %v3734 = vmul.f32 %v3679, %v3727
  %v3735 = vmul.f32 %v3681, %v3729
  %3739 = vrot.lane.b32.xlu0 %v3733, 32
  %v3740 = vpop.permute.xlu0 %3739
  %3741 = vrot.lane.b32.xlu0 %v3734, 32
  %v3742 = vpop.permute.xlu0 %3741
  %3743 = vrot.lane.b32.xlu0 %v3735, 32
  %v3744 = vpop.permute.xlu0 %3743
  %3748 = vst.msk [vmem:[#allocation3 + $0x18] sm:$0xff] %vm617, %v3740
  %3749 = vst.msk [vmem:[#allocation3 + $0x20] sm:$0xff] %vm617, %v3742
  %3750 = vst.msk [vmem:[#allocation3 + $0x28] sm:$0xff] %vm617, %v3744
  %v3751 = vsel %vm617, %v3740, 0
  %v3753 = vsel %vm617, %v3742, 0
  %v3755 = vsel %vm617, %v3744, 0
  %3757 = vmatprep.subr.mxu0 0.0
  %3758 = vmatpush1.msra.mxu0 %v3287
  %3759 = vmatprep.subr.mxu0 0.0
  %3760 = vmatpush1.msra.mxu0 %v3288
  %3761 = vmatprep.subr.mxu0 0.0
  %3762 = vmatpush1.msra.mxu0 %v3289
  %3763 = vmatprep.subr.mxu0 0.0
  %3764 = vmatpush1.msra.mxu0 %v3290
  %3765 = vmatprep.subr.mxu0 0.0
  %3766 = vmatpush1.msra.mxu0 0.0
  %3767 = vmatprep.subr.mxu0 0.0
  %3768 = vmatpush1.msra.mxu0 0.0
  %3769 = vmatprep.subr.mxu0 0.0
  %3770 = vmatpush1.msra.mxu0 0.0
  %3771 = vmatprep.subr.mxu0 0.0
  %3772 = vmatpush1.msra.mxu0 0.0
  %3773 = vmatprep.subr.mxu0 0.0
  %3774 = vmatpush1.msra.mxu0 0.0
  %3775 = vmatprep.subr.mxu0 0.0
  %3776 = vmatpush1.msra.mxu0 0.0
  %3777 = vmatprep.subr.mxu0 0.0
  %3778 = vmatpush1.msra.mxu0 0.0
  %3779 = vmatprep.subr.mxu0 0.0
  %3780 = vmatpush1.msra.mxu0 0.0
  %3781 = vmatprep.subr.mxu0 0.0
  %3782 = vmatpush1.msra.mxu0 0.0
  %3783 = vmatprep.subr.mxu0 0.0
  %3784 = vmatpush1.msra.mxu0 0.0
  %3785 = vmatprep.subr.mxu0 0.0
  %3786 = vmatpush1.msra.mxu0 0.0
  %3787 = vmatprep.subr.mxu0 0.0
  %3788 = vmatpush1.msra.mxu0 0.0
  %3789 = vmatprep.subr.mxu0 0.0
  %3790 = vmatpush1.msra.mxu0 0.0
  %3791 = vmatprep.subr.mxu0 0.0
  %3792 = vmatpush1.msra.mxu0 0.0
  %3793 = vmatprep.subr.mxu0 0.0
  %3794 = vmatpush1.msra.mxu0 0.0
  %3795 = vmatprep.subr.mxu0 0.0
  %3796 = vmatpush1.msra.mxu0 0.0
  %3797 = vmatprep.subr.mxu0 0.0
  %3798 = vmatpush1.msra.mxu0 0.0
  %3799 = vmatprep.subr.mxu0 0.0
  %3800 = vmatpush1.msra.mxu0 0.0
  %3801 = vmatprep.subr.mxu0 0.0
  %3802 = vmatpush1.msra.mxu0 0.0
  %3803 = vmatprep.subr.mxu0 0.0
  %3804 = vmatpush1.msra.mxu0 0.0
  %3805 = vmatprep.subr.mxu0 0.0
  %3806 = vmatpush1.msra.mxu0 0.0
  %3807 = vmatprep.subr.mxu0 0.0
  %3808 = vmatpush1.msra.mxu0 0.0
  %3809 = vmatprep.subr.mxu0 0.0
  %3810 = vmatpush1.msra.mxu0 0.0
  %3811 = vmatprep.subr.mxu0 0.0
  %3812 = vmatpush1.msra.mxu0 0.0
  %3813 = vmatprep.subr.mxu0 0.0
  %3814 = vmatpush1.msra.mxu0 0.0
  %3815 = vmatprep.subr.mxu0 0.0
  %3816 = vmatpush1.msra.mxu0 0.0
  %3817 = vmatprep.subr.mxu0 0.0
  %3818 = vmatpush1.msra.mxu0 0.0
  %3819 = vmatprep.subr.mxu0 0.0
  %3820 = vmatpush1.msra.mxu0 0.0
  %3821 = vmatprep.mubr.f32.mxu0 0.0
  %3822 = vmatmul.mubr.f32.gmra.mrb[0].mxu0 %v3751
  %v3823 = vpop.f32.mrb[0].mxu0
  %v3824 = vadd.f32 %v3573, %v3823
  %v3825 = vpop.f32.mrb[0].mxu0
  %3826 = vmatprep.mubr.f32.mxu0 0.0
  %3827 = vmatmul.mubr.f32.gmra.mrb[0].mxu0 %v3753
  %v3828 = vpop.f32.mrb[0].mxu0
  %v3829 = vadd.f32 %v3573, %v3828
  %v3830 = vpop.f32.mrb[0].mxu0
  %3831 = vmatprep.mubr.f32.mxu0 0.0
  %3832 = vmatmul.mubr.f32.gmra.mrb[0].mxu0 %v3755
  %v3833 = vpop.f32.mrb[0].mxu0
  %v3834 = vadd.f32 %v3573, %v3833
  %v3835 = vpop.f32.mrb[0].mxu0
  %3836 = vdwg.mxu0
  %v3837 = vadd.f32 %v3824, %v3385
  %v3838 = vadd.f32 %v3829, %v3390
  %v3839 = vadd.f32 %v3834, %v3395
  %v3840 = vxor.u32 %v3837, 2147483648
  %v3841 = vxor.u32 %v3838, 2147483648
  %v3842 = vxor.u32 %v3839, 2147483648
  %v3843 = vmul.f32 %v3840, 1.442695
  %v3844 = vpow.pop %v3843
  %v3845 = vmul.f32 %v3841, 1.442695
  %v3846 = vpow.pop %v3845
  %v3847 = vmul.f32 %v3842, 1.442695
  %v3848 = vpow.pop %v3847
  %v3849 = vadd.f32 %v3844, 1.0
  %v3850 = vadd.f32 %v3846, 1.0
  %v3851 = vadd.f32 %v3848, 1.0
  %v3852 = vrcp.pop %v3849
  %v3853 = vmul.f32 1.0, %v3852
  %v3854 = vrcp.pop %v3850
  %v3855 = vmul.f32 1.0, %v3854
  %v3856 = vrcp.pop %v3851
  %v3857 = vmul.f32 1.0, %v3856
  %v3858 = vtanh.pop %v3837
  %v3859 = vtanh.pop %v3838
  %v3860 = vtanh.pop %v3839
  %v3861 = vmul.f32 %v3853, %v3052
  %v3862 = vmul.f32 %v3855, %v3169
  %v3863 = vmul.f32 %v3857, %v3286
  %3867 = vrot.lane.b32.xlu0 %v3858, 64
  %v3868 = vpop.permute.xlu0 %3867
  %3869 = vrot.lane.b32.xlu0 %v3859, 64
  %v3870 = vpop.permute.xlu0 %3869
  %3871 = vrot.lane.b32.xlu0 %v3860, 64
  %v3872 = vpop.permute.xlu0 %3871
  %v3876 = vmul.f32 %v3853, %v3868
  %v3877 = vmul.f32 %v3855, %v3870
  %v3878 = vmul.f32 %v3857, %v3872
  %3882 = vrot.lane.b32.xlu0 %v3876, 32
  %v3883 = vpop.permute.xlu0 %3882
  %3884 = vrot.lane.b32.xlu0 %v3877, 32
  %v3885 = vpop.permute.xlu0 %3884
  %3886 = vrot.lane.b32.xlu0 %v3878, 32
  %v3887 = vpop.permute.xlu0 %3886
  %v3891 = vadd.f32 %v3861, %v3883
  %v3892 = vadd.f32 %v3862, %v3885
  %v3893 = vadd.f32 %v3863, %v3887
  %v3894 = vtanh.pop %v3891
  %v3895 = vtanh.pop %v3892
  %v3896 = vtanh.pop %v3893
  %3900 = vrot.lane.b32.xlu0 %v3894, 64
  %v3901 = vpop.permute.xlu0 %3900
  %3902 = vrot.lane.b32.xlu0 %v3895, 64
  %v3903 = vpop.permute.xlu0 %3902
  %3904 = vrot.lane.b32.xlu0 %v3896, 64
  %v3905 = vpop.permute.xlu0 %3904
  %v3909 = vmul.f32 %v3853, %v3901
  %v3910 = vmul.f32 %v3855, %v3903
  %v3911 = vmul.f32 %v3857, %v3905
  %3915 = vrot.lane.b32.xlu0 %v3909, 32
  %v3916 = vpop.permute.xlu0 %3915
  %3917 = vrot.lane.b32.xlu0 %v3910, 32
  %v3918 = vpop.permute.xlu0 %3917
  %3919 = vrot.lane.b32.xlu0 %v3911, 32
  %v3920 = vpop.permute.xlu0 %3919
  %3924 = vst.msk [vmem:[#allocation3 + $0x30] sm:$0xff] %vm617, %v3916
  %3925 = vst.msk [vmem:[#allocation3 + $0x38] sm:$0xff] %vm617, %v3918
  %3926 = vst.msk [vmem:[#allocation3 + $0x40] sm:$0xff] %vm617, %v3920
  %v3927 = vsel %vm617, %v3916, 0
  %v3929 = vsel %vm617, %v3918, 0
  %v3931 = vsel %vm617, %v3920, 0
  %3933 = vmatprep.subr.mxu0 0.0
  %3934 = vmatpush1.msra.mxu0 %v3287
  %3935 = vmatprep.subr.mxu0 0.0
  %3936 = vmatpush1.msra.mxu0 %v3288
  %3937 = vmatprep.subr.mxu0 0.0
  %3938 = vmatpush1.msra.mxu0 %v3289
  %3939 = vmatprep.subr.mxu0 0.0
  %3940 = vmatpush1.msra.mxu0 %v3290
  %3941 = vmatprep.subr.mxu0 0.0
  %3942 = vmatpush1.msra.mxu0 0.0
  %3943 = vmatprep.subr.mxu0 0.0
  %3944 = vmatpush1.msra.mxu0 0.0
  %3945 = vmatprep.subr.mxu0 0.0
  %3946 = vmatpush1.msra.mxu0 0.0
  %3947 = vmatprep.subr.mxu0 0.0
  %3948 = vmatpush1.msra.mxu0 0.0
  %3949 = vmatprep.subr.mxu0 0.0
  %3950 = vmatpush1.msra.mxu0 0.0
  %3951 = vmatprep.subr.mxu0 0.0
  %3952 = vmatpush1.msra.mxu0 0.0
  %3953 = vmatprep.subr.mxu0 0.0
  %3954 = vmatpush1.msra.mxu0 0.0
  %3955 = vmatprep.subr.mxu0 0.0
  %3956 = vmatpush1.msra.mxu0 0.0
  %3957 = vmatprep.subr.mxu0 0.0
  %3958 = vmatpush1.msra.mxu0 0.0
  %3959 = vmatprep.subr.mxu0 0.0
  %3960 = vmatpush1.msra.mxu0 0.0
  %3961 = vmatprep.subr.mxu0 0.0
  %3962 = vmatpush1.msra.mxu0 0.0
  %3963 = vmatprep.subr.mxu0 0.0
  %3964 = vmatpush1.msra.mxu0 0.0
  %3965 = vmatprep.subr.mxu0 0.0
  %3966 = vmatpush1.msra.mxu0 0.0
  %3967 = vmatprep.subr.mxu0 0.0
  %3968 = vmatpush1.msra.mxu0 0.0
  %3969 = vmatprep.subr.mxu0 0.0
  %3970 = vmatpush1.msra.mxu0 0.0
  %3971 = vmatprep.subr.mxu0 0.0
  %3972 = vmatpush1.msra.mxu0 0.0
  %3973 = vmatprep.subr.mxu0 0.0
  %3974 = vmatpush1.msra.mxu0 0.0
  %3975 = vmatprep.subr.mxu0 0.0
  %3976 = vmatpush1.msra.mxu0 0.0
  %3977 = vmatprep.subr.mxu0 0.0
  %3978 = vmatpush1.msra.mxu0 0.0
  %3979 = vmatprep.subr.mxu0 0.0
  %3980 = vmatpush1.msra.mxu0 0.0
  %3981 = vmatprep.subr.mxu0 0.0
  %3982 = vmatpush1.msra.mxu0 0.0
  %3983 = vmatprep.subr.mxu0 0.0
  %3984 = vmatpush1.msra.mxu0 0.0
  %3985 = vmatprep.subr.mxu0 0.0
  %3986 = vmatpush1.msra.mxu0 0.0
  %3987 = vmatprep.subr.mxu0 0.0
  %3988 = vmatpush1.msra.mxu0 0.0
  %3989 = vmatprep.subr.mxu0 0.0
  %3990 = vmatpush1.msra.mxu0 0.0
  %3991 = vmatprep.subr.mxu0 0.0
  %3992 = vmatpush1.msra.mxu0 0.0
  %3993 = vmatprep.subr.mxu0 0.0
  %3994 = vmatpush1.msra.mxu0 0.0
  %3995 = vmatprep.subr.mxu0 0.0
  %3996 = vmatpush1.msra.mxu0 0.0
  %3997 = vmatprep.mubr.f32.mxu0 0.0
  %3998 = vmatmul.mubr.f32.gmra.mrb[0].mxu0 %v3927
  %v3999 = vpop.f32.mrb[0].mxu0
  %v4000 = vadd.f32 %v3573, %v3999
  %v4001 = vpop.f32.mrb[0].mxu0
  %4002 = vmatprep.mubr.f32.mxu0 0.0
  %4003 = vmatmul.mubr.f32.gmra.mrb[0].mxu0 %v3929
  %v4004 = vpop.f32.mrb[0].mxu0
  %v4005 = vadd.f32 %v3573, %v4004
  %v4006 = vpop.f32.mrb[0].mxu0
  %4007 = vmatprep.mubr.f32.mxu0 0.0
  %4008 = vmatmul.mubr.f32.gmra.mrb[0].mxu0 %v3931
  %v4009 = vpop.f32.mrb[0].mxu0
  %v4010 = vadd.f32 %v3573, %v4009
  %v4011 = vpop.f32.mrb[0].mxu0
  %4012 = vdwg.mxu0
  %v4013 = vadd.f32 %v4000, %v3385
  %v4014 = vadd.f32 %v4005, %v3390
  %v4015 = vadd.f32 %v4010, %v3395
  %v4016 = vxor.u32 %v4013, 2147483648
  %v4017 = vxor.u32 %v4014, 2147483648
  %v4018 = vxor.u32 %v4015, 2147483648
  %v4019 = vmul.f32 %v4016, 1.442695
  %v4020 = vpow.pop %v4019
  %v4021 = vmul.f32 %v4017, 1.442695
  %v4022 = vpow.pop %v4021
  %v4023 = vmul.f32 %v4018, 1.442695
  %v4024 = vpow.pop %v4023
  %v4025 = vadd.f32 %v4020, 1.0
  %v4026 = vadd.f32 %v4022, 1.0
  %v4027 = vadd.f32 %v4024, 1.0
  %v4028 = vrcp.pop %v4025
  %v4029 = vmul.f32 1.0, %v4028
  %v4030 = vrcp.pop %v4026
  %v4031 = vmul.f32 1.0, %v4030
  %v4032 = vrcp.pop %v4027
  %v4033 = vmul.f32 1.0, %v4032
  %v4034 = vtanh.pop %v4013
  %v4035 = vtanh.pop %v4014
  %v4036 = vtanh.pop %v4015
  %v4037 = vmul.f32 %v4029, %v3052
  %v4038 = vmul.f32 %v4031, %v3169
  %v4039 = vmul.f32 %v4033, %v3286
  %4043 = vrot.lane.b32.xlu0 %v4034, 64
  %v4044 = vpop.permute.xlu0 %4043
  %4045 = vrot.lane.b32.xlu0 %v4035, 64
  %v4046 = vpop.permute.xlu0 %4045
  %4047 = vrot.lane.b32.xlu0 %v4036, 64
  %v4048 = vpop.permute.xlu0 %4047
  %v4052 = vmul.f32 %v4029, %v4044
  %v4053 = vmul.f32 %v4031, %v4046
  %v4054 = vmul.f32 %v4033, %v4048
  %4058 = vrot.lane.b32.xlu0 %v4052, 32
  %v4059 = vpop.permute.xlu0 %4058
  %4060 = vrot.lane.b32.xlu0 %v4053, 32
  %v4061 = vpop.permute.xlu0 %4060
  %4062 = vrot.lane.b32.xlu0 %v4054, 32
  %v4063 = vpop.permute.xlu0 %4062
  %v4067 = vadd.f32 %v4037, %v4059
  %v4068 = vadd.f32 %v4038, %v4061
  %v4069 = vadd.f32 %v4039, %v4063
  %v4070 = vtanh.pop %v4067
  %v4071 = vtanh.pop %v4068
  %v4072 = vtanh.pop %v4069
  %4076 = vrot.lane.b32.xlu0 %v4070, 64
  %v4077 = vpop.permute.xlu0 %4076
  %4078 = vrot.lane.b32.xlu0 %v4071, 64
  %v4079 = vpop.permute.xlu0 %4078
  %4080 = vrot.lane.b32.xlu0 %v4072, 64
  %v4081 = vpop.permute.xlu0 %4080
  %v4085 = vmul.f32 %v4029, %v4077
  %v4086 = vmul.f32 %v4031, %v4079
  %v4087 = vmul.f32 %v4033, %v4081
  %4091 = vrot.lane.b32.xlu0 %v4085, 32
  %v4092 = vpop.permute.xlu0 %4091
  %4093 = vrot.lane.b32.xlu0 %v4086, 32
  %v4094 = vpop.permute.xlu0 %4093
  %4095 = vrot.lane.b32.xlu0 %v4087, 32
  %v4096 = vpop.permute.xlu0 %4095
  %4100 = vst.msk [vmem:[#allocation3 + $0x48] sm:$0xff] %vm617, %v4092
  %4101 = vst.msk [vmem:[#allocation3 + $0x50] sm:$0xff] %vm617, %v4094
  %4102 = vst.msk [vmem:[#allocation3 + $0x58] sm:$0xff] %vm617, %v4096
  %v4103 = vsel %vm617, %v4092, 0
  %v4105 = vsel %vm617, %v4094, 0
  %v4107 = vsel %vm617, %v4096, 0
  %4109 = vmatprep.subr.mxu0 0.0
  %4110 = vmatpush1.msra.mxu0 %v3287
  %4111 = vmatprep.subr.mxu0 0.0
  %4112 = vmatpush1.msra.mxu0 %v3288
  %4113 = vmatprep.subr.mxu0 0.0
  %4114 = vmatpush1.msra.mxu0 %v3289
  %4115 = vmatprep.subr.mxu0 0.0
  %4116 = vmatpush1.msra.mxu0 %v3290
  %4117 = vmatprep.subr.mxu0 0.0
  %4118 = vmatpush1.msra.mxu0 0.0
  %4119 = vmatprep.subr.mxu0 0.0
  %4120 = vmatpush1.msra.mxu0 0.0
  %4121 = vmatprep.subr.mxu0 0.0
  %4122 = vmatpush1.msra.mxu0 0.0
  %4123 = vmatprep.subr.mxu0 0.0
  %4124 = vmatpush1.msra.mxu0 0.0
  %4125 = vmatprep.subr.mxu0 0.0
  %4126 = vmatpush1.msra.mxu0 0.0
  %4127 = vmatprep.subr.mxu0 0.0
  %4128 = vmatpush1.msra.mxu0 0.0
  %4129 = vmatprep.subr.mxu0 0.0
  %4130 = vmatpush1.msra.mxu0 0.0
  %4131 = vmatprep.subr.mxu0 0.0
  %4132 = vmatpush1.msra.mxu0 0.0
  %4133 = vmatprep.subr.mxu0 0.0
  %4134 = vmatpush1.msra.mxu0 0.0
  %4135 = vmatprep.subr.mxu0 0.0
  %4136 = vmatpush1.msra.mxu0 0.0
  %4137 = vmatprep.subr.mxu0 0.0
  %4138 = vmatpush1.msra.mxu0 0.0
  %4139 = vmatprep.subr.mxu0 0.0
  %4140 = vmatpush1.msra.mxu0 0.0
  %4141 = vmatprep.subr.mxu0 0.0
  %4142 = vmatpush1.msra.mxu0 0.0
  %4143 = vmatprep.subr.mxu0 0.0
  %4144 = vmatpush1.msra.mxu0 0.0
  %4145 = vmatprep.subr.mxu0 0.0
  %4146 = vmatpush1.msra.mxu0 0.0
  %4147 = vmatprep.subr.mxu0 0.0
  %4148 = vmatpush1.msra.mxu0 0.0
  %4149 = vmatprep.subr.mxu0 0.0
  %4150 = vmatpush1.msra.mxu0 0.0
  %4151 = vmatprep.subr.mxu0 0.0
  %4152 = vmatpush1.msra.mxu0 0.0
  %4153 = vmatprep.subr.mxu0 0.0
  %4154 = vmatpush1.msra.mxu0 0.0
  %4155 = vmatprep.subr.mxu0 0.0
  %4156 = vmatpush1.msra.mxu0 0.0
  %4157 = vmatprep.subr.mxu0 0.0
  %4158 = vmatpush1.msra.mxu0 0.0
  %4159 = vmatprep.subr.mxu0 0.0
  %4160 = vmatpush1.msra.mxu0 0.0
  %4161 = vmatprep.subr.mxu0 0.0
  %4162 = vmatpush1.msra.mxu0 0.0
  %4163 = vmatprep.subr.mxu0 0.0
  %4164 = vmatpush1.msra.mxu0 0.0
  %4165 = vmatprep.subr.mxu0 0.0
  %4166 = vmatpush1.msra.mxu0 0.0
  %4167 = vmatprep.subr.mxu0 0.0
  %4168 = vmatpush1.msra.mxu0 0.0
  %4169 = vmatprep.subr.mxu0 0.0
  %4170 = vmatpush1.msra.mxu0 0.0
  %4171 = vmatprep.subr.mxu0 0.0
  %4172 = vmatpush1.msra.mxu0 0.0
  %4173 = vmatprep.mubr.f32.mxu0 0.0
  %4174 = vmatmul.mubr.f32.gmra.mrb[0].mxu0 %v4103
  %v4175 = vpop.f32.mrb[0].mxu0
  %v4176 = vadd.f32 %v3573, %v4175
  %v4177 = vpop.f32.mrb[0].mxu0
  %4178 = vmatprep.mubr.f32.mxu0 0.0
  %4179 = vmatmul.mubr.f32.gmra.mrb[0].mxu0 %v4105
  %v4180 = vpop.f32.mrb[0].mxu0
  %v4181 = vadd.f32 %v3573, %v4180
  %v4182 = vpop.f32.mrb[0].mxu0
  %4183 = vmatprep.mubr.f32.mxu0 0.0
  %4184 = vmatmul.mubr.f32.gmra.mrb[0].mxu0 %v4107
  %v4185 = vpop.f32.mrb[0].mxu0
  %v4186 = vadd.f32 %v3573, %v4185
  %v4187 = vpop.f32.mrb[0].mxu0
  %4188 = vdwg.mxu0
  %v4189 = vadd.f32 %v4176, %v3385
  %v4190 = vadd.f32 %v4181, %v3390
  %v4191 = vadd.f32 %v4186, %v3395
  %v4192 = vxor.u32 %v4189, 2147483648
  %v4193 = vxor.u32 %v4190, 2147483648
  %v4194 = vxor.u32 %v4191, 2147483648
  %v4195 = vmul.f32 %v4192, 1.442695
  %v4196 = vpow.pop %v4195
  %v4197 = vmul.f32 %v4193, 1.442695
  %v4198 = vpow.pop %v4197
  %v4199 = vmul.f32 %v4194, 1.442695
  %v4200 = vpow.pop %v4199
  %v4201 = vadd.f32 %v4196, 1.0
  %v4202 = vadd.f32 %v4198, 1.0
  %v4203 = vadd.f32 %v4200, 1.0
  %v4204 = vrcp.pop %v4201
  %v4205 = vmul.f32 1.0, %v4204
  %v4206 = vrcp.pop %v4202
  %v4207 = vmul.f32 1.0, %v4206
  %v4208 = vrcp.pop %v4203
  %v4209 = vmul.f32 1.0, %v4208
  %v4210 = vtanh.pop %v4189
  %v4211 = vtanh.pop %v4190
  %v4212 = vtanh.pop %v4191
  %v4213 = vmul.f32 %v4205, %v3052
  %v4214 = vmul.f32 %v4207, %v3169
  %v4215 = vmul.f32 %v4209, %v3286
  %4219 = vrot.lane.b32.xlu0 %v4210, 64
  %v4220 = vpop.permute.xlu0 %4219
  %4221 = vrot.lane.b32.xlu0 %v4211, 64
  %v4222 = vpop.permute.xlu0 %4221
  %4223 = vrot.lane.b32.xlu0 %v4212, 64
  %v4224 = vpop.permute.xlu0 %4223
  %v4228 = vmul.f32 %v4205, %v4220
  %v4229 = vmul.f32 %v4207, %v4222
  %v4230 = vmul.f32 %v4209, %v4224
  %4234 = vrot.lane.b32.xlu0 %v4228, 32
  %v4235 = vpop.permute.xlu0 %4234
  %4236 = vrot.lane.b32.xlu0 %v4229, 32
  %v4237 = vpop.permute.xlu0 %4236
  %4238 = vrot.lane.b32.xlu0 %v4230, 32
  %v4239 = vpop.permute.xlu0 %4238
  %v4243 = vadd.f32 %v4213, %v4235
  %v4244 = vadd.f32 %v4214, %v4237
  %v4245 = vadd.f32 %v4215, %v4239
  %v4246 = vtanh.pop %v4243
  %v4247 = vtanh.pop %v4244
  %v4248 = vtanh.pop %v4245
  %4252 = vrot.lane.b32.xlu0 %v4246, 64
  %v4253 = vpop.permute.xlu0 %4252
  %4254 = vrot.lane.b32.xlu0 %v4247, 64
  %v4255 = vpop.permute.xlu0 %4254
  %4256 = vrot.lane.b32.xlu0 %v4248, 64
  %v4257 = vpop.permute.xlu0 %4256
  %v4261 = vmul.f32 %v4205, %v4253
  %v4262 = vmul.f32 %v4207, %v4255
  %v4263 = vmul.f32 %v4209, %v4257
  %4267 = vrot.lane.b32.xlu0 %v4261, 32
  %v4268 = vpop.permute.xlu0 %4267
  %4269 = vrot.lane.b32.xlu0 %v4262, 32
  %v4270 = vpop.permute.xlu0 %4269
  %4271 = vrot.lane.b32.xlu0 %v4263, 32
  %v4272 = vpop.permute.xlu0 %4271
  %4276 = vst.msk [vmem:[#allocation3 + $0x60] sm:$0xff] %vm617, %v4268
  %4277 = vst.msk [vmem:[#allocation3 + $0x68] sm:$0xff] %vm617, %v4270
  %4278 = vst.msk [vmem:[#allocation3 + $0x70] sm:$0xff] %vm617, %v4272
  %v4279 = vsel %vm617, %v4268, 0
  %v4281 = vsel %vm617, %v4270, 0
  %v4283 = vsel %vm617, %v4272, 0
  %4285 = vmatprep.subr.mxu0 0.0
  %4286 = vmatpush1.msra.mxu0 %v3287
  %4287 = vmatprep.subr.mxu0 0.0
  %4288 = vmatpush1.msra.mxu0 %v3288
  %4289 = vmatprep.subr.mxu0 0.0
  %4290 = vmatpush1.msra.mxu0 %v3289
  %4291 = vmatprep.subr.mxu0 0.0
  %4292 = vmatpush1.msra.mxu0 %v3290
  %4293 = vmatprep.subr.mxu0 0.0
  %4294 = vmatpush1.msra.mxu0 0.0
  %4295 = vmatprep.subr.mxu0 0.0
  %4296 = vmatpush1.msra.mxu0 0.0
  %4297 = vmatprep.subr.mxu0 0.0
  %4298 = vmatpush1.msra.mxu0 0.0
  %4299 = vmatprep.subr.mxu0 0.0
  %4300 = vmatpush1.msra.mxu0 0.0
  %4301 = vmatprep.subr.mxu0 0.0
  %4302 = vmatpush1.msra.mxu0 0.0
  %4303 = vmatprep.subr.mxu0 0.0
  %4304 = vmatpush1.msra.mxu0 0.0
  %4305 = vmatprep.subr.mxu0 0.0
  %4306 = vmatpush1.msra.mxu0 0.0
  %4307 = vmatprep.subr.mxu0 0.0
  %4308 = vmatpush1.msra.mxu0 0.0
  %4309 = vmatprep.subr.mxu0 0.0
  %4310 = vmatpush1.msra.mxu0 0.0
  %4311 = vmatprep.subr.mxu0 0.0
  %4312 = vmatpush1.msra.mxu0 0.0
  %4313 = vmatprep.subr.mxu0 0.0
  %4314 = vmatpush1.msra.mxu0 0.0
  %4315 = vmatprep.subr.mxu0 0.0
  %4316 = vmatpush1.msra.mxu0 0.0
  %4317 = vmatprep.subr.mxu0 0.0
  %4318 = vmatpush1.msra.mxu0 0.0
  %4319 = vmatprep.subr.mxu0 0.0
  %4320 = vmatpush1.msra.mxu0 0.0
  %4321 = vmatprep.subr.mxu0 0.0
  %4322 = vmatpush1.msra.mxu0 0.0
  %4323 = vmatprep.subr.mxu0 0.0
  %4324 = vmatpush1.msra.mxu0 0.0
  %4325 = vmatprep.subr.mxu0 0.0
  %4326 = vmatpush1.msra.mxu0 0.0
  %4327 = vmatprep.subr.mxu0 0.0
  %4328 = vmatpush1.msra.mxu0 0.0
  %4329 = vmatprep.subr.mxu0 0.0
  %4330 = vmatpush1.msra.mxu0 0.0
  %4331 = vmatprep.subr.mxu0 0.0
  %4332 = vmatpush1.msra.mxu0 0.0
  %4333 = vmatprep.subr.mxu0 0.0
  %4334 = vmatpush1.msra.mxu0 0.0
  %4335 = vmatprep.subr.mxu0 0.0
  %4336 = vmatpush1.msra.mxu0 0.0
  %4337 = vmatprep.subr.mxu0 0.0
  %4338 = vmatpush1.msra.mxu0 0.0
  %4339 = vmatprep.subr.mxu0 0.0
  %4340 = vmatpush1.msra.mxu0 0.0
  %4341 = vmatprep.subr.mxu0 0.0
  %4342 = vmatpush1.msra.mxu0 0.0
  %4343 = vmatprep.subr.mxu0 0.0
  %4344 = vmatpush1.msra.mxu0 0.0
  %4345 = vmatprep.subr.mxu0 0.0
  %4346 = vmatpush1.msra.mxu0 0.0
  %4347 = vmatprep.subr.mxu0 0.0
  %4348 = vmatpush1.msra.mxu0 0.0
  %4349 = vmatprep.mubr.f32.mxu0 0.0
  %4350 = vmatmul.mubr.f32.gmra.mrb[0].mxu0 %v4279
  %v4351 = vpop.f32.mrb[0].mxu0
  %v4352 = vadd.f32 %v3573, %v4351
  %v4353 = vpop.f32.mrb[0].mxu0
  %4354 = vmatprep.mubr.f32.mxu0 0.0
  %4355 = vmatmul.mubr.f32.gmra.mrb[0].mxu0 %v4281
  %v4356 = vpop.f32.mrb[0].mxu0
  %v4357 = vadd.f32 %v3573, %v4356
  %v4358 = vpop.f32.mrb[0].mxu0
  %4359 = vmatprep.mubr.f32.mxu0 0.0
  %4360 = vmatmul.mubr.f32.gmra.mrb[0].mxu0 %v4283
  %v4361 = vpop.f32.mrb[0].mxu0
  %v4362 = vadd.f32 %v3573, %v4361
  %v4363 = vpop.f32.mrb[0].mxu0
  %4364 = vdwg.mxu0
  %v4365 = vadd.f32 %v4352, %v3385
  %v4366 = vadd.f32 %v4357, %v3390
  %v4367 = vadd.f32 %v4362, %v3395
  %v4368 = vxor.u32 %v4365, 2147483648
  %v4369 = vxor.u32 %v4366, 2147483648
  %v4370 = vxor.u32 %v4367, 2147483648
  %v4371 = vmul.f32 %v4368, 1.442695
  %v4372 = vpow.pop %v4371
  %v4373 = vmul.f32 %v4369, 1.442695
  %v4374 = vpow.pop %v4373
  %v4375 = vmul.f32 %v4370, 1.442695
  %v4376 = vpow.pop %v4375
  %v4377 = vadd.f32 %v4372, 1.0
  %v4378 = vadd.f32 %v4374, 1.0
  %v4379 = vadd.f32 %v4376, 1.0
  %v4380 = vrcp.pop %v4377
  %v4381 = vmul.f32 1.0, %v4380
  %v4382 = vrcp.pop %v4378
  %v4383 = vmul.f32 1.0, %v4382
  %v4384 = vrcp.pop %v4379
  %v4385 = vmul.f32 1.0, %v4384
  %v4386 = vtanh.pop %v4365
  %v4387 = vtanh.pop %v4366
  %v4388 = vtanh.pop %v4367
  %v4389 = vmul.f32 %v4381, %v3052
  %v4390 = vmul.f32 %v4383, %v3169
  %v4391 = vmul.f32 %v4385, %v3286
  %4395 = vrot.lane.b32.xlu0 %v4386, 64
  %v4396 = vpop.permute.xlu0 %4395
  %4397 = vrot.lane.b32.xlu0 %v4387, 64
  %v4398 = vpop.permute.xlu0 %4397
  %4399 = vrot.lane.b32.xlu0 %v4388, 64
  %v4400 = vpop.permute.xlu0 %4399
  %v4404 = vmul.f32 %v4381, %v4396
  %v4405 = vmul.f32 %v4383, %v4398
  %v4406 = vmul.f32 %v4385, %v4400
  %4410 = vrot.lane.b32.xlu0 %v4404, 32
  %v4411 = vpop.permute.xlu0 %4410
  %4412 = vrot.lane.b32.xlu0 %v4405, 32
  %v4413 = vpop.permute.xlu0 %4412
  %4414 = vrot.lane.b32.xlu0 %v4406, 32
  %v4415 = vpop.permute.xlu0 %4414
  %v4419 = vadd.f32 %v4389, %v4411
  %v4420 = vadd.f32 %v4390, %v4413
  %v4421 = vadd.f32 %v4391, %v4415
  %v4422 = vtanh.pop %v4419
  %v4423 = vtanh.pop %v4420
  %v4424 = vtanh.pop %v4421
  %4428 = vrot.lane.b32.xlu0 %v4422, 64
  %v4429 = vpop.permute.xlu0 %4428
  %4430 = vrot.lane.b32.xlu0 %v4423, 64
  %v4431 = vpop.permute.xlu0 %4430
  %4432 = vrot.lane.b32.xlu0 %v4424, 64
  %v4433 = vpop.permute.xlu0 %4432
  %v4437 = vmul.f32 %v4381, %v4429
  %v4438 = vmul.f32 %v4383, %v4431
  %v4439 = vmul.f32 %v4385, %v4433
  %4443 = vrot.lane.b32.xlu0 %v4437, 32
  %v4444 = vpop.permute.xlu0 %4443
  %4445 = vrot.lane.b32.xlu0 %v4438, 32
  %v4446 = vpop.permute.xlu0 %4445
  %4447 = vrot.lane.b32.xlu0 %v4439, 32
  %v4448 = vpop.permute.xlu0 %4447
  %4452 = vst.msk [vmem:[#allocation3 + $0x78] sm:$0xff] %vm617, %v4444
  %4453 = vst.msk [vmem:[#allocation3 + $0x80] sm:$0xff] %vm617, %v4446
  %4454 = vst.msk [vmem:[#allocation3 + $0x88] sm:$0xff] %vm617, %v4448
  %v4455 = vsel %vm617, %v4444, 0
  %v4457 = vsel %vm617, %v4446, 0
  %v4459 = vsel %vm617, %v4448, 0
  %4461 = vmatprep.subr.mxu0 0.0
  %4462 = vmatpush1.msra.mxu0 %v3287
  %4463 = vmatprep.subr.mxu0 0.0
  %4464 = vmatpush1.msra.mxu0 %v3288
  %4465 = vmatprep.subr.mxu0 0.0
  %4466 = vmatpush1.msra.mxu0 %v3289
  %4467 = vmatprep.subr.mxu0 0.0
  %4468 = vmatpush1.msra.mxu0 %v3290
  %4469 = vmatprep.subr.mxu0 0.0
  %4470 = vmatpush1.msra.mxu0 0.0
  %4471 = vmatprep.subr.mxu0 0.0
  %4472 = vmatpush1.msra.mxu0 0.0
  %4473 = vmatprep.subr.mxu0 0.0
  %4474 = vmatpush1.msra.mxu0 0.0
  %4475 = vmatprep.subr.mxu0 0.0
  %4476 = vmatpush1.msra.mxu0 0.0
  %4477 = vmatprep.subr.mxu0 0.0
  %4478 = vmatpush1.msra.mxu0 0.0
  %4479 = vmatprep.subr.mxu0 0.0
  %4480 = vmatpush1.msra.mxu0 0.0
  %4481 = vmatprep.subr.mxu0 0.0
  %4482 = vmatpush1.msra.mxu0 0.0
  %4483 = vmatprep.subr.mxu0 0.0
  %4484 = vmatpush1.msra.mxu0 0.0
  %4485 = vmatprep.subr.mxu0 0.0
  %4486 = vmatpush1.msra.mxu0 0.0
  %4487 = vmatprep.subr.mxu0 0.0
  %4488 = vmatpush1.msra.mxu0 0.0
  %4489 = vmatprep.subr.mxu0 0.0
  %4490 = vmatpush1.msra.mxu0 0.0
  %4491 = vmatprep.subr.mxu0 0.0
  %4492 = vmatpush1.msra.mxu0 0.0
  %4493 = vmatprep.subr.mxu0 0.0
  %4494 = vmatpush1.msra.mxu0 0.0
  %4495 = vmatprep.subr.mxu0 0.0
  %4496 = vmatpush1.msra.mxu0 0.0
  %4497 = vmatprep.subr.mxu0 0.0
  %4498 = vmatpush1.msra.mxu0 0.0
  %4499 = vmatprep.subr.mxu0 0.0
  %4500 = vmatpush1.msra.mxu0 0.0
  %4501 = vmatprep.subr.mxu0 0.0
  %4502 = vmatpush1.msra.mxu0 0.0
  %4503 = vmatprep.subr.mxu0 0.0
  %4504 = vmatpush1.msra.mxu0 0.0
  %4505 = vmatprep.subr.mxu0 0.0
  %4506 = vmatpush1.msra.mxu0 0.0
  %4507 = vmatprep.subr.mxu0 0.0
  %4508 = vmatpush1.msra.mxu0 0.0
  %4509 = vmatprep.subr.mxu0 0.0
  %4510 = vmatpush1.msra.mxu0 0.0
  %4511 = vmatprep.subr.mxu0 0.0
  %4512 = vmatpush1.msra.mxu0 0.0
  %4513 = vmatprep.subr.mxu0 0.0
  %4514 = vmatpush1.msra.mxu0 0.0
  %4515 = vmatprep.subr.mxu0 0.0
  %4516 = vmatpush1.msra.mxu0 0.0
  %4517 = vmatprep.subr.mxu0 0.0
  %4518 = vmatpush1.msra.mxu0 0.0
  %4519 = vmatprep.subr.mxu0 0.0
  %4520 = vmatpush1.msra.mxu0 0.0
  %4521 = vmatprep.subr.mxu0 0.0
  %4522 = vmatpush1.msra.mxu0 0.0
  %4523 = vmatprep.subr.mxu0 0.0
  %4524 = vmatpush1.msra.mxu0 0.0
  %4525 = vmatprep.mubr.f32.mxu0 0.0
  %4526 = vmatmul.mubr.f32.gmra.mrb[0].mxu0 %v4455
  %v4527 = vpop.f32.mrb[0].mxu0
  %v4528 = vadd.f32 %v3573, %v4527
  %v4529 = vpop.f32.mrb[0].mxu0
  %4530 = vmatprep.mubr.f32.mxu0 0.0
  %4531 = vmatmul.mubr.f32.gmra.mrb[0].mxu0 %v4457
  %v4532 = vpop.f32.mrb[0].mxu0
  %v4533 = vadd.f32 %v3573, %v4532
  %v4534 = vpop.f32.mrb[0].mxu0
  %4535 = vmatprep.mubr.f32.mxu0 0.0
  %4536 = vmatmul.mubr.f32.gmra.mrb[0].mxu0 %v4459
  %v4537 = vpop.f32.mrb[0].mxu0
  %v4538 = vadd.f32 %v3573, %v4537
  %v4539 = vpop.f32.mrb[0].mxu0
  %4540 = vdwg.mxu0
  %v4541 = vadd.f32 %v4528, %v3385
  %v4542 = vadd.f32 %v4533, %v3390
  %v4543 = vadd.f32 %v4538, %v3395
  %v4544 = vxor.u32 %v4541, 2147483648
  %v4545 = vxor.u32 %v4542, 2147483648
  %v4546 = vxor.u32 %v4543, 2147483648
  %v4547 = vmul.f32 %v4544, 1.442695
  %v4548 = vpow.pop %v4547
  %v4549 = vmul.f32 %v4545, 1.442695
  %v4550 = vpow.pop %v4549
  %v4551 = vmul.f32 %v4546, 1.442695
  %v4552 = vpow.pop %v4551
  %v4553 = vadd.f32 %v4548, 1.0
  %v4554 = vadd.f32 %v4550, 1.0
  %v4555 = vadd.f32 %v4552, 1.0
  %v4556 = vrcp.pop %v4553
  %v4557 = vmul.f32 1.0, %v4556
  %v4558 = vrcp.pop %v4554
  %v4559 = vmul.f32 1.0, %v4558
  %v4560 = vrcp.pop %v4555
  %v4561 = vmul.f32 1.0, %v4560
  %v4562 = vtanh.pop %v4541
  %v4563 = vtanh.pop %v4542
  %v4564 = vtanh.pop %v4543
  %v4565 = vmul.f32 %v4557, %v3052
  %v4566 = vmul.f32 %v4559, %v3169
  %v4567 = vmul.f32 %v4561, %v3286
  %4571 = vrot.lane.b32.xlu0 %v4562, 64
  %v4572 = vpop.permute.xlu0 %4571
  %4573 = vrot.lane.b32.xlu0 %v4563, 64
  %v4574 = vpop.permute.xlu0 %4573
  %4575 = vrot.lane.b32.xlu0 %v4564, 64
  %v4576 = vpop.permute.xlu0 %4575
  %v4580 = vmul.f32 %v4557, %v4572
  %v4581 = vmul.f32 %v4559, %v4574
  %v4582 = vmul.f32 %v4561, %v4576
  %4586 = vrot.lane.b32.xlu0 %v4580, 32
  %v4587 = vpop.permute.xlu0 %4586
  %4588 = vrot.lane.b32.xlu0 %v4581, 32
  %v4589 = vpop.permute.xlu0 %4588
  %4590 = vrot.lane.b32.xlu0 %v4582, 32
  %v4591 = vpop.permute.xlu0 %4590
  %v4595 = vadd.f32 %v4565, %v4587
  %v4596 = vadd.f32 %v4566, %v4589
  %v4597 = vadd.f32 %v4567, %v4591
  %v4598 = vtanh.pop %v4595
  %v4599 = vtanh.pop %v4596
  %v4600 = vtanh.pop %v4597
  %4604 = vrot.lane.b32.xlu0 %v4598, 64
  %v4605 = vpop.permute.xlu0 %4604
  %4606 = vrot.lane.b32.xlu0 %v4599, 64
  %v4607 = vpop.permute.xlu0 %4606
  %4608 = vrot.lane.b32.xlu0 %v4600, 64
  %v4609 = vpop.permute.xlu0 %4608
  %v4613 = vmul.f32 %v4557, %v4605
  %v4614 = vmul.f32 %v4559, %v4607
  %v4615 = vmul.f32 %v4561, %v4609
  %4619 = vrot.lane.b32.xlu0 %v4613, 32
  %v4620 = vpop.permute.xlu0 %4619
  %4621 = vrot.lane.b32.xlu0 %v4614, 32
  %v4622 = vpop.permute.xlu0 %4621
  %4623 = vrot.lane.b32.xlu0 %v4615, 32
  %v4624 = vpop.permute.xlu0 %4623
  %4628 = vst.msk [vmem:[#allocation3 + $0x90] sm:$0xff] %vm617, %v4620
  %4629 = vst.msk [vmem:[#allocation3 + $0x98] sm:$0xff] %vm617, %v4622
  %4630 = vst.msk [vmem:[#allocation3 + $0xa0] sm:$0xff] %vm617, %v4624
  %v4631 = vsel %vm617, %v4620, 0
  %v4633 = vsel %vm617, %v4622, 0
  %v4635 = vsel %vm617, %v4624, 0
  %4637 = vmatprep.subr.mxu0 0.0
  %4638 = vmatpush1.msra.mxu0 %v3287
  %4639 = vmatprep.subr.mxu0 0.0
  %4640 = vmatpush1.msra.mxu0 %v3288
  %4641 = vmatprep.subr.mxu0 0.0
  %4642 = vmatpush1.msra.mxu0 %v3289
  %4643 = vmatprep.subr.mxu0 0.0
  %4644 = vmatpush1.msra.mxu0 %v3290
  %4645 = vmatprep.subr.mxu0 0.0
  %4646 = vmatpush1.msra.mxu0 0.0
  %4647 = vmatprep.subr.mxu0 0.0
  %4648 = vmatpush1.msra.mxu0 0.0
  %4649 = vmatprep.subr.mxu0 0.0
  %4650 = vmatpush1.msra.mxu0 0.0
  %4651 = vmatprep.subr.mxu0 0.0
  %4652 = vmatpush1.msra.mxu0 0.0
  %4653 = vmatprep.subr.mxu0 0.0
  %4654 = vmatpush1.msra.mxu0 0.0
  %4655 = vmatprep.subr.mxu0 0.0
  %4656 = vmatpush1.msra.mxu0 0.0
  %4657 = vmatprep.subr.mxu0 0.0
  %4658 = vmatpush1.msra.mxu0 0.0
  %4659 = vmatprep.subr.mxu0 0.0
  %4660 = vmatpush1.msra.mxu0 0.0
  %4661 = vmatprep.subr.mxu0 0.0
  %4662 = vmatpush1.msra.mxu0 0.0
  %4663 = vmatprep.subr.mxu0 0.0
  %4664 = vmatpush1.msra.mxu0 0.0
  %4665 = vmatprep.subr.mxu0 0.0
  %4666 = vmatpush1.msra.mxu0 0.0
  %4667 = vmatprep.subr.mxu0 0.0
  %4668 = vmatpush1.msra.mxu0 0.0
  %4669 = vmatprep.subr.mxu0 0.0
  %4670 = vmatpush1.msra.mxu0 0.0
  %4671 = vmatprep.subr.mxu0 0.0
  %4672 = vmatpush1.msra.mxu0 0.0
  %4673 = vmatprep.subr.mxu0 0.0
  %4674 = vmatpush1.msra.mxu0 0.0
  %4675 = vmatprep.subr.mxu0 0.0
  %4676 = vmatpush1.msra.mxu0 0.0
  %4677 = vmatprep.subr.mxu0 0.0
  %4678 = vmatpush1.msra.mxu0 0.0
  %4679 = vmatprep.subr.mxu0 0.0
  %4680 = vmatpush1.msra.mxu0 0.0
  %4681 = vmatprep.subr.mxu0 0.0
  %4682 = vmatpush1.msra.mxu0 0.0
  %4683 = vmatprep.subr.mxu0 0.0
  %4684 = vmatpush1.msra.mxu0 0.0
  %4685 = vmatprep.subr.mxu0 0.0
  %4686 = vmatpush1.msra.mxu0 0.0
  %4687 = vmatprep.subr.mxu0 0.0
  %4688 = vmatpush1.msra.mxu0 0.0
  %4689 = vmatprep.subr.mxu0 0.0
  %4690 = vmatpush1.msra.mxu0 0.0
  %4691 = vmatprep.subr.mxu0 0.0
  %4692 = vmatpush1.msra.mxu0 0.0
  %4693 = vmatprep.subr.mxu0 0.0
  %4694 = vmatpush1.msra.mxu0 0.0
  %4695 = vmatprep.subr.mxu0 0.0
  %4696 = vmatpush1.msra.mxu0 0.0
  %4697 = vmatprep.subr.mxu0 0.0
  %4698 = vmatpush1.msra.mxu0 0.0
  %4699 = vmatprep.subr.mxu0 0.0
  %4700 = vmatpush1.msra.mxu0 0.0
  %4701 = vmatprep.mubr.f32.mxu0 0.0
  %4702 = vmatmul.mubr.f32.gmra.mrb[0].mxu0 %v4631
  %v4703 = vpop.f32.mrb[0].mxu0
  %v4704 = vadd.f32 %v3573, %v4703
  %v4705 = vpop.f32.mrb[0].mxu0
  %4706 = vmatprep.mubr.f32.mxu0 0.0
  %4707 = vmatmul.mubr.f32.gmra.mrb[0].mxu0 %v4633
  %v4708 = vpop.f32.mrb[0].mxu0
  %v4709 = vadd.f32 %v3573, %v4708
  %v4710 = vpop.f32.mrb[0].mxu0
  %4711 = vmatprep.mubr.f32.mxu0 0.0
  %4712 = vmatmul.mubr.f32.gmra.mrb[0].mxu0 %v4635
  %v4713 = vpop.f32.mrb[0].mxu0
  %v4714 = vadd.f32 %v3573, %v4713
  %v4715 = vpop.f32.mrb[0].mxu0
  %4716 = vdwg.mxu0
  %v4717 = vadd.f32 %v4704, %v3385
  %v4718 = vadd.f32 %v4709, %v3390
  %v4719 = vadd.f32 %v4714, %v3395
  %v4720 = vxor.u32 %v4717, 2147483648
  %v4721 = vxor.u32 %v4718, 2147483648
  %v4722 = vxor.u32 %v4719, 2147483648
  %v4723 = vmul.f32 %v4720, 1.442695
  %v4724 = vpow.pop %v4723
  %v4725 = vmul.f32 %v4721, 1.442695
  %v4726 = vpow.pop %v4725
  %v4727 = vmul.f32 %v4722, 1.442695
  %v4728 = vpow.pop %v4727
  %v4729 = vadd.f32 %v4724, 1.0
  %v4730 = vadd.f32 %v4726, 1.0
  %v4731 = vadd.f32 %v4728, 1.0
  %v4732 = vrcp.pop %v4729
  %v4733 = vmul.f32 1.0, %v4732
  %v4734 = vrcp.pop %v4730
  %v4735 = vmul.f32 1.0, %v4734
  %v4736 = vrcp.pop %v4731
  %v4737 = vmul.f32 1.0, %v4736
  %v4738 = vtanh.pop %v4717
  %v4739 = vtanh.pop %v4718
  %v4740 = vtanh.pop %v4719
  %v4741 = vmul.f32 %v4733, %v3052
  %v4742 = vmul.f32 %v4735, %v3169
  %v4743 = vmul.f32 %v4737, %v3286
  %4747 = vrot.lane.b32.xlu0 %v4738, 64
  %v4748 = vpop.permute.xlu0 %4747
  %4749 = vrot.lane.b32.xlu0 %v4739, 64
  %v4750 = vpop.permute.xlu0 %4749
  %4751 = vrot.lane.b32.xlu0 %v4740, 64
  %v4752 = vpop.permute.xlu0 %4751
  %v4756 = vmul.f32 %v4733, %v4748
  %v4757 = vmul.f32 %v4735, %v4750
  %v4758 = vmul.f32 %v4737, %v4752
  %4762 = vrot.lane.b32.xlu0 %v4756, 32
  %v4763 = vpop.permute.xlu0 %4762
  %4764 = vrot.lane.b32.xlu0 %v4757, 32
  %v4765 = vpop.permute.xlu0 %4764
  %4766 = vrot.lane.b32.xlu0 %v4758, 32
  %v4767 = vpop.permute.xlu0 %4766
  %v4771 = vadd.f32 %v4741, %v4763
  %v4772 = vadd.f32 %v4742, %v4765
  %v4773 = vadd.f32 %v4743, %v4767
  %v4774 = vtanh.pop %v4771
  %v4775 = vtanh.pop %v4772
  %v4776 = vtanh.pop %v4773
  %4780 = vrot.lane.b32.xlu0 %v4774, 64
  %v4781 = vpop.permute.xlu0 %4780
  %4782 = vrot.lane.b32.xlu0 %v4775, 64
  %v4783 = vpop.permute.xlu0 %4782
  %4784 = vrot.lane.b32.xlu0 %v4776, 64
  %v4785 = vpop.permute.xlu0 %4784
  %v4789 = vmul.f32 %v4733, %v4781
  %v4790 = vmul.f32 %v4735, %v4783
  %v4791 = vmul.f32 %v4737, %v4785
  %4795 = vrot.lane.b32.xlu0 %v4789, 32
  %v4796 = vpop.permute.xlu0 %4795
  %4797 = vrot.lane.b32.xlu0 %v4790, 32
  %v4798 = vpop.permute.xlu0 %4797
  %4799 = vrot.lane.b32.xlu0 %v4791, 32
  %v4800 = vpop.permute.xlu0 %4799
  %4804 = vst.msk [vmem:[#allocation3 + $0xa8] sm:$0xff] %vm617, %v4796
  %4805 = vst.msk [vmem:[#allocation3 + $0xb0] sm:$0xff] %vm617, %v4798
  %4806 = vst.msk [vmem:[#allocation3 + $0xb8] sm:$0xff] %vm617, %v4800
  %v4807 = vld [vmem:[#allocation3] sm:$0xff]
  %v4808 = vld [vmem:[#allocation3 + $0x8] sm:$0xff]
  %v4809 = vld [vmem:[#allocation3 + $0x10] sm:$0xff]
  %v4810 = vld [vmem:[#allocation3 + $0x18] sm:$0xff]
  %v4811 = vld [vmem:[#allocation3 + $0x20] sm:$0xff]
  %v4812 = vld [vmem:[#allocation3 + $0x28] sm:$0xff]
  %v4813 = vld [vmem:[#allocation3 + $0x30] sm:$0xff]
  %v4814 = vld [vmem:[#allocation3 + $0x38] sm:$0xff]
  %v4815 = vld [vmem:[#allocation3 + $0x40] sm:$0xff]
  %v4816 = vld [vmem:[#allocation3 + $0x48] sm:$0xff]
  %v4817 = vld [vmem:[#allocation3 + $0x50] sm:$0xff]
  %v4818 = vld [vmem:[#allocation3 + $0x58] sm:$0xff]
  %v4819 = vld [vmem:[#allocation3 + $0x60] sm:$0xff]
  %v4820 = vld [vmem:[#allocation3 + $0x68] sm:$0xff]
  %v4821 = vld [vmem:[#allocation3 + $0x70] sm:$0xff]
  %v4822 = vld [vmem:[#allocation3 + $0x78] sm:$0xff]
  %v4823 = vld [vmem:[#allocation3 + $0x80] sm:$0xff]
  %v4824 = vld [vmem:[#allocation3 + $0x88] sm:$0xff]
  %v4825 = vld [vmem:[#allocation3 + $0x90] sm:$0xff]
  %v4826 = vld [vmem:[#allocation3 + $0x98] sm:$0xff]
  %v4827 = vld [vmem:[#allocation3 + $0xa0] sm:$0xff]
  %v4828 = vld [vmem:[#allocation3 + $0xa8] sm:$0xff]
  %v4829 = vld [vmem:[#allocation3 + $0xb0] sm:$0xff]
  %v4830 = vld [vmem:[#allocation3 + $0xb8] sm:$0xff]
  %v4831 = vld [vmem:[%s10] sm:$0xff]
  %v4832 = vld [vmem:[%s10 + $0x8] sm:$0xff]
  %v4833 = vld [vmem:[%s10 + $0x10] sm:$0xff]
  %v4834 = vld [vmem:[%s10 + $0x18] sm:$0xff]
  %v4835 = vld [vmem:[%s11] sm:$0x1]
  %v4837 = vlaneseq
  %v4838 = vshrl.u32 %v4837, 7
  %v4839 = vsub.s32 0, %v4838
  %v4840 = vrot.slane %v4835, %v4839
  %v4843 = vsel %vm617, %v4807, 0
  %v4846 = vsel %vm617, %v4808, 0
  %v4849 = vsel %vm617, %v4809, 0
  %v4852 = vsel %vm617, %v4810, 0
  %v4855 = vsel %vm617, %v4811, 0
  %v4858 = vsel %vm617, %v4812, 0
  %v4861 = vsel %vm617, %v4813, 0
  %v4864 = vsel %vm617, %v4814, 0
  %v4867 = vsel %vm617, %v4815, 0
  %v4870 = vsel %vm617, %v4816, 0
  %v4873 = vsel %vm617, %v4817, 0
  %v4876 = vsel %vm617, %v4818, 0
  %v4879 = vsel %vm617, %v4819, 0
  %v4882 = vsel %vm617, %v4820, 0
  %v4885 = vsel %vm617, %v4821, 0
  %v4888 = vsel %vm617, %v4822, 0
  %v4891 = vsel %vm617, %v4823, 0
  %v4894 = vsel %vm617, %v4824, 0
  %v4897 = vsel %vm617, %v4825, 0
  %v4900 = vsel %vm617, %v4826, 0
  %v4903 = vsel %vm617, %v4827, 0
  %v4906 = vsel %vm617, %v4828, 0
  %v4909 = vsel %vm617, %v4829, 0
  %v4912 = vsel %vm617, %v4830, 0
  %4914 = vmatprep.subr.mxu0 0.0
  %4915 = vmatpush1.msra.mxu0 %v4831
  %4916 = vmatprep.subr.mxu0 0.0
  %4917 = vmatpush1.msra.mxu0 %v4832
  %4918 = vmatprep.subr.mxu0 0.0
  %4919 = vmatpush1.msra.mxu0 %v4833
  %4920 = vmatprep.subr.mxu0 0.0
  %4921 = vmatpush1.msra.mxu0 %v4834
  %4922 = vmatprep.subr.mxu0 0.0
  %4923 = vmatpush1.msra.mxu0 0.0
  %4924 = vmatprep.subr.mxu0 0.0
  %4925 = vmatpush1.msra.mxu0 0.0
  %4926 = vmatprep.subr.mxu0 0.0
  %4927 = vmatpush1.msra.mxu0 0.0
  %4928 = vmatprep.subr.mxu0 0.0
  %4929 = vmatpush1.msra.mxu0 0.0
  %4930 = vmatprep.subr.mxu0 0.0
  %4931 = vmatpush1.msra.mxu0 0.0
  %4932 = vmatprep.subr.mxu0 0.0
  %4933 = vmatpush1.msra.mxu0 0.0
  %4934 = vmatprep.subr.mxu0 0.0
  %4935 = vmatpush1.msra.mxu0 0.0
  %4936 = vmatprep.subr.mxu0 0.0
  %4937 = vmatpush1.msra.mxu0 0.0
  %4938 = vmatprep.subr.mxu0 0.0
  %4939 = vmatpush1.msra.mxu0 0.0
  %4940 = vmatprep.subr.mxu0 0.0
  %4941 = vmatpush1.msra.mxu0 0.0
  %4942 = vmatprep.subr.mxu0 0.0
  %4943 = vmatpush1.msra.mxu0 0.0
  %4944 = vmatprep.subr.mxu0 0.0
  %4945 = vmatpush1.msra.mxu0 0.0
  %4946 = vmatprep.subr.mxu0 0.0
  %4947 = vmatpush1.msra.mxu0 0.0
  %4948 = vmatprep.subr.mxu0 0.0
  %4949 = vmatpush1.msra.mxu0 0.0
  %4950 = vmatprep.subr.mxu0 0.0
  %4951 = vmatpush1.msra.mxu0 0.0
  %4952 = vmatprep.subr.mxu0 0.0
  %4953 = vmatpush1.msra.mxu0 0.0
  %4954 = vmatprep.subr.mxu0 0.0
  %4955 = vmatpush1.msra.mxu0 0.0
  %4956 = vmatprep.subr.mxu0 0.0
  %4957 = vmatpush1.msra.mxu0 0.0
  %4958 = vmatprep.subr.mxu0 0.0
  %4959 = vmatpush1.msra.mxu0 0.0
  %4960 = vmatprep.subr.mxu0 0.0
  %4961 = vmatpush1.msra.mxu0 0.0
  %4962 = vmatprep.subr.mxu0 0.0
  %4963 = vmatpush1.msra.mxu0 0.0
  %4964 = vmatprep.subr.mxu0 0.0
  %4965 = vmatpush1.msra.mxu0 0.0
  %4966 = vmatprep.subr.mxu0 0.0
  %4967 = vmatpush1.msra.mxu0 0.0
  %4968 = vmatprep.subr.mxu0 0.0
  %4969 = vmatpush1.msra.mxu0 0.0
  %4970 = vmatprep.subr.mxu0 0.0
  %4971 = vmatpush1.msra.mxu0 0.0
  %4972 = vmatprep.subr.mxu0 0.0
  %4973 = vmatpush1.msra.mxu0 0.0
  %4974 = vmatprep.subr.mxu0 0.0
  %4975 = vmatpush1.msra.mxu0 0.0
  %4976 = vmatprep.subr.mxu0 0.0
  %4977 = vmatpush1.msra.mxu0 0.0
  %4978 = vmatprep.mubr.f32.mxu0 0.0
  %4979 = vmatmul.mubr.f32.gmra.mrb[0].mxu0 %v4843
  %v4980 = vpop.f32.mrb[0].mxu0
  %v4981 = vadd.f32 %v4840, %v4980
  %v4982 = vpop.f32.mrb[0].mxu0
  %4983 = vmatprep.mubr.f32.mxu0 0.0
  %4984 = vmatmul.mubr.f32.gmra.mrb[0].mxu0 %v4846
  %v4985 = vpop.f32.mrb[0].mxu0
  %v4986 = vadd.f32 %v4840, %v4985
  %v4987 = vpop.f32.mrb[0].mxu0
  %4988 = vmatprep.mubr.f32.mxu0 0.0
  %4989 = vmatmul.mubr.f32.gmra.mrb[0].mxu0 %v4849
  %v4990 = vpop.f32.mrb[0].mxu0
  %v4991 = vadd.f32 %v4840, %v4990
  %v4992 = vpop.f32.mrb[0].mxu0
  %4993 = vmatprep.mubr.f32.mxu0 0.0
  %4994 = vmatmul.mubr.f32.gmra.mrb[0].mxu0 %v4852
  %v4995 = vpop.f32.mrb[0].mxu0
  %v4996 = vadd.f32 %v4840, %v4995
  %v4997 = vpop.f32.mrb[0].mxu0
  %4998 = vmatprep.mubr.f32.mxu0 0.0
  %4999 = vmatmul.mubr.f32.gmra.mrb[0].mxu0 %v4855
  %v5000 = vpop.f32.mrb[0].mxu0
  %v5001 = vadd.f32 %v4840, %v5000
  %v5002 = vpop.f32.mrb[0].mxu0
  %5003 = vmatprep.mubr.f32.mxu0 0.0
  %5004 = vmatmul.mubr.f32.gmra.mrb[0].mxu0 %v4858
  %v5005 = vpop.f32.mrb[0].mxu0
  %v5006 = vadd.f32 %v4840, %v5005
  %v5007 = vpop.f32.mrb[0].mxu0
  %5008 = vmatprep.mubr.f32.mxu0 0.0
  %5009 = vmatmul.mubr.f32.gmra.mrb[0].mxu0 %v4861
  %v5010 = vpop.f32.mrb[0].mxu0
  %v5011 = vadd.f32 %v4840, %v5010
  %v5012 = vpop.f32.mrb[0].mxu0
  %5013 = vmatprep.mubr.f32.mxu0 0.0
  %5014 = vmatmul.mubr.f32.gmra.mrb[0].mxu0 %v4864
  %v5015 = vpop.f32.mrb[0].mxu0
  %v5016 = vadd.f32 %v4840, %v5015
  %v5017 = vpop.f32.mrb[0].mxu0
  %5018 = vmatprep.mubr.f32.mxu0 0.0
  %5019 = vmatmul.mubr.f32.gmra.mrb[0].mxu0 %v4867
  %v5020 = vpop.f32.mrb[0].mxu0
  %v5021 = vadd.f32 %v4840, %v5020
  %v5022 = vpop.f32.mrb[0].mxu0
  %5023 = vmatprep.mubr.f32.mxu0 0.0
  %5024 = vmatmul.mubr.f32.gmra.mrb[0].mxu0 %v4870
  %v5025 = vpop.f32.mrb[0].mxu0
  %v5026 = vadd.f32 %v4840, %v5025
  %v5027 = vpop.f32.mrb[0].mxu0
  %5028 = vmatprep.mubr.f32.mxu0 0.0
  %5029 = vmatmul.mubr.f32.gmra.mrb[0].mxu0 %v4873
  %v5030 = vpop.f32.mrb[0].mxu0
  %v5031 = vadd.f32 %v4840, %v5030
  %v5032 = vpop.f32.mrb[0].mxu0
  %5033 = vmatprep.mubr.f32.mxu0 0.0
  %5034 = vmatmul.mubr.f32.gmra.mrb[0].mxu0 %v4876
  %v5035 = vpop.f32.mrb[0].mxu0
  %v5036 = vadd.f32 %v4840, %v5035
  %v5037 = vpop.f32.mrb[0].mxu0
  %5038 = vmatprep.mubr.f32.mxu0 0.0
  %5039 = vmatmul.mubr.f32.gmra.mrb[0].mxu0 %v4879
  %v5040 = vpop.f32.mrb[0].mxu0
  %v5041 = vadd.f32 %v4840, %v5040
  %v5042 = vpop.f32.mrb[0].mxu0
  %5043 = vmatprep.mubr.f32.mxu0 0.0
  %5044 = vmatmul.mubr.f32.gmra.mrb[0].mxu0 %v4882
  %v5045 = vpop.f32.mrb[0].mxu0
  %v5046 = vadd.f32 %v4840, %v5045
  %v5047 = vpop.f32.mrb[0].mxu0
  %5048 = vmatprep.mubr.f32.mxu0 0.0
  %5049 = vmatmul.mubr.f32.gmra.mrb[0].mxu0 %v4885
  %v5050 = vpop.f32.mrb[0].mxu0
  %v5051 = vadd.f32 %v4840, %v5050
  %v5052 = vpop.f32.mrb[0].mxu0
  %5053 = vmatprep.mubr.f32.mxu0 0.0
  %5054 = vmatmul.mubr.f32.gmra.mrb[0].mxu0 %v4888
  %v5055 = vpop.f32.mrb[0].mxu0
  %v5056 = vadd.f32 %v4840, %v5055
  %v5057 = vpop.f32.mrb[0].mxu0
  %5058 = vmatprep.mubr.f32.mxu0 0.0
  %5059 = vmatmul.mubr.f32.gmra.mrb[0].mxu0 %v4891
  %v5060 = vpop.f32.mrb[0].mxu0
  %v5061 = vadd.f32 %v4840, %v5060
  %v5062 = vpop.f32.mrb[0].mxu0
  %5063 = vmatprep.mubr.f32.mxu0 0.0
  %5064 = vmatmul.mubr.f32.gmra.mrb[0].mxu0 %v4894
  %v5065 = vpop.f32.mrb[0].mxu0
  %v5066 = vadd.f32 %v4840, %v5065
  %v5067 = vpop.f32.mrb[0].mxu0
  %5068 = vmatprep.mubr.f32.mxu0 0.0
  %5069 = vmatmul.mubr.f32.gmra.mrb[0].mxu0 %v4897
  %v5070 = vpop.f32.mrb[0].mxu0
  %v5071 = vadd.f32 %v4840, %v5070
  %v5072 = vpop.f32.mrb[0].mxu0
  %5073 = vmatprep.mubr.f32.mxu0 0.0
  %5074 = vmatmul.mubr.f32.gmra.mrb[0].mxu0 %v4900
  %v5075 = vpop.f32.mrb[0].mxu0
  %v5076 = vadd.f32 %v4840, %v5075
  %v5077 = vpop.f32.mrb[0].mxu0
  %5078 = vmatprep.mubr.f32.mxu0 0.0
  %5079 = vmatmul.mubr.f32.gmra.mrb[0].mxu0 %v4903
  %v5080 = vpop.f32.mrb[0].mxu0
  %v5081 = vadd.f32 %v4840, %v5080
  %v5082 = vpop.f32.mrb[0].mxu0
  %5083 = vmatprep.mubr.f32.mxu0 0.0
  %5084 = vmatmul.mubr.f32.gmra.mrb[0].mxu0 %v4906
  %v5085 = vpop.f32.mrb[0].mxu0
  %v5086 = vadd.f32 %v4840, %v5085
  %v5087 = vpop.f32.mrb[0].mxu0
  %5088 = vmatprep.mubr.f32.mxu0 0.0
  %5089 = vmatmul.mubr.f32.gmra.mrb[0].mxu0 %v4909
  %v5090 = vpop.f32.mrb[0].mxu0
  %v5091 = vadd.f32 %v4840, %v5090
  %v5092 = vpop.f32.mrb[0].mxu0
  %5093 = vmatprep.mubr.f32.mxu0 0.0
  %5094 = vmatmul.mubr.f32.gmra.mrb[0].mxu0 %v4912
  %v5095 = vpop.f32.mrb[0].mxu0
  %v5096 = vadd.f32 %v4840, %v5095
  %v5097 = vpop.f32.mrb[0].mxu0
  %5098 = vdwg.mxu0
  %5099 = vst [vmem:[%s14] sm:$0xff] %v4981
  %5100 = vst [vmem:[%s14 + $0x8] sm:$0xff] %v4986
  %5101 = vst [vmem:[%s14 + $0x10] sm:$0xff] %v4991
  %5102 = vst [vmem:[%s14 + $0x18] sm:$0xff] %v4996
  %5103 = vst [vmem:[%s14 + $0x20] sm:$0xff] %v5001
  %5104 = vst [vmem:[%s14 + $0x28] sm:$0xff] %v5006
  %5105 = vst [vmem:[%s14 + $0x30] sm:$0xff] %v5011
  %5106 = vst [vmem:[%s14 + $0x38] sm:$0xff] %v5016
  %5107 = vst [vmem:[%s14 + $0x40] sm:$0xff] %v5021
  %5108 = vst [vmem:[%s14 + $0x48] sm:$0xff] %v5026
  %5109 = vst [vmem:[%s14 + $0x50] sm:$0xff] %v5031
  %5110 = vst [vmem:[%s14 + $0x58] sm:$0xff] %v5036
  %5111 = vst [vmem:[%s14 + $0x60] sm:$0xff] %v5041
  %5112 = vst [vmem:[%s14 + $0x68] sm:$0xff] %v5046
  %5113 = vst [vmem:[%s14 + $0x70] sm:$0xff] %v5051
  %5114 = vst [vmem:[%s14 + $0x78] sm:$0xff] %v5056
  %5115 = vst [vmem:[%s14 + $0x80] sm:$0xff] %v5061
  %5116 = vst [vmem:[%s14 + $0x88] sm:$0xff] %v5066
  %5117 = vst [vmem:[%s14 + $0x90] sm:$0xff] %v5071
  %5118 = vst [vmem:[%s14 + $0x98] sm:$0xff] %v5076
  %5119 = vst [vmem:[%s14 + $0xa0] sm:$0xff] %v5081
  %5120 = vst [vmem:[%s14 + $0xa8] sm:$0xff] %v5086
  %5121 = vst [vmem:[%s14 + $0xb0] sm:$0xff] %v5091
  %5122 = vst [vmem:[%s14 + $0xb8] sm:$0xff] %v5096
  // Predicated region
  $region58: #{_seq2seq_forward.1} parent=0 // pred_check
    _
  $region59: #{_seq2seq_forward.1} parent=0 // pred_check_branch
    %5124 = sbr.rel (0) target = $region61
  $region60: #{_seq2seq_forward.1} parent=0 // pred_region
    _
  $region61: #{_seq2seq_forward.1} parent=0 // pred_fallthru
    _
  // Predicated region
  $region62: #{_seq2seq_forward.1} parent=0 // pred_check
    _
  $region63: #{_seq2seq_forward.1} parent=0 // pred_check_branch
    %5126 = sbr.rel (0) target = $region65
  $region64: #{_seq2seq_forward.1} parent=0 // pred_region
    _
  $region65: #{_seq2seq_forward.1} parent=0 // pred_fallthru
    _

</llo_original>
